<compile_context>
chip_gen: v6e
topology: v6e:2x2x1
jax: 0.10.0
libtpu: 0.0.40
codegen_flags: <defaults>
</compile_context>

<pallas_src>
import functools
import math

import jax
import jax.numpy as jnp
from jax.experimental import pallas as pl
from jax.experimental.pallas import tpu as pltpu

LANE = 128


def _round_up(x, m):
    return (x + m - 1) // m * m


# ----------------------------------------------------------------------------
# Fused kernel: per image ->
#   relu(bn1(x)) @ (w1 * bn2_scale) + bn2_shift -> relu          (1x1 conv)
#   zero-halo pad in VMEM -> im2col slab -> one (HW,9*C1p)@(9*C1p,C2p) matmul
#   slice to growth_rate channels and store.
# ----------------------------------------------------------------------------
def _bottleneck_kernel(x_ref, s1_ref, t1_ref, w1s_ref, t2_ref, w2_ref, o_ref,
                       yp_ref, col_ref, *, H, W, GR):
    HW = H * W
    C1p = w1s_ref.shape[1]

    # Zero the padded scratch every step (scratch is per-core; halo must be
    # zero regardless of which core runs which grid step). Interior rows are
    # fully overwritten below.
    yp_ref[...] = jnp.zeros_like(yp_ref)

    # ---- bn1 + relu (f32 VPU) -> 1x1 conv on MXU (bn2 scale pre-folded into
    #      the bf16 weights) -> bn2 shift + relu (f32) -> bf16 activation.
    x = x_ref[0]                                                 # (H, W, Cin) f32
    h = jnp.maximum(x.reshape(HW, -1) * s1_ref[...] + t1_ref[...], 0.0)
    y = jnp.dot(h.astype(jnp.bfloat16), w1s_ref[...],
                preferred_element_type=jnp.float32)              # (HW, C1p) f32
    y = jnp.maximum(y + t2_ref[...], 0.0).astype(jnp.bfloat16)   # (HW, C1p) bf16

    # ---- scatter interior rows into the zero-halo VMEM scratch (no HBM pad).
    y3 = y.reshape(H, W, C1p)
    for r in range(H):
        yp_ref[r + 1, pl.ds(1, W), :] = y3[r]

    # ---- build the 9-tap im2col slab in VMEM (lane-aligned 128-wide blocks).
    k = 0
    for dy in range(3):
        for dx in range(3):
            patch = yp_ref[dy:dy + H, dx:dx + W, :].reshape(HW, C1p)
            col_ref[:, k * C1p:(k + 1) * C1p] = patch
            k += 1

    # ---- 3x3 conv = ONE deep-contraction MXU matmul, f32 accumulation.
    acc = jnp.dot(col_ref[...], w2_ref[...],
                  preferred_element_type=jnp.float32)            # (HW, C2p)
    o_ref[...] = acc[:, :GR].reshape(1, H, W, GR).astype(o_ref.dtype)


def _fused_bottleneck(x_nhwc, s1, t1, w1s, t2p, w2col, gr):
    """x_nhwc: (N,H,W,Cin) f32. Returns the 3x3-conv output (N,H,W,gr) f32."""
    N, H, W, Cin = x_nhwc.shape
    C1p = w1s.shape[1]
    C2p = w2col.shape[1]
    kernel = functools.partial(_bottleneck_kernel, H=H, W=W, GR=gr)
    return pl.pallas_call(
        kernel,
        out_shape=jax.ShapeDtypeStruct((N, H, W, gr), jnp.float32),
        grid_spec=pltpu.PrefetchScalarGridSpec(
            num_scalar_prefetch=0,
            grid=(N,),
            in_specs=[
                pl.BlockSpec((1, H, W, Cin), lambda n: (n, 0, 0, 0)),
                pl.BlockSpec((1, Cin), lambda n: (0, 0)),
                pl.BlockSpec((1, Cin), lambda n: (0, 0)),
                pl.BlockSpec((Cin, C1p), lambda n: (0, 0)),
                pl.BlockSpec((1, C1p), lambda n: (0, 0)),
                pl.BlockSpec((9 * C1p, C2p), lambda n: (0, 0)),
            ],
            out_specs=pl.BlockSpec((1, H, W, gr), lambda n: (n, 0, 0, 0)),
            scratch_shapes=[
                pltpu.VMEM((H + 2, W + 2, C1p), jnp.bfloat16),   # zero-halo act
                pltpu.VMEM((H * W, 9 * C1p), jnp.bfloat16),      # im2col slab
            ],
        ),
        compiler_params=pltpu.CompilerParams(
            dimension_semantics=("parallel",),
            vmem_limit_bytes=48 * 1024 * 1024,
        ),
    )(x_nhwc.astype(jnp.float32),
      s1.reshape(1, Cin).astype(jnp.float32),
      t1.reshape(1, Cin).astype(jnp.float32),
      w1s.astype(jnp.bfloat16),
      t2p.reshape(1, C1p).astype(jnp.float32),
      w2col.astype(jnp.bfloat16))


# ----------------------------------------------------------------------------
# Bottleneck forward (NCHW in / NCHW out, like PyTorch)
# ----------------------------------------------------------------------------
def bottleneck_forward(params, x_nchw):
    N, Cin, H, W = x_nchw.shape
    gr = params['w2'].shape[-1]                       # growth_rate (static)

    x_nhwc = jnp.transpose(x_nchw, (0, 2, 3, 1)).astype(jnp.float32)

    conv_out = _fused_bottleneck(
        x_nhwc, params['bn1_scale'], params['bn1_shift'],
        params['w1s'], params['bn2_shift_p'], params['w2col'], gr)

    # torch.cat([out, x], dim=1) -> channel concat in NHWC, back to NCHW.
    cat = jnp.concatenate([conv_out, x_nhwc], axis=-1)
    return jnp.transpose(cat, (0, 3, 1, 2))


# ----------------------------------------------------------------------------
# Parameter init (deterministic, synthetic) + pure-JAX reference
# ----------------------------------------------------------------------------
def init_bottleneck_params(key, in_planes, growth_rate, eps=1e-5):
    c1 = 4 * growth_rate
    c1p = _round_up(c1, LANE)
    c2p = _round_up(growth_rate, LANE)
    k = jax.random.split(key, 10)

    # BN1 folded to scale/shift (inference form).
    g1 = jax.random.uniform(k[0], (in_planes,), jnp.float32, 0.5, 1.5)
    b1 = 0.1 * jax.random.normal(k[1], (in_planes,), jnp.float32)
    m1 = 0.1 * jax.random.normal(k[2], (in_planes,), jnp.float32)
    v1 = jax.random.uniform(k[3], (in_planes,), jnp.float32, 0.5, 1.5)
    s1 = g1 / jnp.sqrt(v1 + eps)
    t1 = b1 - m1 * s1

    # conv1: 1x1, in_planes -> 4*gr, matrix layout (Cin, Cout), padded to 128.
    bound1 = 1.0 / math.sqrt(in_planes)
    w1 = jax.random.uniform(k[4], (in_planes, c1), jnp.float32, -bound1, bound1)
    w1p = jnp.zeros((in_planes, c1p), jnp.float32).at[:, :c1].set(w1)

    # BN2 folded; padded lanes: zero weight columns + zero shift -> relu(0)=0.
    g2 = jax.random.uniform(k[5], (c1,), jnp.float32, 0.5, 1.5)
    b2 = 0.1 * jax.random.normal(k[6], (c1,), jnp.float32)
    m2 = 0.1 * jax.random.normal(k[7], (c1,), jnp.float32)
    v2 = jax.random.uniform(k[8], (c1,), jnp.float32, 0.5, 1.5)
    s2 = g2 / jnp.sqrt(v2 + eps)
    t2 = b2 - m2 * s2
    s2p = jnp.ones((c1p,), jnp.float32).at[:c1].set(s2)
    t2p = jnp.zeros((c1p,), jnp.float32).at[:c1].set(t2)

    # Fold bn2 scale into the 1x1 weights (exact: scale sits after the matmul).
    w1s = w1p * s2p[None, :]

    # conv2: 3x3, 4*gr -> gr, HWIO; pad in/out channels with zeros and reshape
    # to the im2col weight layout (9*C1p, C2p): row (dy*3+dx)*C1p + ci.
    bound2 = 1.0 / math.sqrt(c1 * 9)
    w2 = jax.random.uniform(k[9], (3, 3, c1, growth_rate), jnp.float32,
                            -bound2, bound2)
    w2p = jnp.zeros((3, 3, c1p, c2p), jnp.float32)
    w2p = w2p.at[:, :, :c1, :growth_rate].set(w2)
    w2col = w2p.reshape(9 * c1p, c2p)

    return {
        'bn1_scale': s1, 'bn1_shift': t1,
        'bn2_scale': s2, 'bn2_shift': t2, 'bn2_shift_p': t2p,
        'w1': w1, 'w1s': w1s,
        'w2': w2, 'w2col': w2col,
    }


def bottleneck_reference(params, x_nchw):
    """Pure-JAX f32 reference of the PyTorch forward (tolerance check)."""
    x = jnp.transpose(x_nchw, (0, 2, 3, 1)).astype(jnp.float32)
    h = jnp.maximum(x * params['bn1_scale'] + params['bn1_shift'], 0.0)
    h = jnp.einsum('nhwc,cd->nhwd', h, params['w1'])
    h = jnp.maximum(h * params['bn2_scale'] + params['bn2_shift'], 0.0)
    out = jax.lax.conv_general_dilated(
        h, params['w2'], window_strides=(1, 1), padding='SAME',
        dimension_numbers=('NHWC', 'HWIO', 'NHWC'))
    cat = jnp.concatenate([out, x], axis=-1)
    return jnp.transpose(cat, (0, 3, 1, 2))


if __name__ == "__main__":
    key = jax.random.PRNGKey(0)
    kp, kx = jax.random.split(key)

    in_planes, growth_rate = 24, 12          # DenseNet-style: 2*gr input planes
    params = init_bottleneck_params(kp, in_planes, growth_rate)
    x = jax.random.normal(kx, (2, in_planes, 16, 16), jnp.float32)   # NCHW

    fwd = jax.jit(bottleneck_forward)
    out = jax.block_until_ready(fwd(params, x))

    assert out.shape == (2, in_planes + growth_rate, 16, 16), out.shape
    assert out.dtype == jnp.float32

    # Correctness vs f32 reference (bf16 MXU operands -> small drift allowed).
    ref = bottleneck_reference(params, x)
    max_err = float(jnp.max(jnp.abs(out - ref)))
    assert max_err < 5e-2, f"max abs err {max_err}"

    print("KERNEL_OK")
</pallas_src>

<mosaic_0001>
module attributes {stable_mosaic.version = 11 : i64} {
  func.func @_bottleneck_kernel(%arg0: i32, %arg1: memref<1x16x16x24xf32, #tpu.memory_space<vmem>>, %arg2: memref<1x24xf32, #tpu.memory_space<vmem>>, %arg3: memref<1x24xf32, #tpu.memory_space<vmem>>, %arg4: memref<24x128xbf16, #tpu.memory_space<vmem>>, %arg5: memref<1x128xf32, #tpu.memory_space<vmem>>, %arg6: memref<1152x128xbf16, #tpu.memory_space<vmem>>, %arg7: memref<1x16x16x12xf32, #tpu.memory_space<vmem>>, %arg8: memref<18x18x128xbf16, #tpu.memory_space<vmem>>, %arg9: memref<256x1152xbf16, #tpu.memory_space<vmem>>) attributes {dimension_semantics = [#tpu.dimension_semantics<parallel>], iteration_bounds = array<i64: 2>, scalar_prefetch = 0 : i64, scratch_operands = 2 : i64, tpu.core_type = #tpu.core_type<tc>, window_params = [{transform_indices = @transform_0, window_bounds = array<i64: 1, 16, 16, 24>}, {pipeline_mode = #tpu.pipeline_mode<synchronous>, transform_indices = @transform_1, window_bounds = array<i64: 1, 24>}, {pipeline_mode = #tpu.pipeline_mode<synchronous>, transform_indices = @transform_2, window_bounds = array<i64: 1, 24>}, {pipeline_mode = #tpu.pipeline_mode<synchronous>, transform_indices = @transform_3, window_bounds = array<i64: 24, 128>}, {pipeline_mode = #tpu.pipeline_mode<synchronous>, transform_indices = @transform_4, window_bounds = array<i64: 1, 128>}, {pipeline_mode = #tpu.pipeline_mode<synchronous>, transform_indices = @transform_5, window_bounds = array<i64: 1152, 128>}, {transform_indices = @transform_6, window_bounds = array<i64: 1, 16, 16, 12>}]} {
    %cst = arith.constant 0.000000e+00 : bf16
    %0 = vector.broadcast %cst : bf16 to vector<18x18x128xbf16>
    %c0 = arith.constant 0 : index
    %c0_0 = arith.constant 0 : index
    %c0_1 = arith.constant 0 : index
    %1 = vector.load %arg8[%c0, %c0_0, %c0_1] : memref<18x18x128xbf16, #tpu.memory_space<vmem>>, vector<18x18x128xbf16>
    tpu.vector_store %arg8[%c0, %c0_0, %c0_1], %0 {strides = array<i32>} : memref<18x18x128xbf16, #tpu.memory_space<vmem>>, vector<18x18x128xbf16>,
    %c0_2 = arith.constant 0 : index
    %c0_3 = arith.constant 0 : index
    %c0_4 = arith.constant 0 : index
    %c0_5 = arith.constant 0 : index
    %2 = vector.load %arg1[%c0_2, %c0_3, %c0_4, %c0_5] : memref<1x16x16x24xf32, #tpu.memory_space<vmem>>, vector<1x16x16x24xf32>
    %3 = vector.shape_cast %2 : vector<1x16x16x24xf32> to vector<16x16x24xf32>
    %4 = vector.shape_cast %3 : vector<16x16x24xf32> to vector<256x24xf32>
    %c0_6 = arith.constant 0 : index
    %c0_7 = arith.constant 0 : index
    %5 = vector.load %arg2[%c0_6, %c0_7] : memref<1x24xf32, #tpu.memory_space<vmem>>, vector<1x24xf32>
    %6 = vector.broadcast %5 : vector<1x24xf32> to vector<256x24xf32>
    %7 = arith.mulf %4, %6 : vector<256x24xf32>
    %c0_8 = arith.constant 0 : index
    %c0_9 = arith.constant 0 : index
    %8 = vector.load %arg3[%c0_8, %c0_9] : memref<1x24xf32, #tpu.memory_space<vmem>>, vector<1x24xf32>
    %9 = vector.broadcast %8 : vector<1x24xf32> to vector<256x24xf32>
    %10 = arith.addf %7, %9 : vector<256x24xf32>
    %cst_10 = arith.constant 0.000000e+00 : f32
    %11 = vector.broadcast %cst_10 : f32 to vector<256x24xf32>
    %12 = arith.maximumf %10, %11 : vector<256x24xf32>
    %13 = arith.truncf %12 : vector<256x24xf32> to vector<256x24xbf16>
    %c0_11 = arith.constant 0 : index
    %c0_12 = arith.constant 0 : index
    %14 = vector.load %arg4[%c0_11, %c0_12] : memref<24x128xbf16, #tpu.memory_space<vmem>>, vector<24x128xbf16>
    %cst_13 = arith.constant dense<0.000000e+00> : vector<256x128xf32>
    %15 = tpu.matmul %13, %14, %cst_13 {dimension_numbers = #tpu.dot_dimension_numbers<[1], [0], [0], [1], [0, 0, 1, 1], [], []>} : vector<256x24xbf16>, vector<24x128xbf16>, vector<256x128xf32> -> vector<256x128xf32>
    %c0_14 = arith.constant 0 : index
    %c0_15 = arith.constant 0 : index
    %16 = vector.load %arg5[%c0_14, %c0_15] : memref<1x128xf32, #tpu.memory_space<vmem>>, vector<1x128xf32>
    %17 = vector.broadcast %16 : vector<1x128xf32> to vector<256x128xf32>
    %18 = arith.addf %15, %17 : vector<256x128xf32>
    %cst_16 = arith.constant 0.000000e+00 : f32
    %19 = vector.broadcast %cst_16 : f32 to vector<256x128xf32>
    %20 = arith.maximumf %18, %19 : vector<256x128xf32>
    %21 = arith.truncf %20 : vector<256x128xf32> to vector<256x128xbf16>
    %22 = vector.shape_cast %21 : vector<256x128xbf16> to vector<16x16x128xbf16>
    %23 = vector.extract_strided_slice %22 {offsets = [0, 0, 0], sizes = [1, 16, 128], strides = [1, 1, 1]} : vector<16x16x128xbf16> to vector<1x16x128xbf16>
    %24 = vector.shape_cast %23 : vector<1x16x128xbf16> to vector<16x128xbf16>
    %c1 = arith.constant 1 : index
    %c1_17 = arith.constant 1 : index
    %c0_18 = arith.constant 0 : index
    %25 = vector.load %arg8[%c1, %c1_17, %c0_18] : memref<18x18x128xbf16, #tpu.memory_space<vmem>>, vector<1x16x128xbf16>
    %26 = vector.shape_cast %25 : vector<1x16x128xbf16> to vector<16x128xbf16>
    %27 = vector.shape_cast %24 : vector<16x128xbf16> to vector<1x16x128xbf16>
    tpu.vector_store %arg8[%c1, %c1_17, %c0_18], %27 {strides = array<i32>} : memref<18x18x128xbf16, #tpu.memory_space<vmem>>, vector<1x16x128xbf16>,
    %28 = vector.extract_strided_slice %22 {offsets = [1, 0, 0], sizes = [1, 16, 128], strides = [1, 1, 1]} : vector<16x16x128xbf16> to vector<1x16x128xbf16>
    %29 = vector.shape_cast %28 : vector<1x16x128xbf16> to vector<16x128xbf16>
    %c2 = arith.constant 2 : index
    %c1_19 = arith.constant 1 : index
    %c0_20 = arith.constant 0 : index
    %30 = vector.load %arg8[%c2, %c1_19, %c0_20] : memref<18x18x128xbf16, #tpu.memory_space<vmem>>, vector<1x16x128xbf16>
    %31 = vector.shape_cast %30 : vector<1x16x128xbf16> to vector<16x128xbf16>
    %32 = vector.shape_cast %29 : vector<16x128xbf16> to vector<1x16x128xbf16>
    tpu.vector_store %arg8[%c2, %c1_19, %c0_20], %32 {strides = array<i32>} : memref<18x18x128xbf16, #tpu.memory_space<vmem>>, vector<1x16x128xbf16>,
    %33 = vector.extract_strided_slice %22 {offsets = [2, 0, 0], sizes = [1, 16, 128], strides = [1, 1, 1]} : vector<16x16x128xbf16> to vector<1x16x128xbf16>
    %34 = vector.shape_cast %33 : vector<1x16x128xbf16> to vector<16x128xbf16>
    %c3 = arith.constant 3 : index
    %c1_21 = arith.constant 1 : index
    %c0_22 = arith.constant 0 : index
    %35 = vector.load %arg8[%c3, %c1_21, %c0_22] : memref<18x18x128xbf16, #tpu.memory_space<vmem>>, vector<1x16x128xbf16>
    %36 = vector.shape_cast %35 : vector<1x16x128xbf16> to vector<16x128xbf16>
    %37 = vector.shape_cast %34 : vector<16x128xbf16> to vector<1x16x128xbf16>
    tpu.vector_store %arg8[%c3, %c1_21, %c0_22], %37 {strides = array<i32>} : memref<18x18x128xbf16, #tpu.memory_space<vmem>>, vector<1x16x128xbf16>,
    %38 = vector.extract_strided_slice %22 {offsets = [3, 0, 0], sizes = [1, 16, 128], strides = [1, 1, 1]} : vector<16x16x128xbf16> to vector<1x16x128xbf16>
    %39 = vector.shape_cast %38 : vector<1x16x128xbf16> to vector<16x128xbf16>
    %c4 = arith.constant 4 : index
    %c1_23 = arith.constant 1 : index
    %c0_24 = arith.constant 0 : index
    %40 = vector.load %arg8[%c4, %c1_23, %c0_24] : memref<18x18x128xbf16, #tpu.memory_space<vmem>>, vector<1x16x128xbf16>
    %41 = vector.shape_cast %40 : vector<1x16x128xbf16> to vector<16x128xbf16>
    %42 = vector.shape_cast %39 : vector<16x128xbf16> to vector<1x16x128xbf16>
    tpu.vector_store %arg8[%c4, %c1_23, %c0_24], %42 {strides = array<i32>} : memref<18x18x128xbf16, #tpu.memory_space<vmem>>, vector<1x16x128xbf16>,
    %43 = vector.extract_strided_slice %22 {offsets = [4, 0, 0], sizes = [1, 16, 128], strides = [1, 1, 1]} : vector<16x16x128xbf16> to vector<1x16x128xbf16>
    %44 = vector.shape_cast %43 : vector<1x16x128xbf16> to vector<16x128xbf16>
    %c5 = arith.constant 5 : index
    %c1_25 = arith.constant 1 : index
    %c0_26 = arith.constant 0 : index
    %45 = vector.load %arg8[%c5, %c1_25, %c0_26] : memref<18x18x128xbf16, #tpu.memory_space<vmem>>, vector<1x16x128xbf16>
    %46 = vector.shape_cast %45 : vector<1x16x128xbf16> to vector<16x128xbf16>
    %47 = vector.shape_cast %44 : vector<16x128xbf16> to vector<1x16x128xbf16>
    tpu.vector_store %arg8[%c5, %c1_25, %c0_26], %47 {strides = array<i32>} : memref<18x18x128xbf16, #tpu.memory_space<vmem>>, vector<1x16x128xbf16>,
    %48 = vector.extract_strided_slice %22 {offsets = [5, 0, 0], sizes = [1, 16, 128], strides = [1, 1, 1]} : vector<16x16x128xbf16> to vector<1x16x128xbf16>
    %49 = vector.shape_cast %48 : vector<1x16x128xbf16> to vector<16x128xbf16>
    %c6 = arith.constant 6 : index
    %c1_27 = arith.constant 1 : index
    %c0_28 = arith.constant 0 : index
    %50 = vector.load %arg8[%c6, %c1_27, %c0_28] : memref<18x18x128xbf16, #tpu.memory_space<vmem>>, vector<1x16x128xbf16>
    %51 = vector.shape_cast %50 : vector<1x16x128xbf16> to vector<16x128xbf16>
    %52 = vector.shape_cast %49 : vector<16x128xbf16> to vector<1x16x128xbf16>
    tpu.vector_store %arg8[%c6, %c1_27, %c0_28], %52 {strides = array<i32>} : memref<18x18x128xbf16, #tpu.memory_space<vmem>>, vector<1x16x128xbf16>,
    %53 = vector.extract_strided_slice %22 {offsets = [6, 0, 0], sizes = [1, 16, 128], strides = [1, 1, 1]} : vector<16x16x128xbf16> to vector<1x16x128xbf16>
    %54 = vector.shape_cast %53 : vector<1x16x128xbf16> to vector<16x128xbf16>
    %c7 = arith.constant 7 : index
    %c1_29 = arith.constant 1 : index
    %c0_30 = arith.constant 0 : index
    %55 = vector.load %arg8[%c7, %c1_29, %c0_30] : memref<18x18x128xbf16, #tpu.memory_space<vmem>>, vector<1x16x128xbf16>
    %56 = vector.shape_cast %55 : vector<1x16x128xbf16> to vector<16x128xbf16>
    %57 = vector.shape_cast %54 : vector<16x128xbf16> to vector<1x16x128xbf16>
    tpu.vector_store %arg8[%c7, %c1_29, %c0_30], %57 {strides = array<i32>} : memref<18x18x128xbf16, #tpu.memory_space<vmem>>, vector<1x16x128xbf16>,
    %58 = vector.extract_strided_slice %22 {offsets = [7, 0, 0], sizes = [1, 16, 128], strides = [1, 1, 1]} : vector<16x16x128xbf16> to vector<1x16x128xbf16>
    %59 = vector.shape_cast %58 : vector<1x16x128xbf16> to vector<16x128xbf16>
    %c8 = arith.constant 8 : index
    %c1_31 = arith.constant 1 : index
    %c0_32 = arith.constant 0 : index
    %60 = vector.load %arg8[%c8, %c1_31, %c0_32] : memref<18x18x128xbf16, #tpu.memory_space<vmem>>, vector<1x16x128xbf16>
    %61 = vector.shape_cast %60 : vector<1x16x128xbf16> to vector<16x128xbf16>
    %62 = vector.shape_cast %59 : vector<16x128xbf16> to vector<1x16x128xbf16>
    tpu.vector_store %arg8[%c8, %c1_31, %c0_32], %62 {strides = array<i32>} : memref<18x18x128xbf16, #tpu.memory_space<vmem>>, vector<1x16x128xbf16>,
    %63 = vector.extract_strided_slice %22 {offsets = [8, 0, 0], sizes = [1, 16, 128], strides = [1, 1, 1]} : vector<16x16x128xbf16> to vector<1x16x128xbf16>
    %64 = vector.shape_cast %63 : vector<1x16x128xbf16> to vector<16x128xbf16>
    %c9 = arith.constant 9 : index
    %c1_33 = arith.constant 1 : index
    %c0_34 = arith.constant 0 : index
    %65 = vector.load %arg8[%c9, %c1_33, %c0_34] : memref<18x18x128xbf16, #tpu.memory_space<vmem>>, vector<1x16x128xbf16>
    %66 = vector.shape_cast %65 : vector<1x16x128xbf16> to vector<16x128xbf16>
    %67 = vector.shape_cast %64 : vector<16x128xbf16> to vector<1x16x128xbf16>
    tpu.vector_store %arg8[%c9, %c1_33, %c0_34], %67 {strides = array<i32>} : memref<18x18x128xbf16, #tpu.memory_space<vmem>>, vector<1x16x128xbf16>,
    %68 = vector.extract_strided_slice %22 {offsets = [9, 0, 0], sizes = [1, 16, 128], strides = [1, 1, 1]} : vector<16x16x128xbf16> to vector<1x16x128xbf16>
    %69 = vector.shape_cast %68 : vector<1x16x128xbf16> to vector<16x128xbf16>
    %c10 = arith.constant 10 : index
    %c1_35 = arith.constant 1 : index
    %c0_36 = arith.constant 0 : index
    %70 = vector.load %arg8[%c10, %c1_35, %c0_36] : memref<18x18x128xbf16, #tpu.memory_space<vmem>>, vector<1x16x128xbf16>
    %71 = vector.shape_cast %70 : vector<1x16x128xbf16> to vector<16x128xbf16>
    %72 = vector.shape_cast %69 : vector<16x128xbf16> to vector<1x16x128xbf16>
    tpu.vector_store %arg8[%c10, %c1_35, %c0_36], %72 {strides = array<i32>} : memref<18x18x128xbf16, #tpu.memory_space<vmem>>, vector<1x16x128xbf16>,
    %73 = vector.extract_strided_slice %22 {offsets = [10, 0, 0], sizes = [1, 16, 128], strides = [1, 1, 1]} : vector<16x16x128xbf16> to vector<1x16x128xbf16>
    %74 = vector.shape_cast %73 : vector<1x16x128xbf16> to vector<16x128xbf16>
    %c11 = arith.constant 11 : index
    %c1_37 = arith.constant 1 : index
    %c0_38 = arith.constant 0 : index
    %75 = vector.load %arg8[%c11, %c1_37, %c0_38] : memref<18x18x128xbf16, #tpu.memory_space<vmem>>, vector<1x16x128xbf16>
    %76 = vector.shape_cast %75 : vector<1x16x128xbf16> to vector<16x128xbf16>
    %77 = vector.shape_cast %74 : vector<16x128xbf16> to vector<1x16x128xbf16>
    tpu.vector_store %arg8[%c11, %c1_37, %c0_38], %77 {strides = array<i32>} : memref<18x18x128xbf16, #tpu.memory_space<vmem>>, vector<1x16x128xbf16>,
    %78 = vector.extract_strided_slice %22 {offsets = [11, 0, 0], sizes = [1, 16, 128], strides = [1, 1, 1]} : vector<16x16x128xbf16> to vector<1x16x128xbf16>
    %79 = vector.shape_cast %78 : vector<1x16x128xbf16> to vector<16x128xbf16>
    %c12 = arith.constant 12 : index
    %c1_39 = arith.constant 1 : index
    %c0_40 = arith.constant 0 : index
    %80 = vector.load %arg8[%c12, %c1_39, %c0_40] : memref<18x18x128xbf16, #tpu.memory_space<vmem>>, vector<1x16x128xbf16>
    %81 = vector.shape_cast %80 : vector<1x16x128xbf16> to vector<16x128xbf16>
    %82 = vector.shape_cast %79 : vector<16x128xbf16> to vector<1x16x128xbf16>
    tpu.vector_store %arg8[%c12, %c1_39, %c0_40], %82 {strides = array<i32>} : memref<18x18x128xbf16, #tpu.memory_space<vmem>>, vector<1x16x128xbf16>,
    %83 = vector.extract_strided_slice %22 {offsets = [12, 0, 0], sizes = [1, 16, 128], strides = [1, 1, 1]} : vector<16x16x128xbf16> to vector<1x16x128xbf16>
    %84 = vector.shape_cast %83 : vector<1x16x128xbf16> to vector<16x128xbf16>
    %c13 = arith.constant 13 : index
    %c1_41 = arith.constant 1 : index
    %c0_42 = arith.constant 0 : index
    %85 = vector.load %arg8[%c13, %c1_41, %c0_42] : memref<18x18x128xbf16, #tpu.memory_space<vmem>>, vector<1x16x128xbf16>
    %86 = vector.shape_cast %85 : vector<1x16x128xbf16> to vector<16x128xbf16>
    %87 = vector.shape_cast %84 : vector<16x128xbf16> to vector<1x16x128xbf16>
    tpu.vector_store %arg8[%c13, %c1_41, %c0_42], %87 {strides = array<i32>} : memref<18x18x128xbf16, #tpu.memory_space<vmem>>, vector<1x16x128xbf16>,
    %88 = vector.extract_strided_slice %22 {offsets = [13, 0, 0], sizes = [1, 16, 128], strides = [1, 1, 1]} : vector<16x16x128xbf16> to vector<1x16x128xbf16>
    %89 = vector.shape_cast %88 : vector<1x16x128xbf16> to vector<16x128xbf16>
    %c14 = arith.constant 14 : index
    %c1_43 = arith.constant 1 : index
    %c0_44 = arith.constant 0 : index
    %90 = vector.load %arg8[%c14, %c1_43, %c0_44] : memref<18x18x128xbf16, #tpu.memory_space<vmem>>, vector<1x16x128xbf16>
    %91 = vector.shape_cast %90 : vector<1x16x128xbf16> to vector<16x128xbf16>
    %92 = vector.shape_cast %89 : vector<16x128xbf16> to vector<1x16x128xbf16>
    tpu.vector_store %arg8[%c14, %c1_43, %c0_44], %92 {strides = array<i32>} : memref<18x18x128xbf16, #tpu.memory_space<vmem>>, vector<1x16x128xbf16>,
    %93 = vector.extract_strided_slice %22 {offsets = [14, 0, 0], sizes = [1, 16, 128], strides = [1, 1, 1]} : vector<16x16x128xbf16> to vector<1x16x128xbf16>
    %94 = vector.shape_cast %93 : vector<1x16x128xbf16> to vector<16x128xbf16>
    %c15 = arith.constant 15 : index
    %c1_45 = arith.constant 1 : index
    %c0_46 = arith.constant 0 : index
    %95 = vector.load %arg8[%c15, %c1_45, %c0_46] : memref<18x18x128xbf16, #tpu.memory_space<vmem>>, vector<1x16x128xbf16>
    %96 = vector.shape_cast %95 : vector<1x16x128xbf16> to vector<16x128xbf16>
    %97 = vector.shape_cast %94 : vector<16x128xbf16> to vector<1x16x128xbf16>
    tpu.vector_store %arg8[%c15, %c1_45, %c0_46], %97 {strides = array<i32>} : memref<18x18x128xbf16, #tpu.memory_space<vmem>>, vector<1x16x128xbf16>,
    %98 = vector.extract_strided_slice %22 {offsets = [15, 0, 0], sizes = [1, 16, 128], strides = [1, 1, 1]} : vector<16x16x128xbf16> to vector<1x16x128xbf16>
    %99 = vector.shape_cast %98 : vector<1x16x128xbf16> to vector<16x128xbf16>
    %c16 = arith.constant 16 : index
    %c1_47 = arith.constant 1 : index
    %c0_48 = arith.constant 0 : index
    %100 = vector.load %arg8[%c16, %c1_47, %c0_48] : memref<18x18x128xbf16, #tpu.memory_space<vmem>>, vector<1x16x128xbf16>
    %101 = vector.shape_cast %100 : vector<1x16x128xbf16> to vector<16x128xbf16>
    %102 = vector.shape_cast %99 : vector<16x128xbf16> to vector<1x16x128xbf16>
    tpu.vector_store %arg8[%c16, %c1_47, %c0_48], %102 {strides = array<i32>} : memref<18x18x128xbf16, #tpu.memory_space<vmem>>, vector<1x16x128xbf16>,
    %c0_49 = arith.constant 0 : index
    %c0_50 = arith.constant 0 : index
    %c0_51 = arith.constant 0 : index
    %103 = vector.load %arg8[%c0_49, %c0_50, %c0_51] : memref<18x18x128xbf16, #tpu.memory_space<vmem>>, vector<16x16x128xbf16>
    %104 = vector.shape_cast %103 : vector<16x16x128xbf16> to vector<256x128xbf16>
    %c0_52 = arith.constant 0 : index
    %c0_53 = arith.constant 0 : index
    %105 = vector.load %arg9[%c0_52, %c0_53] : memref<256x1152xbf16, #tpu.memory_space<vmem>>, vector<256x128xbf16>
    tpu.vector_store %arg9[%c0_52, %c0_53], %104 {strides = array<i32>} : memref<256x1152xbf16, #tpu.memory_space<vmem>>, vector<256x128xbf16>,
    %c0_54 = arith.constant 0 : index
    %c1_55 = arith.constant 1 : index
    %c0_56 = arith.constant 0 : index
    %106 = vector.load %arg8[%c0_54, %c1_55, %c0_56] : memref<18x18x128xbf16, #tpu.memory_space<vmem>>, vector<16x16x128xbf16>
    %107 = vector.shape_cast %106 : vector<16x16x128xbf16> to vector<256x128xbf16>
    %c0_57 = arith.constant 0 : index
    %c128 = arith.constant 128 : index
    %108 = vector.load %arg9[%c0_57, %c128] : memref<256x1152xbf16, #tpu.memory_space<vmem>>, vector<256x128xbf16>
    tpu.vector_store %arg9[%c0_57, %c128], %107 {strides = array<i32>} : memref<256x1152xbf16, #tpu.memory_space<vmem>>, vector<256x128xbf16>,
    %c0_58 = arith.constant 0 : index
    %c2_59 = arith.constant 2 : index
    %c0_60 = arith.constant 0 : index
    %109 = vector.load %arg8[%c0_58, %c2_59, %c0_60] : memref<18x18x128xbf16, #tpu.memory_space<vmem>>, vector<16x16x128xbf16>
    %110 = vector.shape_cast %109 : vector<16x16x128xbf16> to vector<256x128xbf16>
    %c0_61 = arith.constant 0 : index
    %c256 = arith.constant 256 : index
    %111 = vector.load %arg9[%c0_61, %c256] : memref<256x1152xbf16, #tpu.memory_space<vmem>>, vector<256x128xbf16>
    tpu.vector_store %arg9[%c0_61, %c256], %110 {strides = array<i32>} : memref<256x1152xbf16, #tpu.memory_space<vmem>>, vector<256x128xbf16>,
    %c1_62 = arith.constant 1 : index
    %c0_63 = arith.constant 0 : index
    %c0_64 = arith.constant 0 : index
    %112 = vector.load %arg8[%c1_62, %c0_63, %c0_64] : memref<18x18x128xbf16, #tpu.memory_space<vmem>>, vector<16x16x128xbf16>
    %113 = vector.shape_cast %112 : vector<16x16x128xbf16> to vector<256x128xbf16>
    %c0_65 = arith.constant 0 : index
    %c384 = arith.constant 384 : index
    %114 = vector.load %arg9[%c0_65, %c384] : memref<256x1152xbf16, #tpu.memory_space<vmem>>, vector<256x128xbf16>
    tpu.vector_store %arg9[%c0_65, %c384], %113 {strides = array<i32>} : memref<256x1152xbf16, #tpu.memory_space<vmem>>, vector<256x128xbf16>,
    %c1_66 = arith.constant 1 : index
    %c1_67 = arith.constant 1 : index
    %c0_68 = arith.constant 0 : index
    %115 = vector.load %arg8[%c1_66, %c1_67, %c0_68] : memref<18x18x128xbf16, #tpu.memory_space<vmem>>, vector<16x16x128xbf16>
    %116 = vector.shape_cast %115 : vector<16x16x128xbf16> to vector<256x128xbf16>
    %c0_69 = arith.constant 0 : index
    %c512 = arith.constant 512 : index
    %117 = vector.load %arg9[%c0_69, %c512] : memref<256x1152xbf16, #tpu.memory_space<vmem>>, vector<256x128xbf16>
    tpu.vector_store %arg9[%c0_69, %c512], %116 {strides = array<i32>} : memref<256x1152xbf16, #tpu.memory_space<vmem>>, vector<256x128xbf16>,
    %c1_70 = arith.constant 1 : index
    %c2_71 = arith.constant 2 : index
    %c0_72 = arith.constant 0 : index
    %118 = vector.load %arg8[%c1_70, %c2_71, %c0_72] : memref<18x18x128xbf16, #tpu.memory_space<vmem>>, vector<16x16x128xbf16>
    %119 = vector.shape_cast %118 : vector<16x16x128xbf16> to vector<256x128xbf16>
    %c0_73 = arith.constant 0 : index
    %c640 = arith.constant 640 : index
    %120 = vector.load %arg9[%c0_73, %c640] : memref<256x1152xbf16, #tpu.memory_space<vmem>>, vector<256x128xbf16>
    tpu.vector_store %arg9[%c0_73, %c640], %119 {strides = array<i32>} : memref<256x1152xbf16, #tpu.memory_space<vmem>>, vector<256x128xbf16>,
    %c2_74 = arith.constant 2 : index
    %c0_75 = arith.constant 0 : index
    %c0_76 = arith.constant 0 : index
    %121 = vector.load %arg8[%c2_74, %c0_75, %c0_76] : memref<18x18x128xbf16, #tpu.memory_space<vmem>>, vector<16x16x128xbf16>
    %122 = vector.shape_cast %121 : vector<16x16x128xbf16> to vector<256x128xbf16>
    %c0_77 = arith.constant 0 : index
    %c768 = arith.constant 768 : index
    %123 = vector.load %arg9[%c0_77, %c768] : memref<256x1152xbf16, #tpu.memory_space<vmem>>, vector<256x128xbf16>
    tpu.vector_store %arg9[%c0_77, %c768], %122 {strides = array<i32>} : memref<256x1152xbf16, #tpu.memory_space<vmem>>, vector<256x128xbf16>,
    %c2_78 = arith.constant 2 : index
    %c1_79 = arith.constant 1 : index
    %c0_80 = arith.constant 0 : index
    %124 = vector.load %arg8[%c2_78, %c1_79, %c0_80] : memref<18x18x128xbf16, #tpu.memory_space<vmem>>, vector<16x16x128xbf16>
    %125 = vector.shape_cast %124 : vector<16x16x128xbf16> to vector<256x128xbf16>
    %c0_81 = arith.constant 0 : index
    %c896 = arith.constant 896 : index
    %126 = vector.load %arg9[%c0_81, %c896] : memref<256x1152xbf16, #tpu.memory_space<vmem>>, vector<256x128xbf16>
    tpu.vector_store %arg9[%c0_81, %c896], %125 {strides = array<i32>} : memref<256x1152xbf16, #tpu.memory_space<vmem>>, vector<256x128xbf16>,
    %c2_82 = arith.constant 2 : index
    %c2_83 = arith.constant 2 : index
    %c0_84 = arith.constant 0 : index
    %127 = vector.load %arg8[%c2_82, %c2_83, %c0_84] : memref<18x18x128xbf16, #tpu.memory_space<vmem>>, vector<16x16x128xbf16>
    %128 = vector.shape_cast %127 : vector<16x16x128xbf16> to vector<256x128xbf16>
    %c0_85 = arith.constant 0 : index
    %c1024 = arith.constant 1024 : index
    %129 = vector.load %arg9[%c0_85, %c1024] : memref<256x1152xbf16, #tpu.memory_space<vmem>>, vector<256x128xbf16>
    tpu.vector_store %arg9[%c0_85, %c1024], %128 {strides = array<i32>} : memref<256x1152xbf16, #tpu.memory_space<vmem>>, vector<256x128xbf16>,
    %c0_86 = arith.constant 0 : index
    %c0_87 = arith.constant 0 : index
    %130 = vector.load %arg9[%c0_86, %c0_87] : memref<256x1152xbf16, #tpu.memory_space<vmem>>, vector<256x1152xbf16>
    %c0_88 = arith.constant 0 : index
    %c0_89 = arith.constant 0 : index
    %131 = vector.load %arg6[%c0_88, %c0_89] : memref<1152x128xbf16, #tpu.memory_space<vmem>>, vector<1152x128xbf16>
    %cst_90 = arith.constant dense<0.000000e+00> : vector<256x128xf32>
    %132 = tpu.matmul %130, %131, %cst_90 {dimension_numbers = #tpu.dot_dimension_numbers<[1], [0], [0], [1], [0, 0, 1, 1], [], []>} : vector<256x1152xbf16>, vector<1152x128xbf16>, vector<256x128xf32> -> vector<256x128xf32>
    %133 = vector.extract_strided_slice %132 {offsets = [0, 0], sizes = [256, 12], strides = [1, 1]} : vector<256x128xf32> to vector<256x12xf32>
    %134 = vector.shape_cast %133 : vector<256x12xf32> to vector<1x16x16x12xf32>
    %c0_91 = arith.constant 0 : index
    %c0_92 = arith.constant 0 : index
    %c0_93 = arith.constant 0 : index
    %c0_94 = arith.constant 0 : index
    %135 = vector.load %arg7[%c0_91, %c0_92, %c0_93, %c0_94] : memref<1x16x16x12xf32, #tpu.memory_space<vmem>>, vector<1x16x16x12xf32>
    tpu.vector_store %arg7[%c0_91, %c0_92, %c0_93, %c0_94], %134 {strides = array<i32>} : memref<1x16x16x12xf32, #tpu.memory_space<vmem>>, vector<1x16x16x12xf32>,
    return
  }
  func.func @transform_0(%arg0: i32) -> (i32, i32, i32, i32) {
    %c0_i32 = arith.constant 0 : i32
    %c0_i32_0 = arith.constant 0 : i32
    %c0_i32_1 = arith.constant 0 : i32
    %c0_i32_2 = arith.constant 0 : i32
    return %arg0, %c0_i32, %c0_i32_0, %c0_i32_1 : i32, i32, i32, i32
  }
  func.func @transform_1(%arg0: i32) -> (i32, i32) {
    %c0_i32 = arith.constant 0 : i32
    %c0_i32_0 = arith.constant 0 : i32
    %c0_i32_1 = arith.constant 0 : i32
    return %c0_i32, %c0_i32_0 : i32, i32
  }
  func.func @transform_2(%arg0: i32) -> (i32, i32) {
    %c0_i32 = arith.constant 0 : i32
    %c0_i32_0 = arith.constant 0 : i32
    %c0_i32_1 = arith.constant 0 : i32
    return %c0_i32, %c0_i32_0 : i32, i32
  }
  func.func @transform_3(%arg0: i32) -> (i32, i32) {
    %c0_i32 = arith.constant 0 : i32
    %c0_i32_0 = arith.constant 0 : i32
    %c0_i32_1 = arith.constant 0 : i32
    return %c0_i32, %c0_i32_0 : i32, i32
  }
  func.func @transform_4(%arg0: i32) -> (i32, i32) {
    %c0_i32 = arith.constant 0 : i32
    %c0_i32_0 = arith.constant 0 : i32
    %c0_i32_1 = arith.constant 0 : i32
    return %c0_i32, %c0_i32_0 : i32, i32
  }
  func.func @transform_5(%arg0: i32) -> (i32, i32) {
    %c0_i32 = arith.constant 0 : i32
    %c0_i32_0 = arith.constant 0 : i32
    %c0_i32_1 = arith.constant 0 : i32
    return %c0_i32, %c0_i32_0 : i32, i32
  }
  func.func @transform_6(%arg0: i32) -> (i32, i32, i32, i32) {
    %c0_i32 = arith.constant 0 : i32
    %c0_i32_0 = arith.constant 0 : i32
    %c0_i32_1 = arith.constant 0 : i32
    %c0_i32_2 = arith.constant 0 : i32
    return %arg0, %c0_i32, %c0_i32_0, %c0_i32_1 : i32, i32, i32, i32
  }
}

</mosaic_0001>

<llo_original>
// kernel: bottleneck_forward.1
$region0: #{bottleneck_forward.1}
  #allocation0 [shape = 'u32[]', space=smem, size = 0x4, offset = 0x4, fixed_abs, tag = 'smem constant byte address 0x4 - core index']
  #allocation1 [shape = 'u32[144,128]{1,0:T(1,128)}', space=vmem, size = 0x12000, scoped, tag = 'internal scratch']
  #allocation2 [shape = 'bf16[18,18,128]{2,1,0:T(8,128)(2,1)}', space=vmem, size = 0x1b000, scoped, tag = 'scratch operand']
  #allocation3 [shape = 'bf16[256,1152]{1,0:T(8,128)(2,1)}', space=vmem, size = 0x90000, scoped, tag = 'scratch operand']
  %s0 = inlined_call_operand.vmem [shape: f32[2,16,16,24], index: 0, kind: input, shape index: {}]
  %s1 = inlined_call_operand.vmem [shape: f32[1,24], index: 1, kind: input, shape index: {}]
  %s2 = inlined_call_operand.vmem [shape: f32[1,24], index: 2, kind: input, shape index: {}]
  %s3 = inlined_call_operand.vmem [shape: bf16[24,128], index: 3, kind: input, shape index: {}]
  %s4 = inlined_call_operand.vmem [shape: f32[1,128], index: 4, kind: input, shape index: {}]
  %s5 = inlined_call_operand.vmem [shape: bf16[1152,128], index: 5, kind: input, shape index: {}]
  %s6 = inlined_call_operand.vmem [shape: f32[2,16,16,12], index: 6, kind: output, shape index: {}]
  %s7 = sld [smem:[#allocation0]]
  $region57: #{bottleneck_forward.1} parent=0
    _
  %s9 = ssub.s32 1, %s7
  %s10 = scalar_select 0, %s9, %s7
  loop: start=0, step=1, limit=4
  $region2: #{bottleneck_forward.1} parent=0 // loop_pre_header
    _
  $region3: #{bottleneck_forward.1} parent=0 // loop_header
    %s12 = sphi 0, %s16
    %p13 = scmp.ge.s32.totalorder %s12, 4
    %s22 = sphi 0, %s24
    %s25 = sphi 0, %s22
    %s26 = sphi 0, %s25
    %s42 = sphi 0, %s26
    %s46 = sphi 0, %s46
    %s48 = sphi 0, %s46
    %s49 = sphi 0, %s48
    %s63 = sphi 0, %s49
    %s67 = sphi 0, %s67
    %s69 = sphi 0, %s67
    %s70 = sphi 0, %s69
    %s84 = sphi 0, %s70
    %s88 = sphi 0, %s88
    %s90 = sphi 0, %s88
    %s91 = sphi 0, %s90
    %s105 = sphi 0, %s91
    %s109 = sphi 0, %s109
    %s111 = sphi 0, %s109
    %s112 = sphi 0, %s111
    %s126 = sphi 0, %s112
    %s130 = sphi 0, %s130
    %s132 = sphi 0, %s130
    %s133 = sphi 0, %s132
    %s147 = sphi 0, %s133
    %s153 = sphi 0, %s155
    %s156 = sphi 0, %s153
    %s157 = sphi 0, %s156
    %s173 = sphi 0, %s157
  $region4: #{bottleneck_forward.1} parent=0 // loop_header_branch
    %15 = sbr.rel (%p13) target = $region8
  $region5: #{bottleneck_forward.1} parent=0 // loop_body
    %s17 = ssub.s32 %s12, 1
    %s18 = ssub.s32 %s12, 2
    %s19 = sadd.s32 %s12, 1
    %s20 = ssub.s32 %s12, %s19
    %p21 = scmp.eq.s32.totalorder %s20, 0
    %s23 = sadd.s32 %s22, 1
    %s24 = scalar_select %p21, %s22, %s23
    %p27 = pneg %p21
    %p28 = scmp.eq.s32.totalorder %s12, 1
    %p29 = por %p27, %p28
    %p30 = scmp.ne.s32.totalorder %s22, %s25
    %p31 = scmp.eq.s32.totalorder %s12, 0
    %p32 = por %p30, %p31
    %p33 = scmp.ne.s32.totalorder %s22, %s25
    %p34 = scmp.eq.s32.totalorder %s17, 1
    %p35 = por %p33, %p34
    %p36 = scmp.ne.s32.totalorder %s25, %s26
    %p37 = scmp.eq.s32.totalorder %s17, 0
    %p38 = por %p36, %p37
    %p39 = scmp.ne.s32.totalorder %s25, %s26
    %p40 = scmp.eq.s32.totalorder %s18, 1
    %p41 = por %p39, %p40
    %p43 = scmp.ne.s32.totalorder %s26, %s42
    %p44 = scmp.eq.s32.totalorder %s18, 0
    %p45 = por %p43, %p44
    %s47 = sadd.s32 %s46, 1
    %p50 = scmp.eq.s32.totalorder %s12, 1
    %p51 = scmp.ne.s32.totalorder %s46, %s48
    %p52 = scmp.eq.s32.totalorder %s12, 0
    %p53 = por %p51, %p52
    %p54 = scmp.ne.s32.totalorder %s46, %s48
    %p55 = scmp.eq.s32.totalorder %s17, 1
    %p56 = por %p54, %p55
    %p57 = scmp.ne.s32.totalorder %s48, %s49
    %p58 = scmp.eq.s32.totalorder %s17, 0
    %p59 = por %p57, %p58
    %p60 = scmp.ne.s32.totalorder %s48, %s49
    %p61 = scmp.eq.s32.totalorder %s18, 1
    %p62 = por %p60, %p61
    %p64 = scmp.ne.s32.totalorder %s49, %s63
    %p65 = scmp.eq.s32.totalorder %s18, 0
    %p66 = por %p64, %p65
    %s68 = sadd.s32 %s67, 1
    %p71 = scmp.eq.s32.totalorder %s12, 1
    %p72 = scmp.ne.s32.totalorder %s67, %s69
    %p73 = scmp.eq.s32.totalorder %s12, 0
    %p74 = por %p72, %p73
    %p75 = scmp.ne.s32.totalorder %s67, %s69
    %p76 = scmp.eq.s32.totalorder %s17, 1
    %p77 = por %p75, %p76
    %p78 = scmp.ne.s32.totalorder %s69, %s70
    %p79 = scmp.eq.s32.totalorder %s17, 0
    %p80 = por %p78, %p79
    %p81 = scmp.ne.s32.totalorder %s69, %s70
    %p82 = scmp.eq.s32.totalorder %s18, 1
    %p83 = por %p81, %p82
    %p85 = scmp.ne.s32.totalorder %s70, %s84
    %p86 = scmp.eq.s32.totalorder %s18, 0
    %p87 = por %p85, %p86
    %s89 = sadd.s32 %s88, 1
    %p92 = scmp.eq.s32.totalorder %s12, 1
    %p93 = scmp.ne.s32.totalorder %s88, %s90
    %p94 = scmp.eq.s32.totalorder %s12, 0
    %p95 = por %p93, %p94
    %p96 = scmp.ne.s32.totalorder %s88, %s90
    %p97 = scmp.eq.s32.totalorder %s17, 1
    %p98 = por %p96, %p97
    %p99 = scmp.ne.s32.totalorder %s90, %s91
    %p100 = scmp.eq.s32.totalorder %s17, 0
    %p101 = por %p99, %p100
    %p102 = scmp.ne.s32.totalorder %s90, %s91
    %p103 = scmp.eq.s32.totalorder %s18, 1
    %p104 = por %p102, %p103
    %p106 = scmp.ne.s32.totalorder %s91, %s105
    %p107 = scmp.eq.s32.totalorder %s18, 0
    %p108 = por %p106, %p107
    %s110 = sadd.s32 %s109, 1
    %p113 = scmp.eq.s32.totalorder %s12, 1
    %p114 = scmp.ne.s32.totalorder %s109, %s111
    %p115 = scmp.eq.s32.totalorder %s12, 0
    %p116 = por %p114, %p115
    %p117 = scmp.ne.s32.totalorder %s109, %s111
    %p118 = scmp.eq.s32.totalorder %s17, 1
    %p119 = por %p117, %p118
    %p120 = scmp.ne.s32.totalorder %s111, %s112
    %p121 = scmp.eq.s32.totalorder %s17, 0
    %p122 = por %p120, %p121
    %p123 = scmp.ne.s32.totalorder %s111, %s112
    %p124 = scmp.eq.s32.totalorder %s18, 1
    %p125 = por %p123, %p124
    %p127 = scmp.ne.s32.totalorder %s112, %s126
    %p128 = scmp.eq.s32.totalorder %s18, 0
    %p129 = por %p127, %p128
    %s131 = sadd.s32 %s130, 1
    %p134 = scmp.eq.s32.totalorder %s12, 1
    %p135 = scmp.ne.s32.totalorder %s130, %s132
    %p136 = scmp.eq.s32.totalorder %s12, 0
    %p137 = por %p135, %p136
    %p138 = scmp.ne.s32.totalorder %s130, %s132
    %p139 = scmp.eq.s32.totalorder %s17, 1
    %p140 = por %p138, %p139
    %p141 = scmp.ne.s32.totalorder %s132, %s133
    %p142 = scmp.eq.s32.totalorder %s17, 0
    %p143 = por %p141, %p142
    %p144 = scmp.ne.s32.totalorder %s132, %s133
    %p145 = scmp.eq.s32.totalorder %s18, 1
    %p146 = por %p144, %p145
    %p148 = scmp.ne.s32.totalorder %s133, %s147
    %p149 = scmp.eq.s32.totalorder %s18, 0
    %p150 = por %p148, %p149
    %s151 = ssub.s32 %s12, %s19
    %p152 = scmp.eq.s32.totalorder %s151, 0
    %s154 = sadd.s32 %s153, 1
    %s155 = scalar_select %p152, %s153, %s154
    %p158 = pneg %p152
    %p159 = scmp.eq.s32.totalorder %s12, 1
    %p160 = por %p158, %p159
    %p161 = scmp.ne.s32.totalorder %s153, %s156
    %p162 = scmp.eq.s32.totalorder %s12, 0
    %p163 = por %p161, %p162
    %p164 = scmp.ne.s32.totalorder %s153, %s156
    %p165 = scmp.eq.s32.totalorder %s17, 1
    %p166 = por %p164, %p165
    %p167 = scmp.ne.s32.totalorder %s156, %s157
    %p168 = scmp.eq.s32.totalorder %s17, 0
    %p169 = por %p167, %p168
    %p170 = scmp.ne.s32.totalorder %s156, %s157
    %p171 = scmp.eq.s32.totalorder %s18, 1
    %p172 = por %p170, %p171
    %p174 = scmp.ne.s32.totalorder %s157, %s173
    %p175 = scmp.eq.s32.totalorder %s18, 0
    %p176 = por %p174, %p175
    %p177 = scmp.le.s32.totalorder 1, %s12
    %p178 = scmp.lt.s32.totalorder %s12, 3
    %p179 = pnand %p177, %p178
    %p180 = pneg %p179
    // Predicated region
    $region9: #{bottleneck_forward.1} parent=5 // pred_check
      _
    $region10: #{bottleneck_forward.1} parent=5 // pred_check_branch
      %182 = sbr.rel (%p179) target = $region12
    $region11: #{bottleneck_forward.1} parent=5 // pred_region
      %s183 = ssub.s32 %s12, 1
      // Predicated region
      $region13: #{bottleneck_forward.1} parent=11 // pred_check
        %p184 = pneg %p59
      $region14: #{bottleneck_forward.1} parent=11 // pred_check_branch
        %186 = sbr.rel (%p184) target = $region16
      $region15: #{bottleneck_forward.1} parent=11 // pred_region
        _
      $region16: #{bottleneck_forward.1} parent=11 // pred_fallthru
        _
      // Predicated region
      $region17: #{bottleneck_forward.1} parent=11 // pred_check
        %p187 = pneg %p80
      $region18: #{bottleneck_forward.1} parent=11 // pred_check_branch
        %189 = sbr.rel (%p187) target = $region20
      $region19: #{bottleneck_forward.1} parent=11 // pred_region
        _
      $region20: #{bottleneck_forward.1} parent=11 // pred_fallthru
        _
      // Predicated region
      $region21: #{bottleneck_forward.1} parent=11 // pred_check
        %p190 = pneg %p101
      $region22: #{bottleneck_forward.1} parent=11 // pred_check_branch
        %192 = sbr.rel (%p190) target = $region24
      $region23: #{bottleneck_forward.1} parent=11 // pred_region
        _
      $region24: #{bottleneck_forward.1} parent=11 // pred_fallthru
        _
      // Predicated region
      $region25: #{bottleneck_forward.1} parent=11 // pred_check
        %p193 = pneg %p122
      $region26: #{bottleneck_forward.1} parent=11 // pred_check_branch
        %195 = sbr.rel (%p193) target = $region28
      $region27: #{bottleneck_forward.1} parent=11 // pred_region
        _
      $region28: #{bottleneck_forward.1} parent=11 // pred_fallthru
        _
      // Predicated region
      $region29: #{bottleneck_forward.1} parent=11 // pred_check
        %p196 = pneg %p143
      $region30: #{bottleneck_forward.1} parent=11 // pred_check_branch
        %198 = sbr.rel (%p196) target = $region32
      $region31: #{bottleneck_forward.1} parent=11 // pred_region
        _
      $region32: #{bottleneck_forward.1} parent=11 // pred_fallthru
        _
    $region12: #{bottleneck_forward.1} parent=5 // pred_fallthru
      _
    %p199 = scmp.lt.s32.totalorder %s12, 2
    // Predicated region
    $region33: #{bottleneck_forward.1} parent=5 // pred_check
      %p200 = pneg %p199
    $region34: #{bottleneck_forward.1} parent=5 // pred_check_branch
      %202 = sbr.rel (%p200) target = $region36
    $region35: #{bottleneck_forward.1} parent=5 // pred_region
      // Predicated region
      $region37: #{bottleneck_forward.1} parent=35 // pred_check
        %p203 = pneg %p32
      $region38: #{bottleneck_forward.1} parent=35 // pred_check_branch
        %205 = sbr.rel (%p203) target = $region40
      $region39: #{bottleneck_forward.1} parent=35 // pred_region
        %p206 = scmp.lt.s32.totalorder %s12, 1
        %s207 = scalar_select %p206, %s12, 1
        %s208 = smul.addr %s207, 32
        %s209 = smul.addr %s208, 8
        %s210 = scalar_lea.vmem %s0, %s209
      $region40: #{bottleneck_forward.1} parent=35 // pred_fallthru
        _
    $region36: #{bottleneck_forward.1} parent=5 // pred_fallthru
      _
    %p211 = scmp.le.s32.totalorder 1, %s12
    %p212 = scmp.lt.s32.totalorder %s12, 3
    %p213 = pnand %p211, %p212
    %p214 = pneg %p213
    // Predicated region
    $region41: #{bottleneck_forward.1} parent=5 // pred_check
      _
    $region42: #{bottleneck_forward.1} parent=5 // pred_check_branch
      %216 = sbr.rel (%p213) target = $region44
    $region43: #{bottleneck_forward.1} parent=5 // pred_region
      %s217 = ssub.s32 %s12, 1
      %p218 = scmp.lt.s32.totalorder %s17, 1
      %s219 = scalar_select %p218, %s17, 1
      %s220 = smul.addr %s219, 32
      %s221 = smul.addr %s220, 8
      %s222 = scalar_lea.vmem %s0, %s221
      %p223 = pneg %p38
      %p224 = pneg %p35
      %p225 = pneg %p59
      %p226 = pneg %p56
      %p227 = pneg %p80
      %p228 = pneg %p77
      %p229 = pneg %p101
      %p230 = pneg %p98
      %p231 = pneg %p122
      %p232 = pneg %p119
      %p233 = pneg %p143
      %p234 = pneg %p140
      %p235 = pneg %p169
      %p236 = pneg %p166
      %p237 = scmp.lt.s32.totalorder %s17, 1
      %s238 = scalar_select %p237, %s17, 1
      %s239 = smul.addr %s238, 32
      %s240 = smul.addr %s239, 8
      %s241 = scalar_lea.vmem %s6, %s240
      %p242 = scmp.lt.s32.totalorder %s17, 1
      %s243 = scalar_select %p242, %s17, 1
      %s244 = smul.addr %s243, 32
      %s245 = smul.addr %s244, 8
      %s246 = scalar_lea.vmem %s0, %s245
      %p247 = scmp.lt.s32.totalorder %s17, 1
      %s248 = scalar_select %p247, %s17, 1
      %s249 = smul.addr %s248, 32
      %s250 = smul.addr %s249, 8
      %s251 = scalar_lea.vmem %s6, %s250
      %253 = vst [vmem:[#allocation2] sm:$0xf] 0
      %254 = vst [vmem:[#allocation2 + $0x4] sm:$0xf] 0
      %255 = vst [vmem:[#allocation2 + $0x8] sm:$0x1] 0
      %256 = vst [vmem:[#allocation2 + $0xc] sm:$0xf] 0
      %257 = vst [vmem:[#allocation2 + $0x10] sm:$0xf] 0
      %258 = vst [vmem:[#allocation2 + $0x14] sm:$0x1] 0
      %259 = vst [vmem:[#allocation2 + $0x18] sm:$0xf] 0
      %260 = vst [vmem:[#allocation2 + $0x1c] sm:$0xf] 0
      %261 = vst [vmem:[#allocation2 + $0x20] sm:$0x1] 0
      %262 = vst [vmem:[#allocation2 + $0x24] sm:$0xf] 0
      %263 = vst [vmem:[#allocation2 + $0x28] sm:$0xf] 0
      %264 = vst [vmem:[#allocation2 + $0x2c] sm:$0x1] 0
      %265 = vst [vmem:[#allocation2 + $0x30] sm:$0xf] 0
      %266 = vst [vmem:[#allocation2 + $0x34] sm:$0xf] 0
      %267 = vst [vmem:[#allocation2 + $0x38] sm:$0x1] 0
      %268 = vst [vmem:[#allocation2 + $0x3c] sm:$0xf] 0
      %269 = vst [vmem:[#allocation2 + $0x40] sm:$0xf] 0
      %270 = vst [vmem:[#allocation2 + $0x44] sm:$0x1] 0
      %271 = vst [vmem:[#allocation2 + $0x48] sm:$0xf] 0
      %272 = vst [vmem:[#allocation2 + $0x4c] sm:$0xf] 0
      %273 = vst [vmem:[#allocation2 + $0x50] sm:$0x1] 0
      %274 = vst [vmem:[#allocation2 + $0x54] sm:$0xf] 0
      %275 = vst [vmem:[#allocation2 + $0x58] sm:$0xf] 0
      %276 = vst [vmem:[#allocation2 + $0x5c] sm:$0x1] 0
      %277 = vst [vmem:[#allocation2 + $0x60] sm:$0xf] 0
      %278 = vst [vmem:[#allocation2 + $0x64] sm:$0xf] 0
      %279 = vst [vmem:[#allocation2 + $0x68] sm:$0x1] 0
      %280 = vst [vmem:[#allocation2 + $0x6c] sm:$0xf] 0
      %281 = vst [vmem:[#allocation2 + $0x70] sm:$0xf] 0
      %282 = vst [vmem:[#allocation2 + $0x74] sm:$0x1] 0
      %283 = vst [vmem:[#allocation2 + $0x78] sm:$0xf] 0
      %284 = vst [vmem:[#allocation2 + $0x7c] sm:$0xf] 0
      %285 = vst [vmem:[#allocation2 + $0x80] sm:$0x1] 0
      %286 = vst [vmem:[#allocation2 + $0x84] sm:$0xf] 0
      %287 = vst [vmem:[#allocation2 + $0x88] sm:$0xf] 0
      %288 = vst [vmem:[#allocation2 + $0x8c] sm:$0x1] 0
      %289 = vst [vmem:[#allocation2 + $0x90] sm:$0xf] 0
      %290 = vst [vmem:[#allocation2 + $0x94] sm:$0xf] 0
      %291 = vst [vmem:[#allocation2 + $0x98] sm:$0x1] 0
      %292 = vst [vmem:[#allocation2 + $0x9c] sm:$0xf] 0
      %293 = vst [vmem:[#allocation2 + $0xa0] sm:$0xf] 0
      %294 = vst [vmem:[#allocation2 + $0xa4] sm:$0x1] 0
      %295 = vst [vmem:[#allocation2 + $0xa8] sm:$0xf] 0
      %296 = vst [vmem:[#allocation2 + $0xac] sm:$0xf] 0
      %297 = vst [vmem:[#allocation2 + $0xb0] sm:$0x1] 0
      %298 = vst [vmem:[#allocation2 + $0xb4] sm:$0xf] 0
      %299 = vst [vmem:[#allocation2 + $0xb8] sm:$0xf] 0
      %300 = vst [vmem:[#allocation2 + $0xbc] sm:$0x1] 0
      %301 = vst [vmem:[#allocation2 + $0xc0] sm:$0xf] 0
      %302 = vst [vmem:[#allocation2 + $0xc4] sm:$0xf] 0
      %303 = vst [vmem:[#allocation2 + $0xc8] sm:$0x1] 0
      %304 = vst [vmem:[#allocation2 + $0xcc] sm:$0xf] 0
      %305 = vst [vmem:[#allocation2 + $0xd0] sm:$0xf] 0
      %306 = vst [vmem:[#allocation2 + $0xd4] sm:$0x1] 0
      %v307 = vld [vmem:[%s246] sm:$0xff]
      %v308 = vld [vmem:[%s246 + $0x8] sm:$0xff]
      %v309 = vld [vmem:[%s246 + $0x10] sm:$0xff]
      %v310 = vld [vmem:[%s246 + $0x18] sm:$0xff]
      %v311 = vld [vmem:[%s246 + $0x20] sm:$0xff]
      %v312 = vld [vmem:[%s246 + $0x28] sm:$0xff]
      %v313 = vld [vmem:[%s246 + $0x30] sm:$0xff]
      %v314 = vld [vmem:[%s246 + $0x38] sm:$0xff]
      %v315 = vld [vmem:[%s246 + $0x40] sm:$0xff]
      %v316 = vld [vmem:[%s246 + $0x48] sm:$0xff]
      %v317 = vld [vmem:[%s246 + $0x50] sm:$0xff]
      %v318 = vld [vmem:[%s246 + $0x58] sm:$0xff]
      %v319 = vld [vmem:[%s246 + $0x60] sm:$0xff]
      %v320 = vld [vmem:[%s246 + $0x68] sm:$0xff]
      %v321 = vld [vmem:[%s246 + $0x70] sm:$0xff]
      %v322 = vld [vmem:[%s246 + $0x78] sm:$0xff]
      %v323 = vld [vmem:[%s246 + $0x80] sm:$0xff]
      %v324 = vld [vmem:[%s246 + $0x88] sm:$0xff]
      %v325 = vld [vmem:[%s246 + $0x90] sm:$0xff]
      %v326 = vld [vmem:[%s246 + $0x98] sm:$0xff]
      %v327 = vld [vmem:[%s246 + $0xa0] sm:$0xff]
      %v328 = vld [vmem:[%s246 + $0xa8] sm:$0xff]
      %v329 = vld [vmem:[%s246 + $0xb0] sm:$0xff]
      %v330 = vld [vmem:[%s246 + $0xb8] sm:$0xff]
      %v331 = vld [vmem:[%s246 + $0xc0] sm:$0xff]
      %v332 = vld [vmem:[%s246 + $0xc8] sm:$0xff]
      %v333 = vld [vmem:[%s246 + $0xd0] sm:$0xff]
      %v334 = vld [vmem:[%s246 + $0xd8] sm:$0xff]
      %v335 = vld [vmem:[%s246 + $0xe0] sm:$0xff]
      %v336 = vld [vmem:[%s246 + $0xe8] sm:$0xff]
      %v337 = vld [vmem:[%s246 + $0xf0] sm:$0xff]
      %v338 = vld [vmem:[%s246 + $0xf8] sm:$0xff]
      %v339 = vld [vmem:[%s1] sm:$0x1]
      %v341 = vlaneseq
      %v342 = vshrl.u32 %v341, 7
      %v343 = vsub.s32 0, %v342
      %v344 = vrot.slane %v339, %v343
      %v346 = vmul.f32 %v307, %v344
      %v347 = vmul.f32 %v308, %v344
      %v348 = vmul.f32 %v309, %v344
      %v349 = vmul.f32 %v310, %v344
      %v350 = vmul.f32 %v311, %v344
      %v351 = vmul.f32 %v312, %v344
      %v352 = vmul.f32 %v313, %v344
      %v353 = vmul.f32 %v314, %v344
      %v354 = vmul.f32 %v315, %v344
      %v355 = vmul.f32 %v316, %v344
      %v356 = vmul.f32 %v317, %v344
      %v357 = vmul.f32 %v318, %v344
      %v358 = vmul.f32 %v319, %v344
      %v359 = vmul.f32 %v320, %v344
      %v360 = vmul.f32 %v321, %v344
      %v361 = vmul.f32 %v322, %v344
      %v362 = vmul.f32 %v323, %v344
      %v363 = vmul.f32 %v324, %v344
      %v364 = vmul.f32 %v325, %v344
      %v365 = vmul.f32 %v326, %v344
      %v366 = vmul.f32 %v327, %v344
      %v367 = vmul.f32 %v328, %v344
      %v368 = vmul.f32 %v329, %v344
      %v369 = vmul.f32 %v330, %v344
      %v370 = vmul.f32 %v331, %v344
      %v371 = vmul.f32 %v332, %v344
      %v372 = vmul.f32 %v333, %v344
      %v373 = vmul.f32 %v334, %v344
      %v374 = vmul.f32 %v335, %v344
      %v375 = vmul.f32 %v336, %v344
      %v376 = vmul.f32 %v337, %v344
      %v377 = vmul.f32 %v338, %v344
      %v378 = vld [vmem:[%s2] sm:$0x1]
      %v380 = vlaneseq
      %v381 = vshrl.u32 %v380, 7
      %v382 = vsub.s32 0, %v381
      %v383 = vrot.slane %v378, %v382
      %v385 = vadd.f32 %v346, %v383
      %v386 = vadd.f32 %v347, %v383
      %v387 = vadd.f32 %v348, %v383
      %v388 = vadd.f32 %v349, %v383
      %v389 = vadd.f32 %v350, %v383
      %v390 = vadd.f32 %v351, %v383
      %v391 = vadd.f32 %v352, %v383
      %v392 = vadd.f32 %v353, %v383
      %v393 = vadd.f32 %v354, %v383
      %v394 = vadd.f32 %v355, %v383
      %v395 = vadd.f32 %v356, %v383
      %v396 = vadd.f32 %v357, %v383
      %v397 = vadd.f32 %v358, %v383
      %v398 = vadd.f32 %v359, %v383
      %v399 = vadd.f32 %v360, %v383
      %v400 = vadd.f32 %v361, %v383
      %v401 = vadd.f32 %v362, %v383
      %v402 = vadd.f32 %v363, %v383
      %v403 = vadd.f32 %v364, %v383
      %v404 = vadd.f32 %v365, %v383
      %v405 = vadd.f32 %v366, %v383
      %v406 = vadd.f32 %v367, %v383
      %v407 = vadd.f32 %v368, %v383
      %v408 = vadd.f32 %v369, %v383
      %v409 = vadd.f32 %v370, %v383
      %v410 = vadd.f32 %v371, %v383
      %v411 = vadd.f32 %v372, %v383
      %v412 = vadd.f32 %v373, %v383
      %v413 = vadd.f32 %v374, %v383
      %v414 = vadd.f32 %v375, %v383
      %v415 = vadd.f32 %v376, %v383
      %v416 = vadd.f32 %v377, %v383
      %v417 = vmax.f32 %v385, 0.0
      %v418 = vmax.f32 %v386, 0.0
      %v419 = vmax.f32 %v387, 0.0
      %v420 = vmax.f32 %v388, 0.0
      %v421 = vmax.f32 %v389, 0.0
      %v422 = vmax.f32 %v390, 0.0
      %v423 = vmax.f32 %v391, 0.0
      %v424 = vmax.f32 %v392, 0.0
      %v425 = vmax.f32 %v393, 0.0
      %v426 = vmax.f32 %v394, 0.0
      %v427 = vmax.f32 %v395, 0.0
      %v428 = vmax.f32 %v396, 0.0
      %v429 = vmax.f32 %v397, 0.0
      %v430 = vmax.f32 %v398, 0.0
      %v431 = vmax.f32 %v399, 0.0
      %v432 = vmax.f32 %v400, 0.0
      %v433 = vmax.f32 %v401, 0.0
      %v434 = vmax.f32 %v402, 0.0
      %v435 = vmax.f32 %v403, 0.0
      %v436 = vmax.f32 %v404, 0.0
      %v437 = vmax.f32 %v405, 0.0
      %v438 = vmax.f32 %v406, 0.0
      %v439 = vmax.f32 %v407, 0.0
      %v440 = vmax.f32 %v408, 0.0
      %v441 = vmax.f32 %v409, 0.0
      %v442 = vmax.f32 %v410, 0.0
      %v443 = vmax.f32 %v411, 0.0
      %v444 = vmax.f32 %v412, 0.0
      %v445 = vmax.f32 %v413, 0.0
      %v446 = vmax.f32 %v414, 0.0
      %v447 = vmax.f32 %v415, 0.0
      %v448 = vmax.f32 %v416, 0.0
      %v449 = vpack.c.bf16 %v418, %v417
      %v450 = vpack.c.bf16 %v420, %v419
      %v451 = vpack.c.bf16 %v422, %v421
      %v452 = vpack.c.bf16 %v424, %v423
      %v453 = vpack.c.bf16 %v426, %v425
      %v454 = vpack.c.bf16 %v428, %v427
      %v455 = vpack.c.bf16 %v430, %v429
      %v456 = vpack.c.bf16 %v432, %v431
      %v457 = vpack.c.bf16 %v434, %v433
      %v458 = vpack.c.bf16 %v436, %v435
      %v459 = vpack.c.bf16 %v438, %v437
      %v460 = vpack.c.bf16 %v440, %v439
      %v461 = vpack.c.bf16 %v442, %v441
      %v462 = vpack.c.bf16 %v444, %v443
      %v463 = vpack.c.bf16 %v446, %v445
      %v464 = vpack.c.bf16 %v448, %v447
      %v465 = vld [vmem:[%s3] sm:$0xf]
      %v466 = vld [vmem:[%s3 + $0x4] sm:$0xf]
      %v467 = vld [vmem:[%s3 + $0x8] sm:$0xf]
      %v468 = vld [vmem:[%s4] sm:$0x1]
      %v470 = vlaneseq
      %v471 = vshrl.u32 %v470, 7
      %v472 = vsub.s32 0, %v471
      %v473 = vrot.slane %v468, %v472
      %v478 = vunpack.c.l.b16 %v465
      %v479 = vunpack.c.l.b16 %v466
      %v480 = vunpack.c.l.b16 %v467
      %v481 = vpack.c.b16 %v479, %v478
      %v482 = vpack.c.b16 %v480, %v480
      %vm484 = vcmask 195584
      %v486 = vsel %vm484, %v449, 0
      %v489 = vsel %vm484, %v450, 0
      %v492 = vsel %vm484, %v451, 0
      %v495 = vsel %vm484, %v452, 0
      %v498 = vsel %vm484, %v453, 0
      %v501 = vsel %vm484, %v454, 0
      %v504 = vsel %vm484, %v455, 0
      %v507 = vsel %vm484, %v456, 0
      %v510 = vsel %vm484, %v457, 0
      %v513 = vsel %vm484, %v458, 0
      %v516 = vsel %vm484, %v459, 0
      %v519 = vsel %vm484, %v460, 0
      %v522 = vsel %vm484, %v461, 0
      %v525 = vsel %vm484, %v462, 0
      %v528 = vsel %vm484, %v463, 0
      %v531 = vsel %vm484, %v464, 0
      %vm533 = vcmask 1043456
      %v535 = vsel %vm533, %v482, 0
      %537 = vmatprep.subr.bf16.mxu0 0
      %538 = vmatpush1.bf16.msra.mxu0 0
      %539 = vmatprep.subr.bf16.mxu0 0
      %540 = vmatpush1.bf16.msra.mxu0 0
      %541 = vmatprep.subr.bf16.mxu0 0
      %542 = vmatpush1.bf16.msra.mxu0 0
      %543 = vmatprep.subr.bf16.mxu0 0
      %544 = vmatpush1.bf16.msra.mxu0 0
      %545 = vmatprep.subr.bf16.mxu0 0
      %546 = vmatpush1.bf16.msra.mxu0 0
      %547 = vmatprep.subr.bf16.mxu0 0
      %548 = vmatpush1.bf16.msra.mxu0 0
      %549 = vmatprep.subr.bf16.mxu0 0
      %550 = vmatpush1.bf16.msra.mxu0 %v535
      %551 = vmatprep.subr.bf16.mxu0 0
      %552 = vmatpush1.bf16.msra.mxu0 %v481
      %553 = vmatprep.subr.bf16.mxu0 0
      %554 = vmatpush2.bf16.msra.mxu0 0
      %555 = vmatprep.subr.bf16.mxu0 0
      %556 = vmatpush2.bf16.msra.mxu0 0
      %557 = vmatprep.subr.bf16.mxu0 0
      %558 = vmatpush2.bf16.msra.mxu0 0
      %559 = vmatprep.subr.bf16.mxu0 0
      %560 = vmatpush2.bf16.msra.mxu0 0
      %561 = vmatprep.subr.bf16.mxu0 0
      %562 = vmatpush2.bf16.msra.mxu0 0
      %563 = vmatprep.subr.bf16.mxu0 0
      %564 = vmatpush2.bf16.msra.mxu0 0
      %565 = vmatprep.subr.bf16.mxu0 0
      %566 = vmatpush2.bf16.msra.mxu0 0
      %567 = vmatprep.subr.bf16.mxu0 0
      %568 = vmatpush2.bf16.msra.mxu0 0
      %569 = vmatprep.mubr.bf16.mxu0 0
      %570 = vmatmul.mubr.bf16.gmra.mxu0 %v486
      %v571 = vpop.f32.mrf.mxu0
      %v572 = vadd.f32 %v473, %v571
      %v573 = vpop.f32.mrf.mxu0
      %v574 = vpop.f32.mrf.mxu0
      %v575 = vadd.f32 %v473, %v574
      %v576 = vpop.f32.mrf.mxu0
      %577 = vmatprep.mubr.bf16.mxu0 0
      %578 = vmatmul.mubr.bf16.gmra.mxu0 %v489
      %v579 = vpop.f32.mrf.mxu0
      %v580 = vadd.f32 %v473, %v579
      %v581 = vpop.f32.mrf.mxu0
      %v582 = vpop.f32.mrf.mxu0
      %v583 = vadd.f32 %v473, %v582
      %v584 = vpop.f32.mrf.mxu0
      %585 = vmatprep.mubr.bf16.mxu0 0
      %586 = vmatmul.mubr.bf16.gmra.mxu0 %v492
      %v587 = vpop.f32.mrf.mxu0
      %v588 = vadd.f32 %v473, %v587
      %v589 = vpop.f32.mrf.mxu0
      %v590 = vpop.f32.mrf.mxu0
      %v591 = vadd.f32 %v473, %v590
      %v592 = vpop.f32.mrf.mxu0
      %593 = vmatprep.mubr.bf16.mxu0 0
      %594 = vmatmul.mubr.bf16.gmra.mxu0 %v495
      %v595 = vpop.f32.mrf.mxu0
      %v596 = vadd.f32 %v473, %v595
      %v597 = vpop.f32.mrf.mxu0
      %v598 = vpop.f32.mrf.mxu0
      %v599 = vadd.f32 %v473, %v598
      %v600 = vpop.f32.mrf.mxu0
      %601 = vmatprep.mubr.bf16.mxu0 0
      %602 = vmatmul.mubr.bf16.gmra.mxu0 %v498
      %v603 = vpop.f32.mrf.mxu0
      %v604 = vadd.f32 %v473, %v603
      %v605 = vpop.f32.mrf.mxu0
      %v606 = vpop.f32.mrf.mxu0
      %v607 = vadd.f32 %v473, %v606
      %v608 = vpop.f32.mrf.mxu0
      %609 = vmatprep.mubr.bf16.mxu0 0
      %610 = vmatmul.mubr.bf16.gmra.mxu0 %v501
      %v611 = vpop.f32.mrf.mxu0
      %v612 = vadd.f32 %v473, %v611
      %v613 = vpop.f32.mrf.mxu0
      %v614 = vpop.f32.mrf.mxu0
      %v615 = vadd.f32 %v473, %v614
      %v616 = vpop.f32.mrf.mxu0
      %617 = vmatprep.mubr.bf16.mxu0 0
      %618 = vmatmul.mubr.bf16.gmra.mxu0 %v504
      %v619 = vpop.f32.mrf.mxu0
      %v620 = vadd.f32 %v473, %v619
      %v621 = vpop.f32.mrf.mxu0
      %v622 = vpop.f32.mrf.mxu0
      %v623 = vadd.f32 %v473, %v622
      %v624 = vpop.f32.mrf.mxu0
      %625 = vmatprep.mubr.bf16.mxu0 0
      %626 = vmatmul.mubr.bf16.gmra.mxu0 %v507
      %v627 = vpop.f32.mrf.mxu0
      %v628 = vadd.f32 %v473, %v627
      %v629 = vpop.f32.mrf.mxu0
      %v630 = vpop.f32.mrf.mxu0
      %v631 = vadd.f32 %v473, %v630
      %v632 = vpop.f32.mrf.mxu0
      %633 = vmatprep.mubr.bf16.mxu0 0
      %634 = vmatmul.mubr.bf16.gmra.mxu0 %v510
      %v635 = vpop.f32.mrf.mxu0
      %v636 = vadd.f32 %v473, %v635
      %v637 = vpop.f32.mrf.mxu0
      %v638 = vpop.f32.mrf.mxu0
      %v639 = vadd.f32 %v473, %v638
      %v640 = vpop.f32.mrf.mxu0
      %641 = vmatprep.mubr.bf16.mxu0 0
      %642 = vmatmul.mubr.bf16.gmra.mxu0 %v513
      %v643 = vpop.f32.mrf.mxu0
      %v644 = vadd.f32 %v473, %v643
      %v645 = vpop.f32.mrf.mxu0
      %v646 = vpop.f32.mrf.mxu0
      %v647 = vadd.f32 %v473, %v646
      %v648 = vpop.f32.mrf.mxu0
      %649 = vmatprep.mubr.bf16.mxu0 0
      %650 = vmatmul.mubr.bf16.gmra.mxu0 %v516
      %v651 = vpop.f32.mrf.mxu0
      %v652 = vadd.f32 %v473, %v651
      %v653 = vpop.f32.mrf.mxu0
      %v654 = vpop.f32.mrf.mxu0
      %v655 = vadd.f32 %v473, %v654
      %v656 = vpop.f32.mrf.mxu0
      %657 = vmatprep.mubr.bf16.mxu0 0
      %658 = vmatmul.mubr.bf16.gmra.mxu0 %v519
      %v659 = vpop.f32.mrf.mxu0
      %v660 = vadd.f32 %v473, %v659
      %v661 = vpop.f32.mrf.mxu0
      %v662 = vpop.f32.mrf.mxu0
      %v663 = vadd.f32 %v473, %v662
      %v664 = vpop.f32.mrf.mxu0
      %665 = vmatprep.mubr.bf16.mxu0 0
      %666 = vmatmul.mubr.bf16.gmra.mxu0 %v522
      %v667 = vpop.f32.mrf.mxu0
      %v668 = vadd.f32 %v473, %v667
      %v669 = vpop.f32.mrf.mxu0
      %v670 = vpop.f32.mrf.mxu0
      %v671 = vadd.f32 %v473, %v670
      %v672 = vpop.f32.mrf.mxu0
      %673 = vmatprep.mubr.bf16.mxu0 0
      %674 = vmatmul.mubr.bf16.gmra.mxu0 %v525
      %v675 = vpop.f32.mrf.mxu0
      %v676 = vadd.f32 %v473, %v675
      %v677 = vpop.f32.mrf.mxu0
      %v678 = vpop.f32.mrf.mxu0
      %v679 = vadd.f32 %v473, %v678
      %v680 = vpop.f32.mrf.mxu0
      %681 = vmatprep.mubr.bf16.mxu0 0
      %682 = vmatmul.mubr.bf16.gmra.mxu0 %v528
      %v683 = vpop.f32.mrf.mxu0
      %v684 = vadd.f32 %v473, %v683
      %v685 = vpop.f32.mrf.mxu0
      %v686 = vpop.f32.mrf.mxu0
      %v687 = vadd.f32 %v473, %v686
      %v688 = vpop.f32.mrf.mxu0
      %689 = vmatprep.mubr.bf16.mxu0 0
      %690 = vmatmul.mubr.bf16.gmra.mxu0 %v531
      %v691 = vpop.f32.mrf.mxu0
      %v692 = vadd.f32 %v473, %v691
      %v693 = vpop.f32.mrf.mxu0
      %v694 = vpop.f32.mrf.mxu0
      %v695 = vadd.f32 %v473, %v694
      %v696 = vpop.f32.mrf.mxu0
      %697 = vdwg.mxu0
      %v698 = vmax.f32 %v572, 0.0
      %v699 = vmax.f32 %v575, 0.0
      %v700 = vmax.f32 %v580, 0.0
      %v701 = vmax.f32 %v583, 0.0
      %v702 = vmax.f32 %v588, 0.0
      %v703 = vmax.f32 %v591, 0.0
      %v704 = vmax.f32 %v596, 0.0
      %v705 = vmax.f32 %v599, 0.0
      %v706 = vmax.f32 %v604, 0.0
      %v707 = vmax.f32 %v607, 0.0
      %v708 = vmax.f32 %v612, 0.0
      %v709 = vmax.f32 %v615, 0.0
      %v710 = vmax.f32 %v620, 0.0
      %v711 = vmax.f32 %v623, 0.0
      %v712 = vmax.f32 %v628, 0.0
      %v713 = vmax.f32 %v631, 0.0
      %v714 = vmax.f32 %v636, 0.0
      %v715 = vmax.f32 %v639, 0.0
      %v716 = vmax.f32 %v644, 0.0
      %v717 = vmax.f32 %v647, 0.0
      %v718 = vmax.f32 %v652, 0.0
      %v719 = vmax.f32 %v655, 0.0
      %v720 = vmax.f32 %v660, 0.0
      %v721 = vmax.f32 %v663, 0.0
      %v722 = vmax.f32 %v668, 0.0
      %v723 = vmax.f32 %v671, 0.0
      %v724 = vmax.f32 %v676, 0.0
      %v725 = vmax.f32 %v679, 0.0
      %v726 = vmax.f32 %v684, 0.0
      %v727 = vmax.f32 %v687, 0.0
      %v728 = vmax.f32 %v692, 0.0
      %v729 = vmax.f32 %v695, 0.0
      %v730 = vpack.c.bf16 %v699, %v698
      %v731 = vpack.c.bf16 %v701, %v700
      %v732 = vpack.c.bf16 %v703, %v702
      %v733 = vpack.c.bf16 %v705, %v704
      %v734 = vpack.c.bf16 %v707, %v706
      %v735 = vpack.c.bf16 %v709, %v708
      %v736 = vpack.c.bf16 %v711, %v710
      %v737 = vpack.c.bf16 %v713, %v712
      %v738 = vpack.c.bf16 %v715, %v714
      %v739 = vpack.c.bf16 %v717, %v716
      %v740 = vpack.c.bf16 %v719, %v718
      %v741 = vpack.c.bf16 %v721, %v720
      %v742 = vpack.c.bf16 %v723, %v722
      %v743 = vpack.c.bf16 %v725, %v724
      %v744 = vpack.c.bf16 %v727, %v726
      %v745 = vpack.c.bf16 %v729, %v728
      %v747 = vunpack.c.l.b16 %v730
      %v748 = vunpack.c.h.b16 %v730
      %v749 = vpack.c.b16 %v747, %v747
      %v750 = vpack.c.b16 %v748, %v748
      %vm751 = vsmask.f32 256
      %vm752 = vsmask.f32 4368
      %vm753 = vmor %vm751, %vm752
      %v755 = vshrl.u32 %v749, 16
      %v757 = vrot.slane %v755, 7
      %v758 = vshll.u32 %v749, 16
      %v760 = vor.u32 %v757, %v758
      %v761 = vrot.slane %v757, 4
      %v763 = vshrl.u32 %v750, 16
      %v765 = vrot.slane %v763, 7
      %v766 = vshll.u32 %v750, 16
      %v768 = vor.u32 %v765, %v766
      %v769 = vsel %vm753, %v761, %v768
      %v770 = vrot.slane %v765, 4
      %s774 = scalar_lea.vmem [#allocation2], 12
      %vm775 = vcmask 1043456
      %vm776 = vsmask.f32 7938
      %vm777 = vmand %vm775, %vm776
      %v778 = vld [vmem:[%s774] sm:$0xf]
      %v779 = vsel %vm777, %v760, %v778
      %780 = vst [vmem:[%s774] sm:$0xf] %v779
      %781 = vst [vmem:[%s774 + $0x4] sm:$0xf] %v769
      %vm782 = vcmask 1040384
      %vm783 = vmand %vm782, %vm751
      %v784 = vld [vmem:[%s774 + $0x8] sm:$0x1]
      %v785 = vsel %vm783, %v770, %v784
      %786 = vst [vmem:[%s774 + $0x8] sm:$0x1] %v785
      %v788 = vunpack.c.l.b16 %v731
      %v789 = vunpack.c.h.b16 %v731
      %v790 = vpack.c.b16 %v788, %v788
      %v791 = vpack.c.b16 %v789, %v789
      %v793 = vshrl.u32 %v790, 16
      %v795 = vrot.slane %v793, 7
      %v796 = vshll.u32 %v790, 16
      %v798 = vor.u32 %v795, %v796
      %v799 = vrot.slane %v795, 4
      %v801 = vshrl.u32 %v791, 16
      %v803 = vrot.slane %v801, 7
      %v804 = vshll.u32 %v791, 16
      %v806 = vor.u32 %v803, %v804
      %v807 = vsel %vm753, %v799, %v806
      %v808 = vrot.slane %v803, 4
      %s812 = scalar_lea.vmem [#allocation2], 24
      %v813 = vld [vmem:[%s812] sm:$0xf]
      %v814 = vsel %vm777, %v798, %v813
      %815 = vst [vmem:[%s812] sm:$0xf] %v814
      %816 = vst [vmem:[%s812 + $0x4] sm:$0xf] %v807
      %v817 = vld [vmem:[%s812 + $0x8] sm:$0x1]
      %v818 = vsel %vm783, %v808, %v817
      %819 = vst [vmem:[%s812 + $0x8] sm:$0x1] %v818
      %v821 = vunpack.c.l.b16 %v732
      %v822 = vunpack.c.h.b16 %v732
      %v823 = vpack.c.b16 %v821, %v821
      %v824 = vpack.c.b16 %v822, %v822
      %v826 = vshrl.u32 %v823, 16
      %v828 = vrot.slane %v826, 7
      %v829 = vshll.u32 %v823, 16
      %v831 = vor.u32 %v828, %v829
      %v832 = vrot.slane %v828, 4
      %v834 = vshrl.u32 %v824, 16
      %v836 = vrot.slane %v834, 7
      %v837 = vshll.u32 %v824, 16
      %v839 = vor.u32 %v836, %v837
      %v840 = vsel %vm753, %v832, %v839
      %v841 = vrot.slane %v836, 4
      %s845 = scalar_lea.vmem [#allocation2], 36
      %v846 = vld [vmem:[%s845] sm:$0xf]
      %v847 = vsel %vm777, %v831, %v846
      %848 = vst [vmem:[%s845] sm:$0xf] %v847
      %849 = vst [vmem:[%s845 + $0x4] sm:$0xf] %v840
      %v850 = vld [vmem:[%s845 + $0x8] sm:$0x1]
      %v851 = vsel %vm783, %v841, %v850
      %852 = vst [vmem:[%s845 + $0x8] sm:$0x1] %v851
      %v854 = vunpack.c.l.b16 %v733
      %v855 = vunpack.c.h.b16 %v733
      %v856 = vpack.c.b16 %v854, %v854
      %v857 = vpack.c.b16 %v855, %v855
      %v859 = vshrl.u32 %v856, 16
      %v861 = vrot.slane %v859, 7
      %v862 = vshll.u32 %v856, 16
      %v864 = vor.u32 %v861, %v862
      %v865 = vrot.slane %v861, 4
      %v867 = vshrl.u32 %v857, 16
      %v869 = vrot.slane %v867, 7
      %v870 = vshll.u32 %v857, 16
      %v872 = vor.u32 %v869, %v870
      %v873 = vsel %vm753, %v865, %v872
      %v874 = vrot.slane %v869, 4
      %s878 = scalar_lea.vmem [#allocation2], 48
      %v879 = vld [vmem:[%s878] sm:$0xf]
      %v880 = vsel %vm777, %v864, %v879
      %881 = vst [vmem:[%s878] sm:$0xf] %v880
      %882 = vst [vmem:[%s878 + $0x4] sm:$0xf] %v873
      %v883 = vld [vmem:[%s878 + $0x8] sm:$0x1]
      %v884 = vsel %vm783, %v874, %v883
      %885 = vst [vmem:[%s878 + $0x8] sm:$0x1] %v884
      %v887 = vunpack.c.l.b16 %v734
      %v888 = vunpack.c.h.b16 %v734
      %v889 = vpack.c.b16 %v887, %v887
      %v890 = vpack.c.b16 %v888, %v888
      %v892 = vshrl.u32 %v889, 16
      %v894 = vrot.slane %v892, 7
      %v895 = vshll.u32 %v889, 16
      %v897 = vor.u32 %v894, %v895
      %v898 = vrot.slane %v894, 4
      %v900 = vshrl.u32 %v890, 16
      %v902 = vrot.slane %v900, 7
      %v903 = vshll.u32 %v890, 16
      %v905 = vor.u32 %v902, %v903
      %v906 = vsel %vm753, %v898, %v905
      %v907 = vrot.slane %v902, 4
      %s911 = scalar_lea.vmem [#allocation2], 60
      %v912 = vld [vmem:[%s911] sm:$0xf]
      %v913 = vsel %vm777, %v897, %v912
      %914 = vst [vmem:[%s911] sm:$0xf] %v913
      %915 = vst [vmem:[%s911 + $0x4] sm:$0xf] %v906
      %v916 = vld [vmem:[%s911 + $0x8] sm:$0x1]
      %v917 = vsel %vm783, %v907, %v916
      %918 = vst [vmem:[%s911 + $0x8] sm:$0x1] %v917
      %v920 = vunpack.c.l.b16 %v735
      %v921 = vunpack.c.h.b16 %v735
      %v922 = vpack.c.b16 %v920, %v920
      %v923 = vpack.c.b16 %v921, %v921
      %v925 = vshrl.u32 %v922, 16
      %v927 = vrot.slane %v925, 7
      %v928 = vshll.u32 %v922, 16
      %v930 = vor.u32 %v927, %v928
      %v931 = vrot.slane %v927, 4
      %v933 = vshrl.u32 %v923, 16
      %v935 = vrot.slane %v933, 7
      %v936 = vshll.u32 %v923, 16
      %v938 = vor.u32 %v935, %v936
      %v939 = vsel %vm753, %v931, %v938
      %v940 = vrot.slane %v935, 4
      %s944 = scalar_lea.vmem [#allocation2], 72
      %v945 = vld [vmem:[%s944] sm:$0xf]
      %v946 = vsel %vm777, %v930, %v945
      %947 = vst [vmem:[%s944] sm:$0xf] %v946
      %948 = vst [vmem:[%s944 + $0x4] sm:$0xf] %v939
      %v949 = vld [vmem:[%s944 + $0x8] sm:$0x1]
      %v950 = vsel %vm783, %v940, %v949
      %951 = vst [vmem:[%s944 + $0x8] sm:$0x1] %v950
      %v953 = vunpack.c.l.b16 %v736
      %v954 = vunpack.c.h.b16 %v736
      %v955 = vpack.c.b16 %v953, %v953
      %v956 = vpack.c.b16 %v954, %v954
      %v958 = vshrl.u32 %v955, 16
      %v960 = vrot.slane %v958, 7
      %v961 = vshll.u32 %v955, 16
      %v963 = vor.u32 %v960, %v961
      %v964 = vrot.slane %v960, 4
      %v966 = vshrl.u32 %v956, 16
      %v968 = vrot.slane %v966, 7
      %v969 = vshll.u32 %v956, 16
      %v971 = vor.u32 %v968, %v969
      %v972 = vsel %vm753, %v964, %v971
      %v973 = vrot.slane %v968, 4
      %s977 = scalar_lea.vmem [#allocation2], 84
      %v978 = vld [vmem:[%s977] sm:$0xf]
      %v979 = vsel %vm777, %v963, %v978
      %980 = vst [vmem:[%s977] sm:$0xf] %v979
      %981 = vst [vmem:[%s977 + $0x4] sm:$0xf] %v972
      %v982 = vld [vmem:[%s977 + $0x8] sm:$0x1]
      %v983 = vsel %vm783, %v973, %v982
      %984 = vst [vmem:[%s977 + $0x8] sm:$0x1] %v983
      %v986 = vunpack.c.l.b16 %v737
      %v987 = vunpack.c.h.b16 %v737
      %v988 = vpack.c.b16 %v986, %v986
      %v989 = vpack.c.b16 %v987, %v987
      %v991 = vshrl.u32 %v988, 16
      %v993 = vrot.slane %v991, 7
      %v994 = vshll.u32 %v988, 16
      %v996 = vor.u32 %v993, %v994
      %v997 = vrot.slane %v993, 4
      %v999 = vshrl.u32 %v989, 16
      %v1001 = vrot.slane %v999, 7
      %v1002 = vshll.u32 %v989, 16
      %v1004 = vor.u32 %v1001, %v1002
      %v1005 = vsel %vm753, %v997, %v1004
      %v1006 = vrot.slane %v1001, 4
      %s1010 = scalar_lea.vmem [#allocation2], 96
      %v1011 = vld [vmem:[%s1010] sm:$0xf]
      %v1012 = vsel %vm777, %v996, %v1011
      %1013 = vst [vmem:[%s1010] sm:$0xf] %v1012
      %1014 = vst [vmem:[%s1010 + $0x4] sm:$0xf] %v1005
      %v1015 = vld [vmem:[%s1010 + $0x8] sm:$0x1]
      %v1016 = vsel %vm783, %v1006, %v1015
      %1017 = vst [vmem:[%s1010 + $0x8] sm:$0x1] %v1016
      %v1019 = vunpack.c.l.b16 %v738
      %v1020 = vunpack.c.h.b16 %v738
      %v1021 = vpack.c.b16 %v1019, %v1019
      %v1022 = vpack.c.b16 %v1020, %v1020
      %v1024 = vshrl.u32 %v1021, 16
      %v1026 = vrot.slane %v1024, 7
      %v1027 = vshll.u32 %v1021, 16
      %v1029 = vor.u32 %v1026, %v1027
      %v1030 = vrot.slane %v1026, 4
      %v1032 = vshrl.u32 %v1022, 16
      %v1034 = vrot.slane %v1032, 7
      %v1035 = vshll.u32 %v1022, 16
      %v1037 = vor.u32 %v1034, %v1035
      %v1038 = vsel %vm753, %v1030, %v1037
      %v1039 = vrot.slane %v1034, 4
      %s1043 = scalar_lea.vmem [#allocation2], 108
      %v1044 = vld [vmem:[%s1043] sm:$0xf]
      %v1045 = vsel %vm777, %v1029, %v1044
      %1046 = vst [vmem:[%s1043] sm:$0xf] %v1045
      %1047 = vst [vmem:[%s1043 + $0x4] sm:$0xf] %v1038
      %v1048 = vld [vmem:[%s1043 + $0x8] sm:$0x1]
      %v1049 = vsel %vm783, %v1039, %v1048
      %1050 = vst [vmem:[%s1043 + $0x8] sm:$0x1] %v1049
      %v1052 = vunpack.c.l.b16 %v739
      %v1053 = vunpack.c.h.b16 %v739
      %v1054 = vpack.c.b16 %v1052, %v1052
      %v1055 = vpack.c.b16 %v1053, %v1053
      %v1057 = vshrl.u32 %v1054, 16
      %v1059 = vrot.slane %v1057, 7
      %v1060 = vshll.u32 %v1054, 16
      %v1062 = vor.u32 %v1059, %v1060
      %v1063 = vrot.slane %v1059, 4
      %v1065 = vshrl.u32 %v1055, 16
      %v1067 = vrot.slane %v1065, 7
      %v1068 = vshll.u32 %v1055, 16
      %v1070 = vor.u32 %v1067, %v1068
      %v1071 = vsel %vm753, %v1063, %v1070
      %v1072 = vrot.slane %v1067, 4
      %s1076 = scalar_lea.vmem [#allocation2], 120
      %v1077 = vld [vmem:[%s1076] sm:$0xf]
      %v1078 = vsel %vm777, %v1062, %v1077
      %1079 = vst [vmem:[%s1076] sm:$0xf] %v1078
      %1080 = vst [vmem:[%s1076 + $0x4] sm:$0xf] %v1071
      %v1081 = vld [vmem:[%s1076 + $0x8] sm:$0x1]
      %v1082 = vsel %vm783, %v1072, %v1081
      %1083 = vst [vmem:[%s1076 + $0x8] sm:$0x1] %v1082
      %v1085 = vunpack.c.l.b16 %v740
      %v1086 = vunpack.c.h.b16 %v740
      %v1087 = vpack.c.b16 %v1085, %v1085
      %v1088 = vpack.c.b16 %v1086, %v1086
      %v1090 = vshrl.u32 %v1087, 16
      %v1092 = vrot.slane %v1090, 7
      %v1093 = vshll.u32 %v1087, 16
      %v1095 = vor.u32 %v1092, %v1093
      %v1096 = vrot.slane %v1092, 4
      %v1098 = vshrl.u32 %v1088, 16
      %v1100 = vrot.slane %v1098, 7
      %v1101 = vshll.u32 %v1088, 16
      %v1103 = vor.u32 %v1100, %v1101
      %v1104 = vsel %vm753, %v1096, %v1103
      %v1105 = vrot.slane %v1100, 4
      %s1109 = scalar_lea.vmem [#allocation2], 132
      %v1110 = vld [vmem:[%s1109] sm:$0xf]
      %v1111 = vsel %vm777, %v1095, %v1110
      %1112 = vst [vmem:[%s1109] sm:$0xf] %v1111
      %1113 = vst [vmem:[%s1109 + $0x4] sm:$0xf] %v1104
      %v1114 = vld [vmem:[%s1109 + $0x8] sm:$0x1]
      %v1115 = vsel %vm783, %v1105, %v1114
      %1116 = vst [vmem:[%s1109 + $0x8] sm:$0x1] %v1115
      %v1118 = vunpack.c.l.b16 %v741
      %v1119 = vunpack.c.h.b16 %v741
      %v1120 = vpack.c.b16 %v1118, %v1118
      %v1121 = vpack.c.b16 %v1119, %v1119
      %v1123 = vshrl.u32 %v1120, 16
      %v1125 = vrot.slane %v1123, 7
      %v1126 = vshll.u32 %v1120, 16
      %v1128 = vor.u32 %v1125, %v1126
      %v1129 = vrot.slane %v1125, 4
      %v1131 = vshrl.u32 %v1121, 16
      %v1133 = vrot.slane %v1131, 7
      %v1134 = vshll.u32 %v1121, 16
      %v1136 = vor.u32 %v1133, %v1134
      %v1137 = vsel %vm753, %v1129, %v1136
      %v1138 = vrot.slane %v1133, 4
      %s1142 = scalar_lea.vmem [#allocation2], 144
      %v1143 = vld [vmem:[%s1142] sm:$0xf]
      %v1144 = vsel %vm777, %v1128, %v1143
      %1145 = vst [vmem:[%s1142] sm:$0xf] %v1144
      %1146 = vst [vmem:[%s1142 + $0x4] sm:$0xf] %v1137
      %v1147 = vld [vmem:[%s1142 + $0x8] sm:$0x1]
      %v1148 = vsel %vm783, %v1138, %v1147
      %1149 = vst [vmem:[%s1142 + $0x8] sm:$0x1] %v1148
      %v1151 = vunpack.c.l.b16 %v742
      %v1152 = vunpack.c.h.b16 %v742
      %v1153 = vpack.c.b16 %v1151, %v1151
      %v1154 = vpack.c.b16 %v1152, %v1152
      %v1156 = vshrl.u32 %v1153, 16
      %v1158 = vrot.slane %v1156, 7
      %v1159 = vshll.u32 %v1153, 16
      %v1161 = vor.u32 %v1158, %v1159
      %v1162 = vrot.slane %v1158, 4
      %v1164 = vshrl.u32 %v1154, 16
      %v1166 = vrot.slane %v1164, 7
      %v1167 = vshll.u32 %v1154, 16
      %v1169 = vor.u32 %v1166, %v1167
      %v1170 = vsel %vm753, %v1162, %v1169
      %v1171 = vrot.slane %v1166, 4
      %s1175 = scalar_lea.vmem [#allocation2], 156
      %v1176 = vld [vmem:[%s1175] sm:$0xf]
      %v1177 = vsel %vm777, %v1161, %v1176
      %1178 = vst [vmem:[%s1175] sm:$0xf] %v1177
      %1179 = vst [vmem:[%s1175 + $0x4] sm:$0xf] %v1170
      %v1180 = vld [vmem:[%s1175 + $0x8] sm:$0x1]
      %v1181 = vsel %vm783, %v1171, %v1180
      %1182 = vst [vmem:[%s1175 + $0x8] sm:$0x1] %v1181
      %v1184 = vunpack.c.l.b16 %v743
      %v1185 = vunpack.c.h.b16 %v743
      %v1186 = vpack.c.b16 %v1184, %v1184
      %v1187 = vpack.c.b16 %v1185, %v1185
      %v1189 = vshrl.u32 %v1186, 16
      %v1191 = vrot.slane %v1189, 7
      %v1192 = vshll.u32 %v1186, 16
      %v1194 = vor.u32 %v1191, %v1192
      %v1195 = vrot.slane %v1191, 4
      %v1197 = vshrl.u32 %v1187, 16
      %v1199 = vrot.slane %v1197, 7
      %v1200 = vshll.u32 %v1187, 16
      %v1202 = vor.u32 %v1199, %v1200
      %v1203 = vsel %vm753, %v1195, %v1202
      %v1204 = vrot.slane %v1199, 4
      %s1208 = scalar_lea.vmem [#allocation2], 168
      %v1209 = vld [vmem:[%s1208] sm:$0xf]
      %v1210 = vsel %vm777, %v1194, %v1209
      %1211 = vst [vmem:[%s1208] sm:$0xf] %v1210
      %1212 = vst [vmem:[%s1208 + $0x4] sm:$0xf] %v1203
      %v1213 = vld [vmem:[%s1208 + $0x8] sm:$0x1]
      %v1214 = vsel %vm783, %v1204, %v1213
      %1215 = vst [vmem:[%s1208 + $0x8] sm:$0x1] %v1214
      %v1217 = vunpack.c.l.b16 %v744
      %v1218 = vunpack.c.h.b16 %v744
      %v1219 = vpack.c.b16 %v1217, %v1217
      %v1220 = vpack.c.b16 %v1218, %v1218
      %v1222 = vshrl.u32 %v1219, 16
      %v1224 = vrot.slane %v1222, 7
      %v1225 = vshll.u32 %v1219, 16
      %v1227 = vor.u32 %v1224, %v1225
      %v1228 = vrot.slane %v1224, 4
      %v1230 = vshrl.u32 %v1220, 16
      %v1232 = vrot.slane %v1230, 7
      %v1233 = vshll.u32 %v1220, 16
      %v1235 = vor.u32 %v1232, %v1233
      %v1236 = vsel %vm753, %v1228, %v1235
      %v1237 = vrot.slane %v1232, 4
      %s1241 = scalar_lea.vmem [#allocation2], 180
      %v1242 = vld [vmem:[%s1241] sm:$0xf]
      %v1243 = vsel %vm777, %v1227, %v1242
      %1244 = vst [vmem:[%s1241] sm:$0xf] %v1243
      %1245 = vst [vmem:[%s1241 + $0x4] sm:$0xf] %v1236
      %v1246 = vld [vmem:[%s1241 + $0x8] sm:$0x1]
      %v1247 = vsel %vm783, %v1237, %v1246
      %1248 = vst [vmem:[%s1241 + $0x8] sm:$0x1] %v1247
      %v1250 = vunpack.c.l.b16 %v745
      %v1251 = vunpack.c.h.b16 %v745
      %v1252 = vpack.c.b16 %v1250, %v1250
      %v1253 = vpack.c.b16 %v1251, %v1251
      %v1255 = vshrl.u32 %v1252, 16
      %v1257 = vrot.slane %v1255, 7
      %v1258 = vshll.u32 %v1252, 16
      %v1260 = vor.u32 %v1257, %v1258
      %v1261 = vrot.slane %v1257, 4
      %v1263 = vshrl.u32 %v1253, 16
      %v1265 = vrot.slane %v1263, 7
      %v1266 = vshll.u32 %v1253, 16
      %v1268 = vor.u32 %v1265, %v1266
      %v1269 = vsel %vm753, %v1261, %v1268
      %v1270 = vrot.slane %v1265, 4
      %s1274 = scalar_lea.vmem [#allocation2], 192
      %v1275 = vld [vmem:[%s1274] sm:$0xf]
      %v1276 = vsel %vm777, %v1260, %v1275
      %1277 = vst [vmem:[%s1274] sm:$0xf] %v1276
      %1278 = vst [vmem:[%s1274 + $0x4] sm:$0xf] %v1269
      %v1279 = vld [vmem:[%s1274 + $0x8] sm:$0x1]
      %v1280 = vsel %vm783, %v1270, %v1279
      %1281 = vst [vmem:[%s1274 + $0x8] sm:$0x1] %v1280
      %v1282 = vld [vmem:[#allocation2] sm:$0xf]
      %v1283 = vld [vmem:[#allocation2 + $0x4] sm:$0xf]
      %v1284 = vld [vmem:[#allocation2 + $0xc] sm:$0xf]
      %v1285 = vld [vmem:[#allocation2 + $0x10] sm:$0xf]
      %v1286 = vld [vmem:[#allocation2 + $0x18] sm:$0xf]
      %v1287 = vld [vmem:[#allocation2 + $0x1c] sm:$0xf]
      %v1288 = vld [vmem:[#allocation2 + $0x24] sm:$0xf]
      %v1289 = vld [vmem:[#allocation2 + $0x28] sm:$0xf]
      %v1290 = vld [vmem:[#allocation2 + $0x30] sm:$0xf]
      %v1291 = vld [vmem:[#allocation2 + $0x34] sm:$0xf]
      %v1292 = vld [vmem:[#allocation2 + $0x3c] sm:$0xf]
      %v1293 = vld [vmem:[#allocation2 + $0x40] sm:$0xf]
      %v1294 = vld [vmem:[#allocation2 + $0x48] sm:$0xf]
      %v1295 = vld [vmem:[#allocation2 + $0x4c] sm:$0xf]
      %v1296 = vld [vmem:[#allocation2 + $0x54] sm:$0xf]
      %v1297 = vld [vmem:[#allocation2 + $0x58] sm:$0xf]
      %v1298 = vld [vmem:[#allocation2 + $0x60] sm:$0xf]
      %v1299 = vld [vmem:[#allocation2 + $0x64] sm:$0xf]
      %v1300 = vld [vmem:[#allocation2 + $0x6c] sm:$0xf]
      %v1301 = vld [vmem:[#allocation2 + $0x70] sm:$0xf]
      %v1302 = vld [vmem:[#allocation2 + $0x78] sm:$0xf]
      %v1303 = vld [vmem:[#allocation2 + $0x7c] sm:$0xf]
      %v1304 = vld [vmem:[#allocation2 + $0x84] sm:$0xf]
      %v1305 = vld [vmem:[#allocation2 + $0x88] sm:$0xf]
      %v1306 = vld [vmem:[#allocation2 + $0x90] sm:$0xf]
      %v1307 = vld [vmem:[#allocation2 + $0x94] sm:$0xf]
      %v1308 = vld [vmem:[#allocation2 + $0x9c] sm:$0xf]
      %v1309 = vld [vmem:[#allocation2 + $0xa0] sm:$0xf]
      %v1310 = vld [vmem:[#allocation2 + $0xa8] sm:$0xf]
      %v1311 = vld [vmem:[#allocation2 + $0xac] sm:$0xf]
      %v1312 = vld [vmem:[#allocation2 + $0xb4] sm:$0xf]
      %v1313 = vld [vmem:[#allocation2 + $0xb8] sm:$0xf]
      %1314 = vst [vmem:[#allocation3] sm:$0xf] %v1282
      %1315 = vst [vmem:[#allocation3 + $0x24] sm:$0xf] %v1283
      %1316 = vst [vmem:[#allocation3 + $0x48] sm:$0xf] %v1284
      %1317 = vst [vmem:[#allocation3 + $0x6c] sm:$0xf] %v1285
      %1318 = vst [vmem:[#allocation3 + $0x90] sm:$0xf] %v1286
      %1319 = vst [vmem:[#allocation3 + $0xb4] sm:$0xf] %v1287
      %1320 = vst [vmem:[#allocation3 + $0xd8] sm:$0xf] %v1288
      %1321 = vst [vmem:[#allocation3 + $0xfc] sm:$0xf] %v1289
      %1322 = vst [vmem:[#allocation3 + $0x120] sm:$0xf] %v1290
      %1323 = vst [vmem:[#allocation3 + $0x144] sm:$0xf] %v1291
      %1324 = vst [vmem:[#allocation3 + $0x168] sm:$0xf] %v1292
      %1325 = vst [vmem:[#allocation3 + $0x18c] sm:$0xf] %v1293
      %1326 = vst [vmem:[#allocation3 + $0x1b0] sm:$0xf] %v1294
      %1327 = vst [vmem:[#allocation3 + $0x1d4] sm:$0xf] %v1295
      %1328 = vst [vmem:[#allocation3 + $0x1f8] sm:$0xf] %v1296
      %1329 = vst [vmem:[#allocation3 + $0x21c] sm:$0xf] %v1297
      %1330 = vst [vmem:[#allocation3 + $0x240] sm:$0xf] %v1298
      %1331 = vst [vmem:[#allocation3 + $0x264] sm:$0xf] %v1299
      %1332 = vst [vmem:[#allocation3 + $0x288] sm:$0xf] %v1300
      %1333 = vst [vmem:[#allocation3 + $0x2ac] sm:$0xf] %v1301
      %1334 = vst [vmem:[#allocation3 + $0x2d0] sm:$0xf] %v1302
      %1335 = vst [vmem:[#allocation3 + $0x2f4] sm:$0xf] %v1303
      %1336 = vst [vmem:[#allocation3 + $0x318] sm:$0xf] %v1304
      %1337 = vst [vmem:[#allocation3 + $0x33c] sm:$0xf] %v1305
      %1338 = vst [vmem:[#allocation3 + $0x360] sm:$0xf] %v1306
      %1339 = vst [vmem:[#allocation3 + $0x384] sm:$0xf] %v1307
      %1340 = vst [vmem:[#allocation3 + $0x3a8] sm:$0xf] %v1308
      %1341 = vst [vmem:[#allocation3 + $0x3cc] sm:$0xf] %v1309
      %1342 = vst [vmem:[#allocation3 + $0x3f0] sm:$0xf] %v1310
      %1343 = vst [vmem:[#allocation3 + $0x414] sm:$0xf] %v1311
      %1344 = vst [vmem:[#allocation3 + $0x438] sm:$0xf] %v1312
      %1345 = vst [vmem:[#allocation3 + $0x45c] sm:$0xf] %v1313
      %v1346 = vld [vmem:[#allocation2] sm:$0xf]
      %v1347 = vld [vmem:[#allocation2 + $0x4] sm:$0xf]
      %v1348 = vld [vmem:[#allocation2 + $0x8] sm:$0x1]
      %v1349 = vld [vmem:[#allocation2 + $0xc] sm:$0xf]
      %v1350 = vld [vmem:[#allocation2 + $0x10] sm:$0xf]
      %v1351 = vld [vmem:[#allocation2 + $0x14] sm:$0x1]
      %v1352 = vld [vmem:[#allocation2 + $0x18] sm:$0xf]
      %v1353 = vld [vmem:[#allocation2 + $0x1c] sm:$0xf]
      %v1354 = vld [vmem:[#allocation2 + $0x20] sm:$0x1]
      %v1355 = vld [vmem:[#allocation2 + $0x24] sm:$0xf]
      %v1356 = vld [vmem:[#allocation2 + $0x28] sm:$0xf]
      %v1357 = vld [vmem:[#allocation2 + $0x2c] sm:$0x1]
      %v1358 = vld [vmem:[#allocation2 + $0x30] sm:$0xf]
      %v1359 = vld [vmem:[#allocation2 + $0x34] sm:$0xf]
      %v1360 = vld [vmem:[#allocation2 + $0x38] sm:$0x1]
      %v1361 = vld [vmem:[#allocation2 + $0x3c] sm:$0xf]
      %v1362 = vld [vmem:[#allocation2 + $0x40] sm:$0xf]
      %v1363 = vld [vmem:[#allocation2 + $0x44] sm:$0x1]
      %v1364 = vld [vmem:[#allocation2 + $0x48] sm:$0xf]
      %v1365 = vld [vmem:[#allocation2 + $0x4c] sm:$0xf]
      %v1366 = vld [vmem:[#allocation2 + $0x50] sm:$0x1]
      %v1367 = vld [vmem:[#allocation2 + $0x54] sm:$0xf]
      %v1368 = vld [vmem:[#allocation2 + $0x58] sm:$0xf]
      %v1369 = vld [vmem:[#allocation2 + $0x5c] sm:$0x1]
      %v1370 = vld [vmem:[#allocation2 + $0x60] sm:$0xf]
      %v1371 = vld [vmem:[#allocation2 + $0x64] sm:$0xf]
      %v1372 = vld [vmem:[#allocation2 + $0x68] sm:$0x1]
      %v1373 = vld [vmem:[#allocation2 + $0x6c] sm:$0xf]
      %v1374 = vld [vmem:[#allocation2 + $0x70] sm:$0xf]
      %v1375 = vld [vmem:[#allocation2 + $0x74] sm:$0x1]
      %v1376 = vld [vmem:[#allocation2 + $0x78] sm:$0xf]
      %v1377 = vld [vmem:[#allocation2 + $0x7c] sm:$0xf]
      %v1378 = vld [vmem:[#allocation2 + $0x80] sm:$0x1]
      %v1379 = vld [vmem:[#allocation2 + $0x84] sm:$0xf]
      %v1380 = vld [vmem:[#allocation2 + $0x88] sm:$0xf]
      %v1381 = vld [vmem:[#allocation2 + $0x8c] sm:$0x1]
      %v1382 = vld [vmem:[#allocation2 + $0x90] sm:$0xf]
      %v1383 = vld [vmem:[#allocation2 + $0x94] sm:$0xf]
      %v1384 = vld [vmem:[#allocation2 + $0x98] sm:$0x1]
      %v1385 = vld [vmem:[#allocation2 + $0x9c] sm:$0xf]
      %v1386 = vld [vmem:[#allocation2 + $0xa0] sm:$0xf]
      %v1387 = vld [vmem:[#allocation2 + $0xa4] sm:$0x1]
      %v1388 = vld [vmem:[#allocation2 + $0xa8] sm:$0xf]
      %v1389 = vld [vmem:[#allocation2 + $0xac] sm:$0xf]
      %v1390 = vld [vmem:[#allocation2 + $0xb0] sm:$0x1]
      %v1391 = vld [vmem:[#allocation2 + $0xb4] sm:$0xf]
      %v1392 = vld [vmem:[#allocation2 + $0xb8] sm:$0xf]
      %v1393 = vld [vmem:[#allocation2 + $0xbc] sm:$0x1]
      %vm1394 = vsmask.f32 3328
      %vm1395 = vsmask.f32 7440
      %vm1396 = vmor %vm1394, %vm1395
      %v1398 = vshrl.u32 %v1346, 16
      %v1400 = vrot.slane %v1398, 4
      %v1401 = vshll.u32 %v1346, 16
      %v1403 = vrot.slane %v1401, 5
      %v1404 = vor.u32 %v1400, %v1403
      %v1405 = vrot.slane %v1404, 4
      %v1407 = vshll.u32 %v1347, 16
      %v1409 = vrot.slane %v1407, 5
      %v1410 = vsel %vm1396, %v1405, %v1409
      %v1411 = vshrl.u32 %v1347, 16
      %v1413 = vrot.slane %v1411, 4
      %v1414 = vor.u32 %v1413, %v1409
      %v1415 = vrot.slane %v1414, 4
      %v1417 = vshll.u32 %v1348, 16
      %v1419 = vrot.slane %v1417, 5
      %v1420 = vsel %vm1396, %v1415, %v1419
      %v1422 = vshrl.u32 %v1349, 16
      %v1424 = vrot.slane %v1422, 4
      %v1425 = vshll.u32 %v1349, 16
      %v1427 = vrot.slane %v1425, 5
      %v1428 = vor.u32 %v1424, %v1427
      %v1429 = vrot.slane %v1428, 4
      %v1431 = vshll.u32 %v1350, 16
      %v1433 = vrot.slane %v1431, 5
      %v1434 = vsel %vm1396, %v1429, %v1433
      %v1435 = vshrl.u32 %v1350, 16
      %v1437 = vrot.slane %v1435, 4
      %v1438 = vor.u32 %v1437, %v1433
      %v1439 = vrot.slane %v1438, 4
      %v1441 = vshll.u32 %v1351, 16
      %v1443 = vrot.slane %v1441, 5
      %v1444 = vsel %vm1396, %v1439, %v1443
      %v1446 = vshrl.u32 %v1352, 16
      %v1448 = vrot.slane %v1446, 4
      %v1449 = vshll.u32 %v1352, 16
      %v1451 = vrot.slane %v1449, 5
      %v1452 = vor.u32 %v1448, %v1451
      %v1453 = vrot.slane %v1452, 4
      %v1455 = vshll.u32 %v1353, 16
      %v1457 = vrot.slane %v1455, 5
      %v1458 = vsel %vm1396, %v1453, %v1457
      %v1459 = vshrl.u32 %v1353, 16
      %v1461 = vrot.slane %v1459, 4
      %v1462 = vor.u32 %v1461, %v1457
      %v1463 = vrot.slane %v1462, 4
      %v1465 = vshll.u32 %v1354, 16
      %v1467 = vrot.slane %v1465, 5
      %v1468 = vsel %vm1396, %v1463, %v1467
      %v1470 = vshrl.u32 %v1355, 16
      %v1472 = vrot.slane %v1470, 4
      %v1473 = vshll.u32 %v1355, 16
      %v1475 = vrot.slane %v1473, 5
      %v1476 = vor.u32 %v1472, %v1475
      %v1477 = vrot.slane %v1476, 4
      %v1479 = vshll.u32 %v1356, 16
      %v1481 = vrot.slane %v1479, 5
      %v1482 = vsel %vm1396, %v1477, %v1481
      %v1483 = vshrl.u32 %v1356, 16
      %v1485 = vrot.slane %v1483, 4
      %v1486 = vor.u32 %v1485, %v1481
      %v1487 = vrot.slane %v1486, 4
      %v1489 = vshll.u32 %v1357, 16
      %v1491 = vrot.slane %v1489, 5
      %v1492 = vsel %vm1396, %v1487, %v1491
      %v1494 = vshrl.u32 %v1358, 16
      %v1496 = vrot.slane %v1494, 4
      %v1497 = vshll.u32 %v1358, 16
      %v1499 = vrot.slane %v1497, 5
      %v1500 = vor.u32 %v1496, %v1499
      %v1501 = vrot.slane %v1500, 4
      %v1503 = vshll.u32 %v1359, 16
      %v1505 = vrot.slane %v1503, 5
      %v1506 = vsel %vm1396, %v1501, %v1505
      %v1507 = vshrl.u32 %v1359, 16
      %v1509 = vrot.slane %v1507, 4
      %v1510 = vor.u32 %v1509, %v1505
      %v1511 = vrot.slane %v1510, 4
      %v1513 = vshll.u32 %v1360, 16
      %v1515 = vrot.slane %v1513, 5
      %v1516 = vsel %vm1396, %v1511, %v1515
      %v1518 = vshrl.u32 %v1361, 16
      %v1520 = vrot.slane %v1518, 4
      %v1521 = vshll.u32 %v1361, 16
      %v1523 = vrot.slane %v1521, 5
      %v1524 = vor.u32 %v1520, %v1523
      %v1525 = vrot.slane %v1524, 4
      %v1527 = vshll.u32 %v1362, 16
      %v1529 = vrot.slane %v1527, 5
      %v1530 = vsel %vm1396, %v1525, %v1529
      %v1531 = vshrl.u32 %v1362, 16
      %v1533 = vrot.slane %v1531, 4
      %v1534 = vor.u32 %v1533, %v1529
      %v1535 = vrot.slane %v1534, 4
      %v1537 = vshll.u32 %v1363, 16
      %v1539 = vrot.slane %v1537, 5
      %v1540 = vsel %vm1396, %v1535, %v1539
      %v1542 = vshrl.u32 %v1364, 16
      %v1544 = vrot.slane %v1542, 4
      %v1545 = vshll.u32 %v1364, 16
      %v1547 = vrot.slane %v1545, 5
      %v1548 = vor.u32 %v1544, %v1547
      %v1549 = vrot.slane %v1548, 4
      %v1551 = vshll.u32 %v1365, 16
      %v1553 = vrot.slane %v1551, 5
      %v1554 = vsel %vm1396, %v1549, %v1553
      %v1555 = vshrl.u32 %v1365, 16
      %v1557 = vrot.slane %v1555, 4
      %v1558 = vor.u32 %v1557, %v1553
      %v1559 = vrot.slane %v1558, 4
      %v1561 = vshll.u32 %v1366, 16
      %v1563 = vrot.slane %v1561, 5
      %v1564 = vsel %vm1396, %v1559, %v1563
      %v1566 = vshrl.u32 %v1367, 16
      %v1568 = vrot.slane %v1566, 4
      %v1569 = vshll.u32 %v1367, 16
      %v1571 = vrot.slane %v1569, 5
      %v1572 = vor.u32 %v1568, %v1571
      %v1573 = vrot.slane %v1572, 4
      %v1575 = vshll.u32 %v1368, 16
      %v1577 = vrot.slane %v1575, 5
      %v1578 = vsel %vm1396, %v1573, %v1577
      %v1579 = vshrl.u32 %v1368, 16
      %v1581 = vrot.slane %v1579, 4
      %v1582 = vor.u32 %v1581, %v1577
      %v1583 = vrot.slane %v1582, 4
      %v1585 = vshll.u32 %v1369, 16
      %v1587 = vrot.slane %v1585, 5
      %v1588 = vsel %vm1396, %v1583, %v1587
      %v1590 = vshrl.u32 %v1370, 16
      %v1592 = vrot.slane %v1590, 4
      %v1593 = vshll.u32 %v1370, 16
      %v1595 = vrot.slane %v1593, 5
      %v1596 = vor.u32 %v1592, %v1595
      %v1597 = vrot.slane %v1596, 4
      %v1599 = vshll.u32 %v1371, 16
      %v1601 = vrot.slane %v1599, 5
      %v1602 = vsel %vm1396, %v1597, %v1601
      %v1603 = vshrl.u32 %v1371, 16
      %v1605 = vrot.slane %v1603, 4
      %v1606 = vor.u32 %v1605, %v1601
      %v1607 = vrot.slane %v1606, 4
      %v1609 = vshll.u32 %v1372, 16
      %v1611 = vrot.slane %v1609, 5
      %v1612 = vsel %vm1396, %v1607, %v1611
      %v1614 = vshrl.u32 %v1373, 16
      %v1616 = vrot.slane %v1614, 4
      %v1617 = vshll.u32 %v1373, 16
      %v1619 = vrot.slane %v1617, 5
      %v1620 = vor.u32 %v1616, %v1619
      %v1621 = vrot.slane %v1620, 4
      %v1623 = vshll.u32 %v1374, 16
      %v1625 = vrot.slane %v1623, 5
      %v1626 = vsel %vm1396, %v1621, %v1625
      %v1627 = vshrl.u32 %v1374, 16
      %v1629 = vrot.slane %v1627, 4
      %v1630 = vor.u32 %v1629, %v1625
      %v1631 = vrot.slane %v1630, 4
      %v1633 = vshll.u32 %v1375, 16
      %v1635 = vrot.slane %v1633, 5
      %v1636 = vsel %vm1396, %v1631, %v1635
      %v1638 = vshrl.u32 %v1376, 16
      %v1640 = vrot.slane %v1638, 4
      %v1641 = vshll.u32 %v1376, 16
      %v1643 = vrot.slane %v1641, 5
      %v1644 = vor.u32 %v1640, %v1643
      %v1645 = vrot.slane %v1644, 4
      %v1647 = vshll.u32 %v1377, 16
      %v1649 = vrot.slane %v1647, 5
      %v1650 = vsel %vm1396, %v1645, %v1649
      %v1651 = vshrl.u32 %v1377, 16
      %v1653 = vrot.slane %v1651, 4
      %v1654 = vor.u32 %v1653, %v1649
      %v1655 = vrot.slane %v1654, 4
      %v1657 = vshll.u32 %v1378, 16
      %v1659 = vrot.slane %v1657, 5
      %v1660 = vsel %vm1396, %v1655, %v1659
      %v1662 = vshrl.u32 %v1379, 16
      %v1664 = vrot.slane %v1662, 4
      %v1665 = vshll.u32 %v1379, 16
      %v1667 = vrot.slane %v1665, 5
      %v1668 = vor.u32 %v1664, %v1667
      %v1669 = vrot.slane %v1668, 4
      %v1671 = vshll.u32 %v1380, 16
      %v1673 = vrot.slane %v1671, 5
      %v1674 = vsel %vm1396, %v1669, %v1673
      %v1675 = vshrl.u32 %v1380, 16
      %v1677 = vrot.slane %v1675, 4
      %v1678 = vor.u32 %v1677, %v1673
      %v1679 = vrot.slane %v1678, 4
      %v1681 = vshll.u32 %v1381, 16
      %v1683 = vrot.slane %v1681, 5
      %v1684 = vsel %vm1396, %v1679, %v1683
      %v1686 = vshrl.u32 %v1382, 16
      %v1688 = vrot.slane %v1686, 4
      %v1689 = vshll.u32 %v1382, 16
      %v1691 = vrot.slane %v1689, 5
      %v1692 = vor.u32 %v1688, %v1691
      %v1693 = vrot.slane %v1692, 4
      %v1695 = vshll.u32 %v1383, 16
      %v1697 = vrot.slane %v1695, 5
      %v1698 = vsel %vm1396, %v1693, %v1697
      %v1699 = vshrl.u32 %v1383, 16
      %v1701 = vrot.slane %v1699, 4
      %v1702 = vor.u32 %v1701, %v1697
      %v1703 = vrot.slane %v1702, 4
      %v1705 = vshll.u32 %v1384, 16
      %v1707 = vrot.slane %v1705, 5
      %v1708 = vsel %vm1396, %v1703, %v1707
      %v1710 = vshrl.u32 %v1385, 16
      %v1712 = vrot.slane %v1710, 4
      %v1713 = vshll.u32 %v1385, 16
      %v1715 = vrot.slane %v1713, 5
      %v1716 = vor.u32 %v1712, %v1715
      %v1717 = vrot.slane %v1716, 4
      %v1719 = vshll.u32 %v1386, 16
      %v1721 = vrot.slane %v1719, 5
      %v1722 = vsel %vm1396, %v1717, %v1721
      %v1723 = vshrl.u32 %v1386, 16
      %v1725 = vrot.slane %v1723, 4
      %v1726 = vor.u32 %v1725, %v1721
      %v1727 = vrot.slane %v1726, 4
      %v1729 = vshll.u32 %v1387, 16
      %v1731 = vrot.slane %v1729, 5
      %v1732 = vsel %vm1396, %v1727, %v1731
      %v1734 = vshrl.u32 %v1388, 16
      %v1736 = vrot.slane %v1734, 4
      %v1737 = vshll.u32 %v1388, 16
      %v1739 = vrot.slane %v1737, 5
      %v1740 = vor.u32 %v1736, %v1739
      %v1741 = vrot.slane %v1740, 4
      %v1743 = vshll.u32 %v1389, 16
      %v1745 = vrot.slane %v1743, 5
      %v1746 = vsel %vm1396, %v1741, %v1745
      %v1747 = vshrl.u32 %v1389, 16
      %v1749 = vrot.slane %v1747, 4
      %v1750 = vor.u32 %v1749, %v1745
      %v1751 = vrot.slane %v1750, 4
      %v1753 = vshll.u32 %v1390, 16
      %v1755 = vrot.slane %v1753, 5
      %v1756 = vsel %vm1396, %v1751, %v1755
      %v1758 = vshrl.u32 %v1391, 16
      %v1760 = vrot.slane %v1758, 4
      %v1761 = vshll.u32 %v1391, 16
      %v1763 = vrot.slane %v1761, 5
      %v1764 = vor.u32 %v1760, %v1763
      %v1765 = vrot.slane %v1764, 4
      %v1767 = vshll.u32 %v1392, 16
      %v1769 = vrot.slane %v1767, 5
      %v1770 = vsel %vm1396, %v1765, %v1769
      %v1771 = vshrl.u32 %v1392, 16
      %v1773 = vrot.slane %v1771, 4
      %v1774 = vor.u32 %v1773, %v1769
      %v1775 = vrot.slane %v1774, 4
      %v1777 = vshll.u32 %v1393, 16
      %v1779 = vrot.slane %v1777, 5
      %v1780 = vsel %vm1396, %v1775, %v1779
      %1813 = vst [vmem:[#allocation3 + $0x4] sm:$0xf] %v1410
      %1814 = vst [vmem:[#allocation3 + $0x28] sm:$0xf] %v1420
      %1815 = vst [vmem:[#allocation3 + $0x4c] sm:$0xf] %v1434
      %1816 = vst [vmem:[#allocation3 + $0x70] sm:$0xf] %v1444
      %1817 = vst [vmem:[#allocation3 + $0x94] sm:$0xf] %v1458
      %1818 = vst [vmem:[#allocation3 + $0xb8] sm:$0xf] %v1468
      %1819 = vst [vmem:[#allocation3 + $0xdc] sm:$0xf] %v1482
      %1820 = vst [vmem:[#allocation3 + $0x100] sm:$0xf] %v1492
      %1821 = vst [vmem:[#allocation3 + $0x124] sm:$0xf] %v1506
      %1822 = vst [vmem:[#allocation3 + $0x148] sm:$0xf] %v1516
      %1823 = vst [vmem:[#allocation3 + $0x16c] sm:$0xf] %v1530
      %1824 = vst [vmem:[#allocation3 + $0x190] sm:$0xf] %v1540
      %1825 = vst [vmem:[#allocation3 + $0x1b4] sm:$0xf] %v1554
      %1826 = vst [vmem:[#allocation3 + $0x1d8] sm:$0xf] %v1564
      %1827 = vst [vmem:[#allocation3 + $0x1fc] sm:$0xf] %v1578
      %1828 = vst [vmem:[#allocation3 + $0x220] sm:$0xf] %v1588
      %1829 = vst [vmem:[#allocation3 + $0x244] sm:$0xf] %v1602
      %1830 = vst [vmem:[#allocation3 + $0x268] sm:$0xf] %v1612
      %1831 = vst [vmem:[#allocation3 + $0x28c] sm:$0xf] %v1626
      %1832 = vst [vmem:[#allocation3 + $0x2b0] sm:$0xf] %v1636
      %1833 = vst [vmem:[#allocation3 + $0x2d4] sm:$0xf] %v1650
      %1834 = vst [vmem:[#allocation3 + $0x2f8] sm:$0xf] %v1660
      %1835 = vst [vmem:[#allocation3 + $0x31c] sm:$0xf] %v1674
      %1836 = vst [vmem:[#allocation3 + $0x340] sm:$0xf] %v1684
      %1837 = vst [vmem:[#allocation3 + $0x364] sm:$0xf] %v1698
      %1838 = vst [vmem:[#allocation3 + $0x388] sm:$0xf] %v1708
      %1839 = vst [vmem:[#allocation3 + $0x3ac] sm:$0xf] %v1722
      %1840 = vst [vmem:[#allocation3 + $0x3d0] sm:$0xf] %v1732
      %1841 = vst [vmem:[#allocation3 + $0x3f4] sm:$0xf] %v1746
      %1842 = vst [vmem:[#allocation3 + $0x418] sm:$0xf] %v1756
      %1843 = vst [vmem:[#allocation3 + $0x43c] sm:$0xf] %v1770
      %1844 = vst [vmem:[#allocation3 + $0x460] sm:$0xf] %v1780
      %v1845 = vld [vmem:[#allocation2] sm:$0xe]
      %v1846 = vld [vmem:[#allocation2 + $0x4] sm:$0xf]
      %v1847 = vld [vmem:[#allocation2 + $0x8] sm:$0x1]
      %v1848 = vld [vmem:[#allocation2 + $0xc] sm:$0xe]
      %v1849 = vld [vmem:[#allocation2 + $0x10] sm:$0xf]
      %v1850 = vld [vmem:[#allocation2 + $0x14] sm:$0x1]
      %v1851 = vld [vmem:[#allocation2 + $0x18] sm:$0xe]
      %v1852 = vld [vmem:[#allocation2 + $0x1c] sm:$0xf]
      %v1853 = vld [vmem:[#allocation2 + $0x20] sm:$0x1]
      %v1854 = vld [vmem:[#allocation2 + $0x24] sm:$0xe]
      %v1855 = vld [vmem:[#allocation2 + $0x28] sm:$0xf]
      %v1856 = vld [vmem:[#allocation2 + $0x2c] sm:$0x1]
      %v1857 = vld [vmem:[#allocation2 + $0x30] sm:$0xe]
      %v1858 = vld [vmem:[#allocation2 + $0x34] sm:$0xf]
      %v1859 = vld [vmem:[#allocation2 + $0x38] sm:$0x1]
      %v1860 = vld [vmem:[#allocation2 + $0x3c] sm:$0xe]
      %v1861 = vld [vmem:[#allocation2 + $0x40] sm:$0xf]
      %v1862 = vld [vmem:[#allocation2 + $0x44] sm:$0x1]
      %v1863 = vld [vmem:[#allocation2 + $0x48] sm:$0xe]
      %v1864 = vld [vmem:[#allocation2 + $0x4c] sm:$0xf]
      %v1865 = vld [vmem:[#allocation2 + $0x50] sm:$0x1]
      %v1866 = vld [vmem:[#allocation2 + $0x54] sm:$0xe]
      %v1867 = vld [vmem:[#allocation2 + $0x58] sm:$0xf]
      %v1868 = vld [vmem:[#allocation2 + $0x5c] sm:$0x1]
      %v1869 = vld [vmem:[#allocation2 + $0x60] sm:$0xe]
      %v1870 = vld [vmem:[#allocation2 + $0x64] sm:$0xf]
      %v1871 = vld [vmem:[#allocation2 + $0x68] sm:$0x1]
      %v1872 = vld [vmem:[#allocation2 + $0x6c] sm:$0xe]
      %v1873 = vld [vmem:[#allocation2 + $0x70] sm:$0xf]
      %v1874 = vld [vmem:[#allocation2 + $0x74] sm:$0x1]
      %v1875 = vld [vmem:[#allocation2 + $0x78] sm:$0xe]
      %v1876 = vld [vmem:[#allocation2 + $0x7c] sm:$0xf]
      %v1877 = vld [vmem:[#allocation2 + $0x80] sm:$0x1]
      %v1878 = vld [vmem:[#allocation2 + $0x84] sm:$0xe]
      %v1879 = vld [vmem:[#allocation2 + $0x88] sm:$0xf]
      %v1880 = vld [vmem:[#allocation2 + $0x8c] sm:$0x1]
      %v1881 = vld [vmem:[#allocation2 + $0x90] sm:$0xe]
      %v1882 = vld [vmem:[#allocation2 + $0x94] sm:$0xf]
      %v1883 = vld [vmem:[#allocation2 + $0x98] sm:$0x1]
      %v1884 = vld [vmem:[#allocation2 + $0x9c] sm:$0xe]
      %v1885 = vld [vmem:[#allocation2 + $0xa0] sm:$0xf]
      %v1886 = vld [vmem:[#allocation2 + $0xa4] sm:$0x1]
      %v1887 = vld [vmem:[#allocation2 + $0xa8] sm:$0xe]
      %v1888 = vld [vmem:[#allocation2 + $0xac] sm:$0xf]
      %v1889 = vld [vmem:[#allocation2 + $0xb0] sm:$0x1]
      %v1890 = vld [vmem:[#allocation2 + $0xb4] sm:$0xe]
      %v1891 = vld [vmem:[#allocation2 + $0xb8] sm:$0xf]
      %v1892 = vld [vmem:[#allocation2 + $0xbc] sm:$0x1]
      %vm1941 = vcmask 1042432
      %vm1942 = vcmask 1046532
      %vm1943 = vmor %vm1941, %vm1942
      %v1944 = vrot.slane %v1845, 5
      %v1945 = vrot.slane %v1944, 4
      %v1946 = vrot.slane %v1846, 5
      %v1947 = vsel %vm1943, %v1945, %v1946
      %v1948 = vrot.slane %v1946, 4
      %v1949 = vrot.slane %v1847, 5
      %v1950 = vsel %vm1943, %v1948, %v1949
      %v1951 = vrot.slane %v1848, 5
      %v1952 = vrot.slane %v1951, 4
      %v1953 = vrot.slane %v1849, 5
      %v1954 = vsel %vm1943, %v1952, %v1953
      %v1955 = vrot.slane %v1953, 4
      %v1956 = vrot.slane %v1850, 5
      %v1957 = vsel %vm1943, %v1955, %v1956
      %v1958 = vrot.slane %v1851, 5
      %v1959 = vrot.slane %v1958, 4
      %v1960 = vrot.slane %v1852, 5
      %v1961 = vsel %vm1943, %v1959, %v1960
      %v1962 = vrot.slane %v1960, 4
      %v1963 = vrot.slane %v1853, 5
      %v1964 = vsel %vm1943, %v1962, %v1963
      %v1965 = vrot.slane %v1854, 5
      %v1966 = vrot.slane %v1965, 4
      %v1967 = vrot.slane %v1855, 5
      %v1968 = vsel %vm1943, %v1966, %v1967
      %v1969 = vrot.slane %v1967, 4
      %v1970 = vrot.slane %v1856, 5
      %v1971 = vsel %vm1943, %v1969, %v1970
      %v1972 = vrot.slane %v1857, 5
      %v1973 = vrot.slane %v1972, 4
      %v1974 = vrot.slane %v1858, 5
      %v1975 = vsel %vm1943, %v1973, %v1974
      %v1976 = vrot.slane %v1974, 4
      %v1977 = vrot.slane %v1859, 5
      %v1978 = vsel %vm1943, %v1976, %v1977
      %v1979 = vrot.slane %v1860, 5
      %v1980 = vrot.slane %v1979, 4
      %v1981 = vrot.slane %v1861, 5
      %v1982 = vsel %vm1943, %v1980, %v1981
      %v1983 = vrot.slane %v1981, 4
      %v1984 = vrot.slane %v1862, 5
      %v1985 = vsel %vm1943, %v1983, %v1984
      %v1986 = vrot.slane %v1863, 5
      %v1987 = vrot.slane %v1986, 4
      %v1988 = vrot.slane %v1864, 5
      %v1989 = vsel %vm1943, %v1987, %v1988
      %v1990 = vrot.slane %v1988, 4
      %v1991 = vrot.slane %v1865, 5
      %v1992 = vsel %vm1943, %v1990, %v1991
      %v1993 = vrot.slane %v1866, 5
      %v1994 = vrot.slane %v1993, 4
      %v1995 = vrot.slane %v1867, 5
      %v1996 = vsel %vm1943, %v1994, %v1995
      %v1997 = vrot.slane %v1995, 4
      %v1998 = vrot.slane %v1868, 5
      %v1999 = vsel %vm1943, %v1997, %v1998
      %v2000 = vrot.slane %v1869, 5
      %v2001 = vrot.slane %v2000, 4
      %v2002 = vrot.slane %v1870, 5
      %v2003 = vsel %vm1943, %v2001, %v2002
      %v2004 = vrot.slane %v2002, 4
      %v2005 = vrot.slane %v1871, 5
      %v2006 = vsel %vm1943, %v2004, %v2005
      %v2007 = vrot.slane %v1872, 5
      %v2008 = vrot.slane %v2007, 4
      %v2009 = vrot.slane %v1873, 5
      %v2010 = vsel %vm1943, %v2008, %v2009
      %v2011 = vrot.slane %v2009, 4
      %v2012 = vrot.slane %v1874, 5
      %v2013 = vsel %vm1943, %v2011, %v2012
      %v2014 = vrot.slane %v1875, 5
      %v2015 = vrot.slane %v2014, 4
      %v2016 = vrot.slane %v1876, 5
      %v2017 = vsel %vm1943, %v2015, %v2016
      %v2018 = vrot.slane %v2016, 4
      %v2019 = vrot.slane %v1877, 5
      %v2020 = vsel %vm1943, %v2018, %v2019
      %v2021 = vrot.slane %v1878, 5
      %v2022 = vrot.slane %v2021, 4
      %v2023 = vrot.slane %v1879, 5
      %v2024 = vsel %vm1943, %v2022, %v2023
      %v2025 = vrot.slane %v2023, 4
      %v2026 = vrot.slane %v1880, 5
      %v2027 = vsel %vm1943, %v2025, %v2026
      %v2028 = vrot.slane %v1881, 5
      %v2029 = vrot.slane %v2028, 4
      %v2030 = vrot.slane %v1882, 5
      %v2031 = vsel %vm1943, %v2029, %v2030
      %v2032 = vrot.slane %v2030, 4
      %v2033 = vrot.slane %v1883, 5
      %v2034 = vsel %vm1943, %v2032, %v2033
      %v2035 = vrot.slane %v1884, 5
      %v2036 = vrot.slane %v2035, 4
      %v2037 = vrot.slane %v1885, 5
      %v2038 = vsel %vm1943, %v2036, %v2037
      %v2039 = vrot.slane %v2037, 4
      %v2040 = vrot.slane %v1886, 5
      %v2041 = vsel %vm1943, %v2039, %v2040
      %v2042 = vrot.slane %v1887, 5
      %v2043 = vrot.slane %v2042, 4
      %v2044 = vrot.slane %v1888, 5
      %v2045 = vsel %vm1943, %v2043, %v2044
      %v2046 = vrot.slane %v2044, 4
      %v2047 = vrot.slane %v1889, 5
      %v2048 = vsel %vm1943, %v2046, %v2047
      %v2049 = vrot.slane %v1890, 5
      %v2050 = vrot.slane %v2049, 4
      %v2051 = vrot.slane %v1891, 5
      %v2052 = vsel %vm1943, %v2050, %v2051
      %v2053 = vrot.slane %v2051, 4
      %v2054 = vrot.slane %v1892, 5
      %v2055 = vsel %vm1943, %v2053, %v2054
      %2088 = vst [vmem:[#allocation3 + $0x8] sm:$0xf] %v1947
      %2089 = vst [vmem:[#allocation3 + $0x2c] sm:$0xf] %v1950
      %2090 = vst [vmem:[#allocation3 + $0x50] sm:$0xf] %v1954
      %2091 = vst [vmem:[#allocation3 + $0x74] sm:$0xf] %v1957
      %2092 = vst [vmem:[#allocation3 + $0x98] sm:$0xf] %v1961
      %2093 = vst [vmem:[#allocation3 + $0xbc] sm:$0xf] %v1964
      %2094 = vst [vmem:[#allocation3 + $0xe0] sm:$0xf] %v1968
      %2095 = vst [vmem:[#allocation3 + $0x104] sm:$0xf] %v1971
      %2096 = vst [vmem:[#allocation3 + $0x128] sm:$0xf] %v1975
      %2097 = vst [vmem:[#allocation3 + $0x14c] sm:$0xf] %v1978
      %2098 = vst [vmem:[#allocation3 + $0x170] sm:$0xf] %v1982
      %2099 = vst [vmem:[#allocation3 + $0x194] sm:$0xf] %v1985
      %2100 = vst [vmem:[#allocation3 + $0x1b8] sm:$0xf] %v1989
      %2101 = vst [vmem:[#allocation3 + $0x1dc] sm:$0xf] %v1992
      %2102 = vst [vmem:[#allocation3 + $0x200] sm:$0xf] %v1996
      %2103 = vst [vmem:[#allocation3 + $0x224] sm:$0xf] %v1999
      %2104 = vst [vmem:[#allocation3 + $0x248] sm:$0xf] %v2003
      %2105 = vst [vmem:[#allocation3 + $0x26c] sm:$0xf] %v2006
      %2106 = vst [vmem:[#allocation3 + $0x290] sm:$0xf] %v2010
      %2107 = vst [vmem:[#allocation3 + $0x2b4] sm:$0xf] %v2013
      %2108 = vst [vmem:[#allocation3 + $0x2d8] sm:$0xf] %v2017
      %2109 = vst [vmem:[#allocation3 + $0x2fc] sm:$0xf] %v2020
      %2110 = vst [vmem:[#allocation3 + $0x320] sm:$0xf] %v2024
      %2111 = vst [vmem:[#allocation3 + $0x344] sm:$0xf] %v2027
      %2112 = vst [vmem:[#allocation3 + $0x368] sm:$0xf] %v2031
      %2113 = vst [vmem:[#allocation3 + $0x38c] sm:$0xf] %v2034
      %2114 = vst [vmem:[#allocation3 + $0x3b0] sm:$0xf] %v2038
      %2115 = vst [vmem:[#allocation3 + $0x3d4] sm:$0xf] %v2041
      %2116 = vst [vmem:[#allocation3 + $0x3f8] sm:$0xf] %v2045
      %2117 = vst [vmem:[#allocation3 + $0x41c] sm:$0xf] %v2048
      %2118 = vst [vmem:[#allocation3 + $0x440] sm:$0xf] %v2052
      %2119 = vst [vmem:[#allocation3 + $0x464] sm:$0xf] %v2055
      %v2120 = vld [vmem:[%s774] sm:$0xf]
      %v2121 = vld [vmem:[%s774 + $0x4] sm:$0xf]
      %v2122 = vld [vmem:[%s774 + $0xc] sm:$0xf]
      %v2123 = vld [vmem:[%s774 + $0x10] sm:$0xf]
      %v2124 = vld [vmem:[%s774 + $0x18] sm:$0xf]
      %v2125 = vld [vmem:[%s774 + $0x1c] sm:$0xf]
      %v2126 = vld [vmem:[%s774 + $0x24] sm:$0xf]
      %v2127 = vld [vmem:[%s774 + $0x28] sm:$0xf]
      %v2128 = vld [vmem:[%s774 + $0x30] sm:$0xf]
      %v2129 = vld [vmem:[%s774 + $0x34] sm:$0xf]
      %v2130 = vld [vmem:[%s774 + $0x3c] sm:$0xf]
      %v2131 = vld [vmem:[%s774 + $0x40] sm:$0xf]
      %v2132 = vld [vmem:[%s774 + $0x48] sm:$0xf]
      %v2133 = vld [vmem:[%s774 + $0x4c] sm:$0xf]
      %v2134 = vld [vmem:[%s774 + $0x54] sm:$0xf]
      %v2135 = vld [vmem:[%s774 + $0x58] sm:$0xf]
      %v2136 = vld [vmem:[%s774 + $0x60] sm:$0xf]
      %v2137 = vld [vmem:[%s774 + $0x64] sm:$0xf]
      %v2138 = vld [vmem:[%s774 + $0x6c] sm:$0xf]
      %v2139 = vld [vmem:[%s774 + $0x70] sm:$0xf]
      %v2140 = vld [vmem:[%s774 + $0x78] sm:$0xf]
      %v2141 = vld [vmem:[%s774 + $0x7c] sm:$0xf]
      %v2142 = vld [vmem:[%s774 + $0x84] sm:$0xf]
      %v2143 = vld [vmem:[%s774 + $0x88] sm:$0xf]
      %v2144 = vld [vmem:[%s774 + $0x90] sm:$0xf]
      %v2145 = vld [vmem:[%s774 + $0x94] sm:$0xf]
      %v2146 = vld [vmem:[%s774 + $0x9c] sm:$0xf]
      %v2147 = vld [vmem:[%s774 + $0xa0] sm:$0xf]
      %v2148 = vld [vmem:[%s774 + $0xa8] sm:$0xf]
      %v2149 = vld [vmem:[%s774 + $0xac] sm:$0xf]
      %v2150 = vld [vmem:[%s774 + $0xb4] sm:$0xf]
      %v2151 = vld [vmem:[%s774 + $0xb8] sm:$0xf]
      %2152 = vst [vmem:[#allocation3 + $0xc] sm:$0xf] %v2120
      %2153 = vst [vmem:[#allocation3 + $0x30] sm:$0xf] %v2121
      %2154 = vst [vmem:[#allocation3 + $0x54] sm:$0xf] %v2122
      %2155 = vst [vmem:[#allocation3 + $0x78] sm:$0xf] %v2123
      %2156 = vst [vmem:[#allocation3 + $0x9c] sm:$0xf] %v2124
      %2157 = vst [vmem:[#allocation3 + $0xc0] sm:$0xf] %v2125
      %2158 = vst [vmem:[#allocation3 + $0xe4] sm:$0xf] %v2126
      %2159 = vst [vmem:[#allocation3 + $0x108] sm:$0xf] %v2127
      %2160 = vst [vmem:[#allocation3 + $0x12c] sm:$0xf] %v2128
      %2161 = vst [vmem:[#allocation3 + $0x150] sm:$0xf] %v2129
      %2162 = vst [vmem:[#allocation3 + $0x174] sm:$0xf] %v2130
      %2163 = vst [vmem:[#allocation3 + $0x198] sm:$0xf] %v2131
      %2164 = vst [vmem:[#allocation3 + $0x1bc] sm:$0xf] %v2132
      %2165 = vst [vmem:[#allocation3 + $0x1e0] sm:$0xf] %v2133
      %2166 = vst [vmem:[#allocation3 + $0x204] sm:$0xf] %v2134
      %2167 = vst [vmem:[#allocation3 + $0x228] sm:$0xf] %v2135
      %2168 = vst [vmem:[#allocation3 + $0x24c] sm:$0xf] %v2136
      %2169 = vst [vmem:[#allocation3 + $0x270] sm:$0xf] %v2137
      %2170 = vst [vmem:[#allocation3 + $0x294] sm:$0xf] %v2138
      %2171 = vst [vmem:[#allocation3 + $0x2b8] sm:$0xf] %v2139
      %2172 = vst [vmem:[#allocation3 + $0x2dc] sm:$0xf] %v2140
      %2173 = vst [vmem:[#allocation3 + $0x300] sm:$0xf] %v2141
      %2174 = vst [vmem:[#allocation3 + $0x324] sm:$0xf] %v2142
      %2175 = vst [vmem:[#allocation3 + $0x348] sm:$0xf] %v2143
      %2176 = vst [vmem:[#allocation3 + $0x36c] sm:$0xf] %v2144
      %2177 = vst [vmem:[#allocation3 + $0x390] sm:$0xf] %v2145
      %2178 = vst [vmem:[#allocation3 + $0x3b4] sm:$0xf] %v2146
      %2179 = vst [vmem:[#allocation3 + $0x3d8] sm:$0xf] %v2147
      %2180 = vst [vmem:[#allocation3 + $0x3fc] sm:$0xf] %v2148
      %2181 = vst [vmem:[#allocation3 + $0x420] sm:$0xf] %v2149
      %2182 = vst [vmem:[#allocation3 + $0x444] sm:$0xf] %v2150
      %2183 = vst [vmem:[#allocation3 + $0x468] sm:$0xf] %v2151
      %v2184 = vld [vmem:[%s774] sm:$0xf]
      %v2185 = vld [vmem:[%s774 + $0x4] sm:$0xf]
      %v2186 = vld [vmem:[%s774 + $0x8] sm:$0x1]
      %v2187 = vld [vmem:[%s774 + $0xc] sm:$0xf]
      %v2188 = vld [vmem:[%s774 + $0x10] sm:$0xf]
      %v2189 = vld [vmem:[%s774 + $0x14] sm:$0x1]
      %v2190 = vld [vmem:[%s774 + $0x18] sm:$0xf]
      %v2191 = vld [vmem:[%s774 + $0x1c] sm:$0xf]
      %v2192 = vld [vmem:[%s774 + $0x20] sm:$0x1]
      %v2193 = vld [vmem:[%s774 + $0x24] sm:$0xf]
      %v2194 = vld [vmem:[%s774 + $0x28] sm:$0xf]
      %v2195 = vld [vmem:[%s774 + $0x2c] sm:$0x1]
      %v2196 = vld [vmem:[%s774 + $0x30] sm:$0xf]
      %v2197 = vld [vmem:[%s774 + $0x34] sm:$0xf]
      %v2198 = vld [vmem:[%s774 + $0x38] sm:$0x1]
      %v2199 = vld [vmem:[%s774 + $0x3c] sm:$0xf]
      %v2200 = vld [vmem:[%s774 + $0x40] sm:$0xf]
      %v2201 = vld [vmem:[%s774 + $0x44] sm:$0x1]
      %v2202 = vld [vmem:[%s774 + $0x48] sm:$0xf]
      %v2203 = vld [vmem:[%s774 + $0x4c] sm:$0xf]
      %v2204 = vld [vmem:[%s774 + $0x50] sm:$0x1]
      %v2205 = vld [vmem:[%s774 + $0x54] sm:$0xf]
      %v2206 = vld [vmem:[%s774 + $0x58] sm:$0xf]
      %v2207 = vld [vmem:[%s774 + $0x5c] sm:$0x1]
      %v2208 = vld [vmem:[%s774 + $0x60] sm:$0xf]
      %v2209 = vld [vmem:[%s774 + $0x64] sm:$0xf]
      %v2210 = vld [vmem:[%s774 + $0x68] sm:$0x1]
      %v2211 = vld [vmem:[%s774 + $0x6c] sm:$0xf]
      %v2212 = vld [vmem:[%s774 + $0x70] sm:$0xf]
      %v2213 = vld [vmem:[%s774 + $0x74] sm:$0x1]
      %v2214 = vld [vmem:[%s774 + $0x78] sm:$0xf]
      %v2215 = vld [vmem:[%s774 + $0x7c] sm:$0xf]
      %v2216 = vld [vmem:[%s774 + $0x80] sm:$0x1]
      %v2217 = vld [vmem:[%s774 + $0x84] sm:$0xf]
      %v2218 = vld [vmem:[%s774 + $0x88] sm:$0xf]
      %v2219 = vld [vmem:[%s774 + $0x8c] sm:$0x1]
      %v2220 = vld [vmem:[%s774 + $0x90] sm:$0xf]
      %v2221 = vld [vmem:[%s774 + $0x94] sm:$0xf]
      %v2222 = vld [vmem:[%s774 + $0x98] sm:$0x1]
      %v2223 = vld [vmem:[%s774 + $0x9c] sm:$0xf]
      %v2224 = vld [vmem:[%s774 + $0xa0] sm:$0xf]
      %v2225 = vld [vmem:[%s774 + $0xa4] sm:$0x1]
      %v2226 = vld [vmem:[%s774 + $0xa8] sm:$0xf]
      %v2227 = vld [vmem:[%s774 + $0xac] sm:$0xf]
      %v2228 = vld [vmem:[%s774 + $0xb0] sm:$0x1]
      %v2229 = vld [vmem:[%s774 + $0xb4] sm:$0xf]
      %v2230 = vld [vmem:[%s774 + $0xb8] sm:$0xf]
      %v2231 = vld [vmem:[%s774 + $0xbc] sm:$0x1]
      %v2233 = vshrl.u32 %v2184, 16
      %v2235 = vrot.slane %v2233, 4
      %v2236 = vshll.u32 %v2184, 16
      %v2238 = vrot.slane %v2236, 5
      %v2239 = vor.u32 %v2235, %v2238
      %v2240 = vrot.slane %v2239, 4
      %v2242 = vshll.u32 %v2185, 16
      %v2244 = vrot.slane %v2242, 5
      %v2245 = vsel %vm1396, %v2240, %v2244
      %v2246 = vshrl.u32 %v2185, 16
      %v2248 = vrot.slane %v2246, 4
      %v2249 = vor.u32 %v2248, %v2244
      %v2250 = vrot.slane %v2249, 4
      %v2252 = vshll.u32 %v2186, 16
      %v2254 = vrot.slane %v2252, 5
      %v2255 = vsel %vm1396, %v2250, %v2254
      %v2257 = vshrl.u32 %v2187, 16
      %v2259 = vrot.slane %v2257, 4
      %v2260 = vshll.u32 %v2187, 16
      %v2262 = vrot.slane %v2260, 5
      %v2263 = vor.u32 %v2259, %v2262
      %v2264 = vrot.slane %v2263, 4
      %v2266 = vshll.u32 %v2188, 16
      %v2268 = vrot.slane %v2266, 5
      %v2269 = vsel %vm1396, %v2264, %v2268
      %v2270 = vshrl.u32 %v2188, 16
      %v2272 = vrot.slane %v2270, 4
      %v2273 = vor.u32 %v2272, %v2268
      %v2274 = vrot.slane %v2273, 4
      %v2276 = vshll.u32 %v2189, 16
      %v2278 = vrot.slane %v2276, 5
      %v2279 = vsel %vm1396, %v2274, %v2278
      %v2281 = vshrl.u32 %v2190, 16
      %v2283 = vrot.slane %v2281, 4
      %v2284 = vshll.u32 %v2190, 16
      %v2286 = vrot.slane %v2284, 5
      %v2287 = vor.u32 %v2283, %v2286
      %v2288 = vrot.slane %v2287, 4
      %v2290 = vshll.u32 %v2191, 16
      %v2292 = vrot.slane %v2290, 5
      %v2293 = vsel %vm1396, %v2288, %v2292
      %v2294 = vshrl.u32 %v2191, 16
      %v2296 = vrot.slane %v2294, 4
      %v2297 = vor.u32 %v2296, %v2292
      %v2298 = vrot.slane %v2297, 4
      %v2300 = vshll.u32 %v2192, 16
      %v2302 = vrot.slane %v2300, 5
      %v2303 = vsel %vm1396, %v2298, %v2302
      %v2305 = vshrl.u32 %v2193, 16
      %v2307 = vrot.slane %v2305, 4
      %v2308 = vshll.u32 %v2193, 16
      %v2310 = vrot.slane %v2308, 5
      %v2311 = vor.u32 %v2307, %v2310
      %v2312 = vrot.slane %v2311, 4
      %v2314 = vshll.u32 %v2194, 16
      %v2316 = vrot.slane %v2314, 5
      %v2317 = vsel %vm1396, %v2312, %v2316
      %v2318 = vshrl.u32 %v2194, 16
      %v2320 = vrot.slane %v2318, 4
      %v2321 = vor.u32 %v2320, %v2316
      %v2322 = vrot.slane %v2321, 4
      %v2324 = vshll.u32 %v2195, 16
      %v2326 = vrot.slane %v2324, 5
      %v2327 = vsel %vm1396, %v2322, %v2326
      %v2329 = vshrl.u32 %v2196, 16
      %v2331 = vrot.slane %v2329, 4
      %v2332 = vshll.u32 %v2196, 16
      %v2334 = vrot.slane %v2332, 5
      %v2335 = vor.u32 %v2331, %v2334
      %v2336 = vrot.slane %v2335, 4
      %v2338 = vshll.u32 %v2197, 16
      %v2340 = vrot.slane %v2338, 5
      %v2341 = vsel %vm1396, %v2336, %v2340
      %v2342 = vshrl.u32 %v2197, 16
      %v2344 = vrot.slane %v2342, 4
      %v2345 = vor.u32 %v2344, %v2340
      %v2346 = vrot.slane %v2345, 4
      %v2348 = vshll.u32 %v2198, 16
      %v2350 = vrot.slane %v2348, 5
      %v2351 = vsel %vm1396, %v2346, %v2350
      %v2353 = vshrl.u32 %v2199, 16
      %v2355 = vrot.slane %v2353, 4
      %v2356 = vshll.u32 %v2199, 16
      %v2358 = vrot.slane %v2356, 5
      %v2359 = vor.u32 %v2355, %v2358
      %v2360 = vrot.slane %v2359, 4
      %v2362 = vshll.u32 %v2200, 16
      %v2364 = vrot.slane %v2362, 5
      %v2365 = vsel %vm1396, %v2360, %v2364
      %v2366 = vshrl.u32 %v2200, 16
      %v2368 = vrot.slane %v2366, 4
      %v2369 = vor.u32 %v2368, %v2364
      %v2370 = vrot.slane %v2369, 4
      %v2372 = vshll.u32 %v2201, 16
      %v2374 = vrot.slane %v2372, 5
      %v2375 = vsel %vm1396, %v2370, %v2374
      %v2377 = vshrl.u32 %v2202, 16
      %v2379 = vrot.slane %v2377, 4
      %v2380 = vshll.u32 %v2202, 16
      %v2382 = vrot.slane %v2380, 5
      %v2383 = vor.u32 %v2379, %v2382
      %v2384 = vrot.slane %v2383, 4
      %v2386 = vshll.u32 %v2203, 16
      %v2388 = vrot.slane %v2386, 5
      %v2389 = vsel %vm1396, %v2384, %v2388
      %v2390 = vshrl.u32 %v2203, 16
      %v2392 = vrot.slane %v2390, 4
      %v2393 = vor.u32 %v2392, %v2388
      %v2394 = vrot.slane %v2393, 4
      %v2396 = vshll.u32 %v2204, 16
      %v2398 = vrot.slane %v2396, 5
      %v2399 = vsel %vm1396, %v2394, %v2398
      %v2401 = vshrl.u32 %v2205, 16
      %v2403 = vrot.slane %v2401, 4
      %v2404 = vshll.u32 %v2205, 16
      %v2406 = vrot.slane %v2404, 5
      %v2407 = vor.u32 %v2403, %v2406
      %v2408 = vrot.slane %v2407, 4
      %v2410 = vshll.u32 %v2206, 16
      %v2412 = vrot.slane %v2410, 5
      %v2413 = vsel %vm1396, %v2408, %v2412
      %v2414 = vshrl.u32 %v2206, 16
      %v2416 = vrot.slane %v2414, 4
      %v2417 = vor.u32 %v2416, %v2412
      %v2418 = vrot.slane %v2417, 4
      %v2420 = vshll.u32 %v2207, 16
      %v2422 = vrot.slane %v2420, 5
      %v2423 = vsel %vm1396, %v2418, %v2422
      %v2425 = vshrl.u32 %v2208, 16
      %v2427 = vrot.slane %v2425, 4
      %v2428 = vshll.u32 %v2208, 16
      %v2430 = vrot.slane %v2428, 5
      %v2431 = vor.u32 %v2427, %v2430
      %v2432 = vrot.slane %v2431, 4
      %v2434 = vshll.u32 %v2209, 16
      %v2436 = vrot.slane %v2434, 5
      %v2437 = vsel %vm1396, %v2432, %v2436
      %v2438 = vshrl.u32 %v2209, 16
      %v2440 = vrot.slane %v2438, 4
      %v2441 = vor.u32 %v2440, %v2436
      %v2442 = vrot.slane %v2441, 4
      %v2444 = vshll.u32 %v2210, 16
      %v2446 = vrot.slane %v2444, 5
      %v2447 = vsel %vm1396, %v2442, %v2446
      %v2449 = vshrl.u32 %v2211, 16
      %v2451 = vrot.slane %v2449, 4
      %v2452 = vshll.u32 %v2211, 16
      %v2454 = vrot.slane %v2452, 5
      %v2455 = vor.u32 %v2451, %v2454
      %v2456 = vrot.slane %v2455, 4
      %v2458 = vshll.u32 %v2212, 16
      %v2460 = vrot.slane %v2458, 5
      %v2461 = vsel %vm1396, %v2456, %v2460
      %v2462 = vshrl.u32 %v2212, 16
      %v2464 = vrot.slane %v2462, 4
      %v2465 = vor.u32 %v2464, %v2460
      %v2466 = vrot.slane %v2465, 4
      %v2468 = vshll.u32 %v2213, 16
      %v2470 = vrot.slane %v2468, 5
      %v2471 = vsel %vm1396, %v2466, %v2470
      %v2473 = vshrl.u32 %v2214, 16
      %v2475 = vrot.slane %v2473, 4
      %v2476 = vshll.u32 %v2214, 16
      %v2478 = vrot.slane %v2476, 5
      %v2479 = vor.u32 %v2475, %v2478
      %v2480 = vrot.slane %v2479, 4
      %v2482 = vshll.u32 %v2215, 16
      %v2484 = vrot.slane %v2482, 5
      %v2485 = vsel %vm1396, %v2480, %v2484
      %v2486 = vshrl.u32 %v2215, 16
      %v2488 = vrot.slane %v2486, 4
      %v2489 = vor.u32 %v2488, %v2484
      %v2490 = vrot.slane %v2489, 4
      %v2492 = vshll.u32 %v2216, 16
      %v2494 = vrot.slane %v2492, 5
      %v2495 = vsel %vm1396, %v2490, %v2494
      %v2497 = vshrl.u32 %v2217, 16
      %v2499 = vrot.slane %v2497, 4
      %v2500 = vshll.u32 %v2217, 16
      %v2502 = vrot.slane %v2500, 5
      %v2503 = vor.u32 %v2499, %v2502
      %v2504 = vrot.slane %v2503, 4
      %v2506 = vshll.u32 %v2218, 16
      %v2508 = vrot.slane %v2506, 5
      %v2509 = vsel %vm1396, %v2504, %v2508
      %v2510 = vshrl.u32 %v2218, 16
      %v2512 = vrot.slane %v2510, 4
      %v2513 = vor.u32 %v2512, %v2508
      %v2514 = vrot.slane %v2513, 4
      %v2516 = vshll.u32 %v2219, 16
      %v2518 = vrot.slane %v2516, 5
      %v2519 = vsel %vm1396, %v2514, %v2518
      %v2521 = vshrl.u32 %v2220, 16
      %v2523 = vrot.slane %v2521, 4
      %v2524 = vshll.u32 %v2220, 16
      %v2526 = vrot.slane %v2524, 5
      %v2527 = vor.u32 %v2523, %v2526
      %v2528 = vrot.slane %v2527, 4
      %v2530 = vshll.u32 %v2221, 16
      %v2532 = vrot.slane %v2530, 5
      %v2533 = vsel %vm1396, %v2528, %v2532
      %v2534 = vshrl.u32 %v2221, 16
      %v2536 = vrot.slane %v2534, 4
      %v2537 = vor.u32 %v2536, %v2532
      %v2538 = vrot.slane %v2537, 4
      %v2540 = vshll.u32 %v2222, 16
      %v2542 = vrot.slane %v2540, 5
      %v2543 = vsel %vm1396, %v2538, %v2542
      %v2545 = vshrl.u32 %v2223, 16
      %v2547 = vrot.slane %v2545, 4
      %v2548 = vshll.u32 %v2223, 16
      %v2550 = vrot.slane %v2548, 5
      %v2551 = vor.u32 %v2547, %v2550
      %v2552 = vrot.slane %v2551, 4
      %v2554 = vshll.u32 %v2224, 16
      %v2556 = vrot.slane %v2554, 5
      %v2557 = vsel %vm1396, %v2552, %v2556
      %v2558 = vshrl.u32 %v2224, 16
      %v2560 = vrot.slane %v2558, 4
      %v2561 = vor.u32 %v2560, %v2556
      %v2562 = vrot.slane %v2561, 4
      %v2564 = vshll.u32 %v2225, 16
      %v2566 = vrot.slane %v2564, 5
      %v2567 = vsel %vm1396, %v2562, %v2566
      %v2569 = vshrl.u32 %v2226, 16
      %v2571 = vrot.slane %v2569, 4
      %v2572 = vshll.u32 %v2226, 16
      %v2574 = vrot.slane %v2572, 5
      %v2575 = vor.u32 %v2571, %v2574
      %v2576 = vrot.slane %v2575, 4
      %v2578 = vshll.u32 %v2227, 16
      %v2580 = vrot.slane %v2578, 5
      %v2581 = vsel %vm1396, %v2576, %v2580
      %v2582 = vshrl.u32 %v2227, 16
      %v2584 = vrot.slane %v2582, 4
      %v2585 = vor.u32 %v2584, %v2580
      %v2586 = vrot.slane %v2585, 4
      %v2588 = vshll.u32 %v2228, 16
      %v2590 = vrot.slane %v2588, 5
      %v2591 = vsel %vm1396, %v2586, %v2590
      %v2593 = vshrl.u32 %v2229, 16
      %v2595 = vrot.slane %v2593, 4
      %v2596 = vshll.u32 %v2229, 16
      %v2598 = vrot.slane %v2596, 5
      %v2599 = vor.u32 %v2595, %v2598
      %v2600 = vrot.slane %v2599, 4
      %v2602 = vshll.u32 %v2230, 16
      %v2604 = vrot.slane %v2602, 5
      %v2605 = vsel %vm1396, %v2600, %v2604
      %v2606 = vshrl.u32 %v2230, 16
      %v2608 = vrot.slane %v2606, 4
      %v2609 = vor.u32 %v2608, %v2604
      %v2610 = vrot.slane %v2609, 4
      %v2612 = vshll.u32 %v2231, 16
      %v2614 = vrot.slane %v2612, 5
      %v2615 = vsel %vm1396, %v2610, %v2614
      %2648 = vst [vmem:[#allocation3 + $0x10] sm:$0xf] %v2245
      %2649 = vst [vmem:[#allocation3 + $0x34] sm:$0xf] %v2255
      %2650 = vst [vmem:[#allocation3 + $0x58] sm:$0xf] %v2269
      %2651 = vst [vmem:[#allocation3 + $0x7c] sm:$0xf] %v2279
      %2652 = vst [vmem:[#allocation3 + $0xa0] sm:$0xf] %v2293
      %2653 = vst [vmem:[#allocation3 + $0xc4] sm:$0xf] %v2303
      %2654 = vst [vmem:[#allocation3 + $0xe8] sm:$0xf] %v2317
      %2655 = vst [vmem:[#allocation3 + $0x10c] sm:$0xf] %v2327
      %2656 = vst [vmem:[#allocation3 + $0x130] sm:$0xf] %v2341
      %2657 = vst [vmem:[#allocation3 + $0x154] sm:$0xf] %v2351
      %2658 = vst [vmem:[#allocation3 + $0x178] sm:$0xf] %v2365
      %2659 = vst [vmem:[#allocation3 + $0x19c] sm:$0xf] %v2375
      %2660 = vst [vmem:[#allocation3 + $0x1c0] sm:$0xf] %v2389
      %2661 = vst [vmem:[#allocation3 + $0x1e4] sm:$0xf] %v2399
      %2662 = vst [vmem:[#allocation3 + $0x208] sm:$0xf] %v2413
      %2663 = vst [vmem:[#allocation3 + $0x22c] sm:$0xf] %v2423
      %2664 = vst [vmem:[#allocation3 + $0x250] sm:$0xf] %v2437
      %2665 = vst [vmem:[#allocation3 + $0x274] sm:$0xf] %v2447
      %2666 = vst [vmem:[#allocation3 + $0x298] sm:$0xf] %v2461
      %2667 = vst [vmem:[#allocation3 + $0x2bc] sm:$0xf] %v2471
      %2668 = vst [vmem:[#allocation3 + $0x2e0] sm:$0xf] %v2485
      %2669 = vst [vmem:[#allocation3 + $0x304] sm:$0xf] %v2495
      %2670 = vst [vmem:[#allocation3 + $0x328] sm:$0xf] %v2509
      %2671 = vst [vmem:[#allocation3 + $0x34c] sm:$0xf] %v2519
      %2672 = vst [vmem:[#allocation3 + $0x370] sm:$0xf] %v2533
      %2673 = vst [vmem:[#allocation3 + $0x394] sm:$0xf] %v2543
      %2674 = vst [vmem:[#allocation3 + $0x3b8] sm:$0xf] %v2557
      %2675 = vst [vmem:[#allocation3 + $0x3dc] sm:$0xf] %v2567
      %2676 = vst [vmem:[#allocation3 + $0x400] sm:$0xf] %v2581
      %2677 = vst [vmem:[#allocation3 + $0x424] sm:$0xf] %v2591
      %2678 = vst [vmem:[#allocation3 + $0x448] sm:$0xf] %v2605
      %2679 = vst [vmem:[#allocation3 + $0x46c] sm:$0xf] %v2615
      %v2680 = vld [vmem:[%s774] sm:$0xe]
      %v2681 = vld [vmem:[%s774 + $0x4] sm:$0xf]
      %v2682 = vld [vmem:[%s774 + $0x8] sm:$0x1]
      %v2683 = vld [vmem:[%s774 + $0xc] sm:$0xe]
      %v2684 = vld [vmem:[%s774 + $0x10] sm:$0xf]
      %v2685 = vld [vmem:[%s774 + $0x14] sm:$0x1]
      %v2686 = vld [vmem:[%s774 + $0x18] sm:$0xe]
      %v2687 = vld [vmem:[%s774 + $0x1c] sm:$0xf]
      %v2688 = vld [vmem:[%s774 + $0x20] sm:$0x1]
      %v2689 = vld [vmem:[%s774 + $0x24] sm:$0xe]
      %v2690 = vld [vmem:[%s774 + $0x28] sm:$0xf]
      %v2691 = vld [vmem:[%s774 + $0x2c] sm:$0x1]
      %v2692 = vld [vmem:[%s774 + $0x30] sm:$0xe]
      %v2693 = vld [vmem:[%s774 + $0x34] sm:$0xf]
      %v2694 = vld [vmem:[%s774 + $0x38] sm:$0x1]
      %v2695 = vld [vmem:[%s774 + $0x3c] sm:$0xe]
      %v2696 = vld [vmem:[%s774 + $0x40] sm:$0xf]
      %v2697 = vld [vmem:[%s774 + $0x44] sm:$0x1]
      %v2698 = vld [vmem:[%s774 + $0x48] sm:$0xe]
      %v2699 = vld [vmem:[%s774 + $0x4c] sm:$0xf]
      %v2700 = vld [vmem:[%s774 + $0x50] sm:$0x1]
      %v2701 = vld [vmem:[%s774 + $0x54] sm:$0xe]
      %v2702 = vld [vmem:[%s774 + $0x58] sm:$0xf]
      %v2703 = vld [vmem:[%s774 + $0x5c] sm:$0x1]
      %v2704 = vld [vmem:[%s774 + $0x60] sm:$0xe]
      %v2705 = vld [vmem:[%s774 + $0x64] sm:$0xf]
      %v2706 = vld [vmem:[%s774 + $0x68] sm:$0x1]
      %v2707 = vld [vmem:[%s774 + $0x6c] sm:$0xe]
      %v2708 = vld [vmem:[%s774 + $0x70] sm:$0xf]
      %v2709 = vld [vmem:[%s774 + $0x74] sm:$0x1]
      %v2710 = vld [vmem:[%s774 + $0x78] sm:$0xe]
      %v2711 = vld [vmem:[%s774 + $0x7c] sm:$0xf]
      %v2712 = vld [vmem:[%s774 + $0x80] sm:$0x1]
      %v2713 = vld [vmem:[%s774 + $0x84] sm:$0xe]
      %v2714 = vld [vmem:[%s774 + $0x88] sm:$0xf]
      %v2715 = vld [vmem:[%s774 + $0x8c] sm:$0x1]
      %v2716 = vld [vmem:[%s774 + $0x90] sm:$0xe]
      %v2717 = vld [vmem:[%s774 + $0x94] sm:$0xf]
      %v2718 = vld [vmem:[%s774 + $0x98] sm:$0x1]
      %v2719 = vld [vmem:[%s774 + $0x9c] sm:$0xe]
      %v2720 = vld [vmem:[%s774 + $0xa0] sm:$0xf]
      %v2721 = vld [vmem:[%s774 + $0xa4] sm:$0x1]
      %v2722 = vld [vmem:[%s774 + $0xa8] sm:$0xe]
      %v2723 = vld [vmem:[%s774 + $0xac] sm:$0xf]
      %v2724 = vld [vmem:[%s774 + $0xb0] sm:$0x1]
      %v2725 = vld [vmem:[%s774 + $0xb4] sm:$0xe]
      %v2726 = vld [vmem:[%s774 + $0xb8] sm:$0xf]
      %v2727 = vld [vmem:[%s774 + $0xbc] sm:$0x1]
      %v2776 = vrot.slane %v2680, 5
      %v2777 = vrot.slane %v2776, 4
      %v2778 = vrot.slane %v2681, 5
      %v2779 = vsel %vm1943, %v2777, %v2778
      %v2780 = vrot.slane %v2778, 4
      %v2781 = vrot.slane %v2682, 5
      %v2782 = vsel %vm1943, %v2780, %v2781
      %v2783 = vrot.slane %v2683, 5
      %v2784 = vrot.slane %v2783, 4
      %v2785 = vrot.slane %v2684, 5
      %v2786 = vsel %vm1943, %v2784, %v2785
      %v2787 = vrot.slane %v2785, 4
      %v2788 = vrot.slane %v2685, 5
      %v2789 = vsel %vm1943, %v2787, %v2788
      %v2790 = vrot.slane %v2686, 5
      %v2791 = vrot.slane %v2790, 4
      %v2792 = vrot.slane %v2687, 5
      %v2793 = vsel %vm1943, %v2791, %v2792
      %v2794 = vrot.slane %v2792, 4
      %v2795 = vrot.slane %v2688, 5
      %v2796 = vsel %vm1943, %v2794, %v2795
      %v2797 = vrot.slane %v2689, 5
      %v2798 = vrot.slane %v2797, 4
      %v2799 = vrot.slane %v2690, 5
      %v2800 = vsel %vm1943, %v2798, %v2799
      %v2801 = vrot.slane %v2799, 4
      %v2802 = vrot.slane %v2691, 5
      %v2803 = vsel %vm1943, %v2801, %v2802
      %v2804 = vrot.slane %v2692, 5
      %v2805 = vrot.slane %v2804, 4
      %v2806 = vrot.slane %v2693, 5
      %v2807 = vsel %vm1943, %v2805, %v2806
      %v2808 = vrot.slane %v2806, 4
      %v2809 = vrot.slane %v2694, 5
      %v2810 = vsel %vm1943, %v2808, %v2809
      %v2811 = vrot.slane %v2695, 5
      %v2812 = vrot.slane %v2811, 4
      %v2813 = vrot.slane %v2696, 5
      %v2814 = vsel %vm1943, %v2812, %v2813
      %v2815 = vrot.slane %v2813, 4
      %v2816 = vrot.slane %v2697, 5
      %v2817 = vsel %vm1943, %v2815, %v2816
      %v2818 = vrot.slane %v2698, 5
      %v2819 = vrot.slane %v2818, 4
      %v2820 = vrot.slane %v2699, 5
      %v2821 = vsel %vm1943, %v2819, %v2820
      %v2822 = vrot.slane %v2820, 4
      %v2823 = vrot.slane %v2700, 5
      %v2824 = vsel %vm1943, %v2822, %v2823
      %v2825 = vrot.slane %v2701, 5
      %v2826 = vrot.slane %v2825, 4
      %v2827 = vrot.slane %v2702, 5
      %v2828 = vsel %vm1943, %v2826, %v2827
      %v2829 = vrot.slane %v2827, 4
      %v2830 = vrot.slane %v2703, 5
      %v2831 = vsel %vm1943, %v2829, %v2830
      %v2832 = vrot.slane %v2704, 5
      %v2833 = vrot.slane %v2832, 4
      %v2834 = vrot.slane %v2705, 5
      %v2835 = vsel %vm1943, %v2833, %v2834
      %v2836 = vrot.slane %v2834, 4
      %v2837 = vrot.slane %v2706, 5
      %v2838 = vsel %vm1943, %v2836, %v2837
      %v2839 = vrot.slane %v2707, 5
      %v2840 = vrot.slane %v2839, 4
      %v2841 = vrot.slane %v2708, 5
      %v2842 = vsel %vm1943, %v2840, %v2841
      %v2843 = vrot.slane %v2841, 4
      %v2844 = vrot.slane %v2709, 5
      %v2845 = vsel %vm1943, %v2843, %v2844
      %v2846 = vrot.slane %v2710, 5
      %v2847 = vrot.slane %v2846, 4
      %v2848 = vrot.slane %v2711, 5
      %v2849 = vsel %vm1943, %v2847, %v2848
      %v2850 = vrot.slane %v2848, 4
      %v2851 = vrot.slane %v2712, 5
      %v2852 = vsel %vm1943, %v2850, %v2851
      %v2853 = vrot.slane %v2713, 5
      %v2854 = vrot.slane %v2853, 4
      %v2855 = vrot.slane %v2714, 5
      %v2856 = vsel %vm1943, %v2854, %v2855
      %v2857 = vrot.slane %v2855, 4
      %v2858 = vrot.slane %v2715, 5
      %v2859 = vsel %vm1943, %v2857, %v2858
      %v2860 = vrot.slane %v2716, 5
      %v2861 = vrot.slane %v2860, 4
      %v2862 = vrot.slane %v2717, 5
      %v2863 = vsel %vm1943, %v2861, %v2862
      %v2864 = vrot.slane %v2862, 4
      %v2865 = vrot.slane %v2718, 5
      %v2866 = vsel %vm1943, %v2864, %v2865
      %v2867 = vrot.slane %v2719, 5
      %v2868 = vrot.slane %v2867, 4
      %v2869 = vrot.slane %v2720, 5
      %v2870 = vsel %vm1943, %v2868, %v2869
      %v2871 = vrot.slane %v2869, 4
      %v2872 = vrot.slane %v2721, 5
      %v2873 = vsel %vm1943, %v2871, %v2872
      %v2874 = vrot.slane %v2722, 5
      %v2875 = vrot.slane %v2874, 4
      %v2876 = vrot.slane %v2723, 5
      %v2877 = vsel %vm1943, %v2875, %v2876
      %v2878 = vrot.slane %v2876, 4
      %v2879 = vrot.slane %v2724, 5
      %v2880 = vsel %vm1943, %v2878, %v2879
      %v2881 = vrot.slane %v2725, 5
      %v2882 = vrot.slane %v2881, 4
      %v2883 = vrot.slane %v2726, 5
      %v2884 = vsel %vm1943, %v2882, %v2883
      %v2885 = vrot.slane %v2883, 4
      %v2886 = vrot.slane %v2727, 5
      %v2887 = vsel %vm1943, %v2885, %v2886
      %2920 = vst [vmem:[#allocation3 + $0x14] sm:$0xf] %v2779
      %2921 = vst [vmem:[#allocation3 + $0x38] sm:$0xf] %v2782
      %2922 = vst [vmem:[#allocation3 + $0x5c] sm:$0xf] %v2786
      %2923 = vst [vmem:[#allocation3 + $0x80] sm:$0xf] %v2789
      %2924 = vst [vmem:[#allocation3 + $0xa4] sm:$0xf] %v2793
      %2925 = vst [vmem:[#allocation3 + $0xc8] sm:$0xf] %v2796
      %2926 = vst [vmem:[#allocation3 + $0xec] sm:$0xf] %v2800
      %2927 = vst [vmem:[#allocation3 + $0x110] sm:$0xf] %v2803
      %2928 = vst [vmem:[#allocation3 + $0x134] sm:$0xf] %v2807
      %2929 = vst [vmem:[#allocation3 + $0x158] sm:$0xf] %v2810
      %2930 = vst [vmem:[#allocation3 + $0x17c] sm:$0xf] %v2814
      %2931 = vst [vmem:[#allocation3 + $0x1a0] sm:$0xf] %v2817
      %2932 = vst [vmem:[#allocation3 + $0x1c4] sm:$0xf] %v2821
      %2933 = vst [vmem:[#allocation3 + $0x1e8] sm:$0xf] %v2824
      %2934 = vst [vmem:[#allocation3 + $0x20c] sm:$0xf] %v2828
      %2935 = vst [vmem:[#allocation3 + $0x230] sm:$0xf] %v2831
      %2936 = vst [vmem:[#allocation3 + $0x254] sm:$0xf] %v2835
      %2937 = vst [vmem:[#allocation3 + $0x278] sm:$0xf] %v2838
      %2938 = vst [vmem:[#allocation3 + $0x29c] sm:$0xf] %v2842
      %2939 = vst [vmem:[#allocation3 + $0x2c0] sm:$0xf] %v2845
      %2940 = vst [vmem:[#allocation3 + $0x2e4] sm:$0xf] %v2849
      %2941 = vst [vmem:[#allocation3 + $0x308] sm:$0xf] %v2852
      %2942 = vst [vmem:[#allocation3 + $0x32c] sm:$0xf] %v2856
      %2943 = vst [vmem:[#allocation3 + $0x350] sm:$0xf] %v2859
      %2944 = vst [vmem:[#allocation3 + $0x374] sm:$0xf] %v2863
      %2945 = vst [vmem:[#allocation3 + $0x398] sm:$0xf] %v2866
      %2946 = vst [vmem:[#allocation3 + $0x3bc] sm:$0xf] %v2870
      %2947 = vst [vmem:[#allocation3 + $0x3e0] sm:$0xf] %v2873
      %2948 = vst [vmem:[#allocation3 + $0x404] sm:$0xf] %v2877
      %2949 = vst [vmem:[#allocation3 + $0x428] sm:$0xf] %v2880
      %2950 = vst [vmem:[#allocation3 + $0x44c] sm:$0xf] %v2884
      %2951 = vst [vmem:[#allocation3 + $0x470] sm:$0xf] %v2887
      %v2952 = vld [vmem:[%s812] sm:$0xf]
      %v2953 = vld [vmem:[%s812 + $0x4] sm:$0xf]
      %v2954 = vld [vmem:[%s812 + $0xc] sm:$0xf]
      %v2955 = vld [vmem:[%s812 + $0x10] sm:$0xf]
      %v2956 = vld [vmem:[%s812 + $0x18] sm:$0xf]
      %v2957 = vld [vmem:[%s812 + $0x1c] sm:$0xf]
      %v2958 = vld [vmem:[%s812 + $0x24] sm:$0xf]
      %v2959 = vld [vmem:[%s812 + $0x28] sm:$0xf]
      %v2960 = vld [vmem:[%s812 + $0x30] sm:$0xf]
      %v2961 = vld [vmem:[%s812 + $0x34] sm:$0xf]
      %v2962 = vld [vmem:[%s812 + $0x3c] sm:$0xf]
      %v2963 = vld [vmem:[%s812 + $0x40] sm:$0xf]
      %v2964 = vld [vmem:[%s812 + $0x48] sm:$0xf]
      %v2965 = vld [vmem:[%s812 + $0x4c] sm:$0xf]
      %v2966 = vld [vmem:[%s812 + $0x54] sm:$0xf]
      %v2967 = vld [vmem:[%s812 + $0x58] sm:$0xf]
      %v2968 = vld [vmem:[%s812 + $0x60] sm:$0xf]
      %v2969 = vld [vmem:[%s812 + $0x64] sm:$0xf]
      %v2970 = vld [vmem:[%s812 + $0x6c] sm:$0xf]
      %v2971 = vld [vmem:[%s812 + $0x70] sm:$0xf]
      %v2972 = vld [vmem:[%s812 + $0x78] sm:$0xf]
      %v2973 = vld [vmem:[%s812 + $0x7c] sm:$0xf]
      %v2974 = vld [vmem:[%s812 + $0x84] sm:$0xf]
      %v2975 = vld [vmem:[%s812 + $0x88] sm:$0xf]
      %v2976 = vld [vmem:[%s812 + $0x90] sm:$0xf]
      %v2977 = vld [vmem:[%s812 + $0x94] sm:$0xf]
      %v2978 = vld [vmem:[%s812 + $0x9c] sm:$0xf]
      %v2979 = vld [vmem:[%s812 + $0xa0] sm:$0xf]
      %v2980 = vld [vmem:[%s812 + $0xa8] sm:$0xf]
      %v2981 = vld [vmem:[%s812 + $0xac] sm:$0xf]
      %v2982 = vld [vmem:[%s812 + $0xb4] sm:$0xf]
      %v2983 = vld [vmem:[%s812 + $0xb8] sm:$0xf]
      %2984 = vst [vmem:[#allocation3 + $0x18] sm:$0xf] %v2952
      %2985 = vst [vmem:[#allocation3 + $0x3c] sm:$0xf] %v2953
      %2986 = vst [vmem:[#allocation3 + $0x60] sm:$0xf] %v2954
      %2987 = vst [vmem:[#allocation3 + $0x84] sm:$0xf] %v2955
      %2988 = vst [vmem:[#allocation3 + $0xa8] sm:$0xf] %v2956
      %2989 = vst [vmem:[#allocation3 + $0xcc] sm:$0xf] %v2957
      %2990 = vst [vmem:[#allocation3 + $0xf0] sm:$0xf] %v2958
      %2991 = vst [vmem:[#allocation3 + $0x114] sm:$0xf] %v2959
      %2992 = vst [vmem:[#allocation3 + $0x138] sm:$0xf] %v2960
      %2993 = vst [vmem:[#allocation3 + $0x15c] sm:$0xf] %v2961
      %2994 = vst [vmem:[#allocation3 + $0x180] sm:$0xf] %v2962
      %2995 = vst [vmem:[#allocation3 + $0x1a4] sm:$0xf] %v2963
      %2996 = vst [vmem:[#allocation3 + $0x1c8] sm:$0xf] %v2964
      %2997 = vst [vmem:[#allocation3 + $0x1ec] sm:$0xf] %v2965
      %2998 = vst [vmem:[#allocation3 + $0x210] sm:$0xf] %v2966
      %2999 = vst [vmem:[#allocation3 + $0x234] sm:$0xf] %v2967
      %3000 = vst [vmem:[#allocation3 + $0x258] sm:$0xf] %v2968
      %3001 = vst [vmem:[#allocation3 + $0x27c] sm:$0xf] %v2969
      %3002 = vst [vmem:[#allocation3 + $0x2a0] sm:$0xf] %v2970
      %3003 = vst [vmem:[#allocation3 + $0x2c4] sm:$0xf] %v2971
      %3004 = vst [vmem:[#allocation3 + $0x2e8] sm:$0xf] %v2972
      %3005 = vst [vmem:[#allocation3 + $0x30c] sm:$0xf] %v2973
      %3006 = vst [vmem:[#allocation3 + $0x330] sm:$0xf] %v2974
      %3007 = vst [vmem:[#allocation3 + $0x354] sm:$0xf] %v2975
      %3008 = vst [vmem:[#allocation3 + $0x378] sm:$0xf] %v2976
      %3009 = vst [vmem:[#allocation3 + $0x39c] sm:$0xf] %v2977
      %3010 = vst [vmem:[#allocation3 + $0x3c0] sm:$0xf] %v2978
      %3011 = vst [vmem:[#allocation3 + $0x3e4] sm:$0xf] %v2979
      %3012 = vst [vmem:[#allocation3 + $0x408] sm:$0xf] %v2980
      %3013 = vst [vmem:[#allocation3 + $0x42c] sm:$0xf] %v2981
      %3014 = vst [vmem:[#allocation3 + $0x450] sm:$0xf] %v2982
      %3015 = vst [vmem:[#allocation3 + $0x474] sm:$0xf] %v2983
      %v3016 = vld [vmem:[%s812] sm:$0xf]
      %v3017 = vld [vmem:[%s812 + $0x4] sm:$0xf]
      %v3018 = vld [vmem:[%s812 + $0x8] sm:$0x1]
      %v3019 = vld [vmem:[%s812 + $0xc] sm:$0xf]
      %v3020 = vld [vmem:[%s812 + $0x10] sm:$0xf]
      %v3021 = vld [vmem:[%s812 + $0x14] sm:$0x1]
      %v3022 = vld [vmem:[%s812 + $0x18] sm:$0xf]
      %v3023 = vld [vmem:[%s812 + $0x1c] sm:$0xf]
      %v3024 = vld [vmem:[%s812 + $0x20] sm:$0x1]
      %v3025 = vld [vmem:[%s812 + $0x24] sm:$0xf]
      %v3026 = vld [vmem:[%s812 + $0x28] sm:$0xf]
      %v3027 = vld [vmem:[%s812 + $0x2c] sm:$0x1]
      %v3028 = vld [vmem:[%s812 + $0x30] sm:$0xf]
      %v3029 = vld [vmem:[%s812 + $0x34] sm:$0xf]
      %v3030 = vld [vmem:[%s812 + $0x38] sm:$0x1]
      %v3031 = vld [vmem:[%s812 + $0x3c] sm:$0xf]
      %v3032 = vld [vmem:[%s812 + $0x40] sm:$0xf]
      %v3033 = vld [vmem:[%s812 + $0x44] sm:$0x1]
      %v3034 = vld [vmem:[%s812 + $0x48] sm:$0xf]
      %v3035 = vld [vmem:[%s812 + $0x4c] sm:$0xf]
      %v3036 = vld [vmem:[%s812 + $0x50] sm:$0x1]
      %v3037 = vld [vmem:[%s812 + $0x54] sm:$0xf]
      %v3038 = vld [vmem:[%s812 + $0x58] sm:$0xf]
      %v3039 = vld [vmem:[%s812 + $0x5c] sm:$0x1]
      %v3040 = vld [vmem:[%s812 + $0x60] sm:$0xf]
      %v3041 = vld [vmem:[%s812 + $0x64] sm:$0xf]
      %v3042 = vld [vmem:[%s812 + $0x68] sm:$0x1]
      %v3043 = vld [vmem:[%s812 + $0x6c] sm:$0xf]
      %v3044 = vld [vmem:[%s812 + $0x70] sm:$0xf]
      %v3045 = vld [vmem:[%s812 + $0x74] sm:$0x1]
      %v3046 = vld [vmem:[%s812 + $0x78] sm:$0xf]
      %v3047 = vld [vmem:[%s812 + $0x7c] sm:$0xf]
      %v3048 = vld [vmem:[%s812 + $0x80] sm:$0x1]
      %v3049 = vld [vmem:[%s812 + $0x84] sm:$0xf]
      %v3050 = vld [vmem:[%s812 + $0x88] sm:$0xf]
      %v3051 = vld [vmem:[%s812 + $0x8c] sm:$0x1]
      %v3052 = vld [vmem:[%s812 + $0x90] sm:$0xf]
      %v3053 = vld [vmem:[%s812 + $0x94] sm:$0xf]
      %v3054 = vld [vmem:[%s812 + $0x98] sm:$0x1]
      %v3055 = vld [vmem:[%s812 + $0x9c] sm:$0xf]
      %v3056 = vld [vmem:[%s812 + $0xa0] sm:$0xf]
      %v3057 = vld [vmem:[%s812 + $0xa4] sm:$0x1]
      %v3058 = vld [vmem:[%s812 + $0xa8] sm:$0xf]
      %v3059 = vld [vmem:[%s812 + $0xac] sm:$0xf]
      %v3060 = vld [vmem:[%s812 + $0xb0] sm:$0x1]
      %v3061 = vld [vmem:[%s812 + $0xb4] sm:$0xf]
      %v3062 = vld [vmem:[%s812 + $0xb8] sm:$0xf]
      %v3063 = vld [vmem:[%s812 + $0xbc] sm:$0x1]
      %v3065 = vshrl.u32 %v3016, 16
      %v3067 = vrot.slane %v3065, 4
      %v3068 = vshll.u32 %v3016, 16
      %v3070 = vrot.slane %v3068, 5
      %v3071 = vor.u32 %v3067, %v3070
      %v3072 = vrot.slane %v3071, 4
      %v3074 = vshll.u32 %v3017, 16
      %v3076 = vrot.slane %v3074, 5
      %v3077 = vsel %vm1396, %v3072, %v3076
      %v3078 = vshrl.u32 %v3017, 16
      %v3080 = vrot.slane %v3078, 4
      %v3081 = vor.u32 %v3080, %v3076
      %v3082 = vrot.slane %v3081, 4
      %v3084 = vshll.u32 %v3018, 16
      %v3086 = vrot.slane %v3084, 5
      %v3087 = vsel %vm1396, %v3082, %v3086
      %v3089 = vshrl.u32 %v3019, 16
      %v3091 = vrot.slane %v3089, 4
      %v3092 = vshll.u32 %v3019, 16
      %v3094 = vrot.slane %v3092, 5
      %v3095 = vor.u32 %v3091, %v3094
      %v3096 = vrot.slane %v3095, 4
      %v3098 = vshll.u32 %v3020, 16
      %v3100 = vrot.slane %v3098, 5
      %v3101 = vsel %vm1396, %v3096, %v3100
      %v3102 = vshrl.u32 %v3020, 16
      %v3104 = vrot.slane %v3102, 4
      %v3105 = vor.u32 %v3104, %v3100
      %v3106 = vrot.slane %v3105, 4
      %v3108 = vshll.u32 %v3021, 16
      %v3110 = vrot.slane %v3108, 5
      %v3111 = vsel %vm1396, %v3106, %v3110
      %v3113 = vshrl.u32 %v3022, 16
      %v3115 = vrot.slane %v3113, 4
      %v3116 = vshll.u32 %v3022, 16
      %v3118 = vrot.slane %v3116, 5
      %v3119 = vor.u32 %v3115, %v3118
      %v3120 = vrot.slane %v3119, 4
      %v3122 = vshll.u32 %v3023, 16
      %v3124 = vrot.slane %v3122, 5
      %v3125 = vsel %vm1396, %v3120, %v3124
      %v3126 = vshrl.u32 %v3023, 16
      %v3128 = vrot.slane %v3126, 4
      %v3129 = vor.u32 %v3128, %v3124
      %v3130 = vrot.slane %v3129, 4
      %v3132 = vshll.u32 %v3024, 16
      %v3134 = vrot.slane %v3132, 5
      %v3135 = vsel %vm1396, %v3130, %v3134
      %v3137 = vshrl.u32 %v3025, 16
      %v3139 = vrot.slane %v3137, 4
      %v3140 = vshll.u32 %v3025, 16
      %v3142 = vrot.slane %v3140, 5
      %v3143 = vor.u32 %v3139, %v3142
      %v3144 = vrot.slane %v3143, 4
      %v3146 = vshll.u32 %v3026, 16
      %v3148 = vrot.slane %v3146, 5
      %v3149 = vsel %vm1396, %v3144, %v3148
      %v3150 = vshrl.u32 %v3026, 16
      %v3152 = vrot.slane %v3150, 4
      %v3153 = vor.u32 %v3152, %v3148
      %v3154 = vrot.slane %v3153, 4
      %v3156 = vshll.u32 %v3027, 16
      %v3158 = vrot.slane %v3156, 5
      %v3159 = vsel %vm1396, %v3154, %v3158
      %v3161 = vshrl.u32 %v3028, 16
      %v3163 = vrot.slane %v3161, 4
      %v3164 = vshll.u32 %v3028, 16
      %v3166 = vrot.slane %v3164, 5
      %v3167 = vor.u32 %v3163, %v3166
      %v3168 = vrot.slane %v3167, 4
      %v3170 = vshll.u32 %v3029, 16
      %v3172 = vrot.slane %v3170, 5
      %v3173 = vsel %vm1396, %v3168, %v3172
      %v3174 = vshrl.u32 %v3029, 16
      %v3176 = vrot.slane %v3174, 4
      %v3177 = vor.u32 %v3176, %v3172
      %v3178 = vrot.slane %v3177, 4
      %v3180 = vshll.u32 %v3030, 16
      %v3182 = vrot.slane %v3180, 5
      %v3183 = vsel %vm1396, %v3178, %v3182
      %v3185 = vshrl.u32 %v3031, 16
      %v3187 = vrot.slane %v3185, 4
      %v3188 = vshll.u32 %v3031, 16
      %v3190 = vrot.slane %v3188, 5
      %v3191 = vor.u32 %v3187, %v3190
      %v3192 = vrot.slane %v3191, 4
      %v3194 = vshll.u32 %v3032, 16
      %v3196 = vrot.slane %v3194, 5
      %v3197 = vsel %vm1396, %v3192, %v3196
      %v3198 = vshrl.u32 %v3032, 16
      %v3200 = vrot.slane %v3198, 4
      %v3201 = vor.u32 %v3200, %v3196
      %v3202 = vrot.slane %v3201, 4
      %v3204 = vshll.u32 %v3033, 16
      %v3206 = vrot.slane %v3204, 5
      %v3207 = vsel %vm1396, %v3202, %v3206
      %v3209 = vshrl.u32 %v3034, 16
      %v3211 = vrot.slane %v3209, 4
      %v3212 = vshll.u32 %v3034, 16
      %v3214 = vrot.slane %v3212, 5
      %v3215 = vor.u32 %v3211, %v3214
      %v3216 = vrot.slane %v3215, 4
      %v3218 = vshll.u32 %v3035, 16
      %v3220 = vrot.slane %v3218, 5
      %v3221 = vsel %vm1396, %v3216, %v3220
      %v3222 = vshrl.u32 %v3035, 16
      %v3224 = vrot.slane %v3222, 4
      %v3225 = vor.u32 %v3224, %v3220
      %v3226 = vrot.slane %v3225, 4
      %v3228 = vshll.u32 %v3036, 16
      %v3230 = vrot.slane %v3228, 5
      %v3231 = vsel %vm1396, %v3226, %v3230
      %v3233 = vshrl.u32 %v3037, 16
      %v3235 = vrot.slane %v3233, 4
      %v3236 = vshll.u32 %v3037, 16
      %v3238 = vrot.slane %v3236, 5
      %v3239 = vor.u32 %v3235, %v3238
      %v3240 = vrot.slane %v3239, 4
      %v3242 = vshll.u32 %v3038, 16
      %v3244 = vrot.slane %v3242, 5
      %v3245 = vsel %vm1396, %v3240, %v3244
      %v3246 = vshrl.u32 %v3038, 16
      %v3248 = vrot.slane %v3246, 4
      %v3249 = vor.u32 %v3248, %v3244
      %v3250 = vrot.slane %v3249, 4
      %v3252 = vshll.u32 %v3039, 16
      %v3254 = vrot.slane %v3252, 5
      %v3255 = vsel %vm1396, %v3250, %v3254
      %v3257 = vshrl.u32 %v3040, 16
      %v3259 = vrot.slane %v3257, 4
      %v3260 = vshll.u32 %v3040, 16
      %v3262 = vrot.slane %v3260, 5
      %v3263 = vor.u32 %v3259, %v3262
      %v3264 = vrot.slane %v3263, 4
      %v3266 = vshll.u32 %v3041, 16
      %v3268 = vrot.slane %v3266, 5
      %v3269 = vsel %vm1396, %v3264, %v3268
      %v3270 = vshrl.u32 %v3041, 16
      %v3272 = vrot.slane %v3270, 4
      %v3273 = vor.u32 %v3272, %v3268
      %v3274 = vrot.slane %v3273, 4
      %v3276 = vshll.u32 %v3042, 16
      %v3278 = vrot.slane %v3276, 5
      %v3279 = vsel %vm1396, %v3274, %v3278
      %v3281 = vshrl.u32 %v3043, 16
      %v3283 = vrot.slane %v3281, 4
      %v3284 = vshll.u32 %v3043, 16
      %v3286 = vrot.slane %v3284, 5
      %v3287 = vor.u32 %v3283, %v3286
      %v3288 = vrot.slane %v3287, 4
      %v3290 = vshll.u32 %v3044, 16
      %v3292 = vrot.slane %v3290, 5
      %v3293 = vsel %vm1396, %v3288, %v3292
      %v3294 = vshrl.u32 %v3044, 16
      %v3296 = vrot.slane %v3294, 4
      %v3297 = vor.u32 %v3296, %v3292
      %v3298 = vrot.slane %v3297, 4
      %v3300 = vshll.u32 %v3045, 16
      %v3302 = vrot.slane %v3300, 5
      %v3303 = vsel %vm1396, %v3298, %v3302
      %v3305 = vshrl.u32 %v3046, 16
      %v3307 = vrot.slane %v3305, 4
      %v3308 = vshll.u32 %v3046, 16
      %v3310 = vrot.slane %v3308, 5
      %v3311 = vor.u32 %v3307, %v3310
      %v3312 = vrot.slane %v3311, 4
      %v3314 = vshll.u32 %v3047, 16
      %v3316 = vrot.slane %v3314, 5
      %v3317 = vsel %vm1396, %v3312, %v3316
      %v3318 = vshrl.u32 %v3047, 16
      %v3320 = vrot.slane %v3318, 4
      %v3321 = vor.u32 %v3320, %v3316
      %v3322 = vrot.slane %v3321, 4
      %v3324 = vshll.u32 %v3048, 16
      %v3326 = vrot.slane %v3324, 5
      %v3327 = vsel %vm1396, %v3322, %v3326
      %v3329 = vshrl.u32 %v3049, 16
      %v3331 = vrot.slane %v3329, 4
      %v3332 = vshll.u32 %v3049, 16
      %v3334 = vrot.slane %v3332, 5
      %v3335 = vor.u32 %v3331, %v3334
      %v3336 = vrot.slane %v3335, 4
      %v3338 = vshll.u32 %v3050, 16
      %v3340 = vrot.slane %v3338, 5
      %v3341 = vsel %vm1396, %v3336, %v3340
      %v3342 = vshrl.u32 %v3050, 16
      %v3344 = vrot.slane %v3342, 4
      %v3345 = vor.u32 %v3344, %v3340
      %v3346 = vrot.slane %v3345, 4
      %v3348 = vshll.u32 %v3051, 16
      %v3350 = vrot.slane %v3348, 5
      %v3351 = vsel %vm1396, %v3346, %v3350
      %v3353 = vshrl.u32 %v3052, 16
      %v3355 = vrot.slane %v3353, 4
      %v3356 = vshll.u32 %v3052, 16
      %v3358 = vrot.slane %v3356, 5
      %v3359 = vor.u32 %v3355, %v3358
      %v3360 = vrot.slane %v3359, 4
      %v3362 = vshll.u32 %v3053, 16
      %v3364 = vrot.slane %v3362, 5
      %v3365 = vsel %vm1396, %v3360, %v3364
      %v3366 = vshrl.u32 %v3053, 16
      %v3368 = vrot.slane %v3366, 4
      %v3369 = vor.u32 %v3368, %v3364
      %v3370 = vrot.slane %v3369, 4
      %v3372 = vshll.u32 %v3054, 16
      %v3374 = vrot.slane %v3372, 5
      %v3375 = vsel %vm1396, %v3370, %v3374
      %v3377 = vshrl.u32 %v3055, 16
      %v3379 = vrot.slane %v3377, 4
      %v3380 = vshll.u32 %v3055, 16
      %v3382 = vrot.slane %v3380, 5
      %v3383 = vor.u32 %v3379, %v3382
      %v3384 = vrot.slane %v3383, 4
      %v3386 = vshll.u32 %v3056, 16
      %v3388 = vrot.slane %v3386, 5
      %v3389 = vsel %vm1396, %v3384, %v3388
      %v3390 = vshrl.u32 %v3056, 16
      %v3392 = vrot.slane %v3390, 4
      %v3393 = vor.u32 %v3392, %v3388
      %v3394 = vrot.slane %v3393, 4
      %v3396 = vshll.u32 %v3057, 16
      %v3398 = vrot.slane %v3396, 5
      %v3399 = vsel %vm1396, %v3394, %v3398
      %v3401 = vshrl.u32 %v3058, 16
      %v3403 = vrot.slane %v3401, 4
      %v3404 = vshll.u32 %v3058, 16
      %v3406 = vrot.slane %v3404, 5
      %v3407 = vor.u32 %v3403, %v3406
      %v3408 = vrot.slane %v3407, 4
      %v3410 = vshll.u32 %v3059, 16
      %v3412 = vrot.slane %v3410, 5
      %v3413 = vsel %vm1396, %v3408, %v3412
      %v3414 = vshrl.u32 %v3059, 16
      %v3416 = vrot.slane %v3414, 4
      %v3417 = vor.u32 %v3416, %v3412
      %v3418 = vrot.slane %v3417, 4
      %v3420 = vshll.u32 %v3060, 16
      %v3422 = vrot.slane %v3420, 5
      %v3423 = vsel %vm1396, %v3418, %v3422
      %v3425 = vshrl.u32 %v3061, 16
      %v3427 = vrot.slane %v3425, 4
      %v3428 = vshll.u32 %v3061, 16
      %v3430 = vrot.slane %v3428, 5
      %v3431 = vor.u32 %v3427, %v3430
      %v3432 = vrot.slane %v3431, 4
      %v3434 = vshll.u32 %v3062, 16
      %v3436 = vrot.slane %v3434, 5
      %v3437 = vsel %vm1396, %v3432, %v3436
      %v3438 = vshrl.u32 %v3062, 16
      %v3440 = vrot.slane %v3438, 4
      %v3441 = vor.u32 %v3440, %v3436
      %v3442 = vrot.slane %v3441, 4
      %v3444 = vshll.u32 %v3063, 16
      %v3446 = vrot.slane %v3444, 5
      %v3447 = vsel %vm1396, %v3442, %v3446
      %3480 = vst [vmem:[#allocation3 + $0x1c] sm:$0xf] %v3077
      %3481 = vst [vmem:[#allocation3 + $0x40] sm:$0xf] %v3087
      %3482 = vst [vmem:[#allocation3 + $0x64] sm:$0xf] %v3101
      %3483 = vst [vmem:[#allocation3 + $0x88] sm:$0xf] %v3111
      %3484 = vst [vmem:[#allocation3 + $0xac] sm:$0xf] %v3125
      %3485 = vst [vmem:[#allocation3 + $0xd0] sm:$0xf] %v3135
      %3486 = vst [vmem:[#allocation3 + $0xf4] sm:$0xf] %v3149
      %3487 = vst [vmem:[#allocation3 + $0x118] sm:$0xf] %v3159
      %3488 = vst [vmem:[#allocation3 + $0x13c] sm:$0xf] %v3173
      %3489 = vst [vmem:[#allocation3 + $0x160] sm:$0xf] %v3183
      %3490 = vst [vmem:[#allocation3 + $0x184] sm:$0xf] %v3197
      %3491 = vst [vmem:[#allocation3 + $0x1a8] sm:$0xf] %v3207
      %3492 = vst [vmem:[#allocation3 + $0x1cc] sm:$0xf] %v3221
      %3493 = vst [vmem:[#allocation3 + $0x1f0] sm:$0xf] %v3231
      %3494 = vst [vmem:[#allocation3 + $0x214] sm:$0xf] %v3245
      %3495 = vst [vmem:[#allocation3 + $0x238] sm:$0xf] %v3255
      %3496 = vst [vmem:[#allocation3 + $0x25c] sm:$0xf] %v3269
      %3497 = vst [vmem:[#allocation3 + $0x280] sm:$0xf] %v3279
      %3498 = vst [vmem:[#allocation3 + $0x2a4] sm:$0xf] %v3293
      %3499 = vst [vmem:[#allocation3 + $0x2c8] sm:$0xf] %v3303
      %3500 = vst [vmem:[#allocation3 + $0x2ec] sm:$0xf] %v3317
      %3501 = vst [vmem:[#allocation3 + $0x310] sm:$0xf] %v3327
      %3502 = vst [vmem:[#allocation3 + $0x334] sm:$0xf] %v3341
      %3503 = vst [vmem:[#allocation3 + $0x358] sm:$0xf] %v3351
      %3504 = vst [vmem:[#allocation3 + $0x37c] sm:$0xf] %v3365
      %3505 = vst [vmem:[#allocation3 + $0x3a0] sm:$0xf] %v3375
      %3506 = vst [vmem:[#allocation3 + $0x3c4] sm:$0xf] %v3389
      %3507 = vst [vmem:[#allocation3 + $0x3e8] sm:$0xf] %v3399
      %3508 = vst [vmem:[#allocation3 + $0x40c] sm:$0xf] %v3413
      %3509 = vst [vmem:[#allocation3 + $0x430] sm:$0xf] %v3423
      %3510 = vst [vmem:[#allocation3 + $0x454] sm:$0xf] %v3437
      %3511 = vst [vmem:[#allocation3 + $0x478] sm:$0xf] %v3447
      %v3512 = vld [vmem:[%s812] sm:$0xe]
      %v3513 = vld [vmem:[%s812 + $0x4] sm:$0xf]
      %v3514 = vld [vmem:[%s812 + $0x8] sm:$0x1]
      %v3515 = vld [vmem:[%s812 + $0xc] sm:$0xe]
      %v3516 = vld [vmem:[%s812 + $0x10] sm:$0xf]
      %v3517 = vld [vmem:[%s812 + $0x14] sm:$0x1]
      %v3518 = vld [vmem:[%s812 + $0x18] sm:$0xe]
      %v3519 = vld [vmem:[%s812 + $0x1c] sm:$0xf]
      %v3520 = vld [vmem:[%s812 + $0x20] sm:$0x1]
      %v3521 = vld [vmem:[%s812 + $0x24] sm:$0xe]
      %v3522 = vld [vmem:[%s812 + $0x28] sm:$0xf]
      %v3523 = vld [vmem:[%s812 + $0x2c] sm:$0x1]
      %v3524 = vld [vmem:[%s812 + $0x30] sm:$0xe]
      %v3525 = vld [vmem:[%s812 + $0x34] sm:$0xf]
      %v3526 = vld [vmem:[%s812 + $0x38] sm:$0x1]
      %v3527 = vld [vmem:[%s812 + $0x3c] sm:$0xe]
      %v3528 = vld [vmem:[%s812 + $0x40] sm:$0xf]
      %v3529 = vld [vmem:[%s812 + $0x44] sm:$0x1]
      %v3530 = vld [vmem:[%s812 + $0x48] sm:$0xe]
      %v3531 = vld [vmem:[%s812 + $0x4c] sm:$0xf]
      %v3532 = vld [vmem:[%s812 + $0x50] sm:$0x1]
      %v3533 = vld [vmem:[%s812 + $0x54] sm:$0xe]
      %v3534 = vld [vmem:[%s812 + $0x58] sm:$0xf]
      %v3535 = vld [vmem:[%s812 + $0x5c] sm:$0x1]
      %v3536 = vld [vmem:[%s812 + $0x60] sm:$0xe]
      %v3537 = vld [vmem:[%s812 + $0x64] sm:$0xf]
      %v3538 = vld [vmem:[%s812 + $0x68] sm:$0x1]
      %v3539 = vld [vmem:[%s812 + $0x6c] sm:$0xe]
      %v3540 = vld [vmem:[%s812 + $0x70] sm:$0xf]
      %v3541 = vld [vmem:[%s812 + $0x74] sm:$0x1]
      %v3542 = vld [vmem:[%s812 + $0x78] sm:$0xe]
      %v3543 = vld [vmem:[%s812 + $0x7c] sm:$0xf]
      %v3544 = vld [vmem:[%s812 + $0x80] sm:$0x1]
      %v3545 = vld [vmem:[%s812 + $0x84] sm:$0xe]
      %v3546 = vld [vmem:[%s812 + $0x88] sm:$0xf]
      %v3547 = vld [vmem:[%s812 + $0x8c] sm:$0x1]
      %v3548 = vld [vmem:[%s812 + $0x90] sm:$0xe]
      %v3549 = vld [vmem:[%s812 + $0x94] sm:$0xf]
      %v3550 = vld [vmem:[%s812 + $0x98] sm:$0x1]
      %v3551 = vld [vmem:[%s812 + $0x9c] sm:$0xe]
      %v3552 = vld [vmem:[%s812 + $0xa0] sm:$0xf]
      %v3553 = vld [vmem:[%s812 + $0xa4] sm:$0x1]
      %v3554 = vld [vmem:[%s812 + $0xa8] sm:$0xe]
      %v3555 = vld [vmem:[%s812 + $0xac] sm:$0xf]
      %v3556 = vld [vmem:[%s812 + $0xb0] sm:$0x1]
      %v3557 = vld [vmem:[%s812 + $0xb4] sm:$0xe]
      %v3558 = vld [vmem:[%s812 + $0xb8] sm:$0xf]
      %v3559 = vld [vmem:[%s812 + $0xbc] sm:$0x1]
      %v3608 = vrot.slane %v3512, 5
      %v3609 = vrot.slane %v3608, 4
      %v3610 = vrot.slane %v3513, 5
      %v3611 = vsel %vm1943, %v3609, %v3610
      %v3612 = vrot.slane %v3610, 4
      %v3613 = vrot.slane %v3514, 5
      %v3614 = vsel %vm1943, %v3612, %v3613
      %v3615 = vrot.slane %v3515, 5
      %v3616 = vrot.slane %v3615, 4
      %v3617 = vrot.slane %v3516, 5
      %v3618 = vsel %vm1943, %v3616, %v3617
      %v3619 = vrot.slane %v3617, 4
      %v3620 = vrot.slane %v3517, 5
      %v3621 = vsel %vm1943, %v3619, %v3620
      %v3622 = vrot.slane %v3518, 5
      %v3623 = vrot.slane %v3622, 4
      %v3624 = vrot.slane %v3519, 5
      %v3625 = vsel %vm1943, %v3623, %v3624
      %v3626 = vrot.slane %v3624, 4
      %v3627 = vrot.slane %v3520, 5
      %v3628 = vsel %vm1943, %v3626, %v3627
      %v3629 = vrot.slane %v3521, 5
      %v3630 = vrot.slane %v3629, 4
      %v3631 = vrot.slane %v3522, 5
      %v3632 = vsel %vm1943, %v3630, %v3631
      %v3633 = vrot.slane %v3631, 4
      %v3634 = vrot.slane %v3523, 5
      %v3635 = vsel %vm1943, %v3633, %v3634
      %v3636 = vrot.slane %v3524, 5
      %v3637 = vrot.slane %v3636, 4
      %v3638 = vrot.slane %v3525, 5
      %v3639 = vsel %vm1943, %v3637, %v3638
      %v3640 = vrot.slane %v3638, 4
      %v3641 = vrot.slane %v3526, 5
      %v3642 = vsel %vm1943, %v3640, %v3641
      %v3643 = vrot.slane %v3527, 5
      %v3644 = vrot.slane %v3643, 4
      %v3645 = vrot.slane %v3528, 5
      %v3646 = vsel %vm1943, %v3644, %v3645
      %v3647 = vrot.slane %v3645, 4
      %v3648 = vrot.slane %v3529, 5
      %v3649 = vsel %vm1943, %v3647, %v3648
      %v3650 = vrot.slane %v3530, 5
      %v3651 = vrot.slane %v3650, 4
      %v3652 = vrot.slane %v3531, 5
      %v3653 = vsel %vm1943, %v3651, %v3652
      %v3654 = vrot.slane %v3652, 4
      %v3655 = vrot.slane %v3532, 5
      %v3656 = vsel %vm1943, %v3654, %v3655
      %v3657 = vrot.slane %v3533, 5
      %v3658 = vrot.slane %v3657, 4
      %v3659 = vrot.slane %v3534, 5
      %v3660 = vsel %vm1943, %v3658, %v3659
      %v3661 = vrot.slane %v3659, 4
      %v3662 = vrot.slane %v3535, 5
      %v3663 = vsel %vm1943, %v3661, %v3662
      %v3664 = vrot.slane %v3536, 5
      %v3665 = vrot.slane %v3664, 4
      %v3666 = vrot.slane %v3537, 5
      %v3667 = vsel %vm1943, %v3665, %v3666
      %v3668 = vrot.slane %v3666, 4
      %v3669 = vrot.slane %v3538, 5
      %v3670 = vsel %vm1943, %v3668, %v3669
      %v3671 = vrot.slane %v3539, 5
      %v3672 = vrot.slane %v3671, 4
      %v3673 = vrot.slane %v3540, 5
      %v3674 = vsel %vm1943, %v3672, %v3673
      %v3675 = vrot.slane %v3673, 4
      %v3676 = vrot.slane %v3541, 5
      %v3677 = vsel %vm1943, %v3675, %v3676
      %v3678 = vrot.slane %v3542, 5
      %v3679 = vrot.slane %v3678, 4
      %v3680 = vrot.slane %v3543, 5
      %v3681 = vsel %vm1943, %v3679, %v3680
      %v3682 = vrot.slane %v3680, 4
      %v3683 = vrot.slane %v3544, 5
      %v3684 = vsel %vm1943, %v3682, %v3683
      %v3685 = vrot.slane %v3545, 5
      %v3686 = vrot.slane %v3685, 4
      %v3687 = vrot.slane %v3546, 5
      %v3688 = vsel %vm1943, %v3686, %v3687
      %v3689 = vrot.slane %v3687, 4
      %v3690 = vrot.slane %v3547, 5
      %v3691 = vsel %vm1943, %v3689, %v3690
      %v3692 = vrot.slane %v3548, 5
      %v3693 = vrot.slane %v3692, 4
      %v3694 = vrot.slane %v3549, 5
      %v3695 = vsel %vm1943, %v3693, %v3694
      %v3696 = vrot.slane %v3694, 4
      %v3697 = vrot.slane %v3550, 5
      %v3698 = vsel %vm1943, %v3696, %v3697
      %v3699 = vrot.slane %v3551, 5
      %v3700 = vrot.slane %v3699, 4
      %v3701 = vrot.slane %v3552, 5
      %v3702 = vsel %vm1943, %v3700, %v3701
      %v3703 = vrot.slane %v3701, 4
      %v3704 = vrot.slane %v3553, 5
      %v3705 = vsel %vm1943, %v3703, %v3704
      %v3706 = vrot.slane %v3554, 5
      %v3707 = vrot.slane %v3706, 4
      %v3708 = vrot.slane %v3555, 5
      %v3709 = vsel %vm1943, %v3707, %v3708
      %v3710 = vrot.slane %v3708, 4
      %v3711 = vrot.slane %v3556, 5
      %v3712 = vsel %vm1943, %v3710, %v3711
      %v3713 = vrot.slane %v3557, 5
      %v3714 = vrot.slane %v3713, 4
      %v3715 = vrot.slane %v3558, 5
      %v3716 = vsel %vm1943, %v3714, %v3715
      %v3717 = vrot.slane %v3715, 4
      %v3718 = vrot.slane %v3559, 5
      %v3719 = vsel %vm1943, %v3717, %v3718
      %3752 = vst [vmem:[#allocation3 + $0x20] sm:$0xf] %v3611
      %3753 = vst [vmem:[#allocation3 + $0x44] sm:$0xf] %v3614
      %3754 = vst [vmem:[#allocation3 + $0x68] sm:$0xf] %v3618
      %3755 = vst [vmem:[#allocation3 + $0x8c] sm:$0xf] %v3621
      %3756 = vst [vmem:[#allocation3 + $0xb0] sm:$0xf] %v3625
      %3757 = vst [vmem:[#allocation3 + $0xd4] sm:$0xf] %v3628
      %3758 = vst [vmem:[#allocation3 + $0xf8] sm:$0xf] %v3632
      %3759 = vst [vmem:[#allocation3 + $0x11c] sm:$0xf] %v3635
      %3760 = vst [vmem:[#allocation3 + $0x140] sm:$0xf] %v3639
      %3761 = vst [vmem:[#allocation3 + $0x164] sm:$0xf] %v3642
      %3762 = vst [vmem:[#allocation3 + $0x188] sm:$0xf] %v3646
      %3763 = vst [vmem:[#allocation3 + $0x1ac] sm:$0xf] %v3649
      %3764 = vst [vmem:[#allocation3 + $0x1d0] sm:$0xf] %v3653
      %3765 = vst [vmem:[#allocation3 + $0x1f4] sm:$0xf] %v3656
      %3766 = vst [vmem:[#allocation3 + $0x218] sm:$0xf] %v3660
      %3767 = vst [vmem:[#allocation3 + $0x23c] sm:$0xf] %v3663
      %3768 = vst [vmem:[#allocation3 + $0x260] sm:$0xf] %v3667
      %3769 = vst [vmem:[#allocation3 + $0x284] sm:$0xf] %v3670
      %3770 = vst [vmem:[#allocation3 + $0x2a8] sm:$0xf] %v3674
      %3771 = vst [vmem:[#allocation3 + $0x2cc] sm:$0xf] %v3677
      %3772 = vst [vmem:[#allocation3 + $0x2f0] sm:$0xf] %v3681
      %3773 = vst [vmem:[#allocation3 + $0x314] sm:$0xf] %v3684
      %3774 = vst [vmem:[#allocation3 + $0x338] sm:$0xf] %v3688
      %3775 = vst [vmem:[#allocation3 + $0x35c] sm:$0xf] %v3691
      %3776 = vst [vmem:[#allocation3 + $0x380] sm:$0xf] %v3695
      %3777 = vst [vmem:[#allocation3 + $0x3a4] sm:$0xf] %v3698
      %3778 = vst [vmem:[#allocation3 + $0x3c8] sm:$0xf] %v3702
      %3779 = vst [vmem:[#allocation3 + $0x3ec] sm:$0xf] %v3705
      %3780 = vst [vmem:[#allocation3 + $0x410] sm:$0xf] %v3709
      %3781 = vst [vmem:[#allocation3 + $0x434] sm:$0xf] %v3712
      %3782 = vst [vmem:[#allocation3 + $0x458] sm:$0xf] %v3716
      %3783 = vst [vmem:[#allocation3 + $0x47c] sm:$0xf] %v3719
      %v3784 = vld [vmem:[#allocation3] sm:$0xff]
      %v3785 = vld [vmem:[#allocation3 + $0x8] sm:$0xff]
      %v3786 = vld [vmem:[#allocation3 + $0x10] sm:$0xff]
      %v3787 = vld [vmem:[#allocation3 + $0x18] sm:$0xff]
      %v3788 = vld [vmem:[#allocation3 + $0x20] sm:$0xf]
      %v3789 = vld [vmem:[#allocation3 + $0x24] sm:$0xff]
      %v3790 = vld [vmem:[#allocation3 + $0x2c] sm:$0xff]
      %v3791 = vld [vmem:[#allocation3 + $0x34] sm:$0xff]
      %v3792 = vld [vmem:[#allocation3 + $0x3c] sm:$0xff]
      %v3793 = vld [vmem:[#allocation3 + $0x44] sm:$0xf]
      %v3794 = vld [vmem:[#allocation3 + $0x48] sm:$0xff]
      %v3795 = vld [vmem:[#allocation3 + $0x50] sm:$0xff]
      %v3796 = vld [vmem:[#allocation3 + $0x58] sm:$0xff]
      %v3797 = vld [vmem:[#allocation3 + $0x60] sm:$0xff]
      %v3798 = vld [vmem:[#allocation3 + $0x68] sm:$0xf]
      %v3799 = vld [vmem:[#allocation3 + $0x6c] sm:$0xff]
      %v3800 = vld [vmem:[#allocation3 + $0x74] sm:$0xff]
      %v3801 = vld [vmem:[#allocation3 + $0x7c] sm:$0xff]
      %v3802 = vld [vmem:[#allocation3 + $0x84] sm:$0xff]
      %v3803 = vld [vmem:[#allocation3 + $0x8c] sm:$0xf]
      %v3804 = vld [vmem:[#allocation3 + $0x90] sm:$0xff]
      %v3805 = vld [vmem:[#allocation3 + $0x98] sm:$0xff]
      %v3806 = vld [vmem:[#allocation3 + $0xa0] sm:$0xff]
      %v3807 = vld [vmem:[#allocation3 + $0xa8] sm:$0xff]
      %v3808 = vld [vmem:[#allocation3 + $0xb0] sm:$0xf]
      %v3809 = vld [vmem:[#allocation3 + $0xb4] sm:$0xff]
      %v3810 = vld [vmem:[#allocation3 + $0xbc] sm:$0xff]
      %v3811 = vld [vmem:[#allocation3 + $0xc4] sm:$0xff]
      %v3812 = vld [vmem:[#allocation3 + $0xcc] sm:$0xff]
      %v3813 = vld [vmem:[#allocation3 + $0xd4] sm:$0xf]
      %v3814 = vld [vmem:[#allocation3 + $0xd8] sm:$0xff]
      %v3815 = vld [vmem:[#allocation3 + $0xe0] sm:$0xff]
      %v3816 = vld [vmem:[#allocation3 + $0xe8] sm:$0xff]
      %v3817 = vld [vmem:[#allocation3 + $0xf0] sm:$0xff]
      %v3818 = vld [vmem:[#allocation3 + $0xf8] sm:$0xf]
      %v3819 = vld [vmem:[#allocation3 + $0xfc] sm:$0xff]
      %v3820 = vld [vmem:[#allocation3 + $0x104] sm:$0xff]
      %v3821 = vld [vmem:[#allocation3 + $0x10c] sm:$0xff]
      %v3822 = vld [vmem:[#allocation3 + $0x114] sm:$0xff]
      %v3823 = vld [vmem:[#allocation3 + $0x11c] sm:$0xf]
      %v3824 = vld [vmem:[#allocation3 + $0x120] sm:$0xff]
      %v3825 = vld [vmem:[#allocation3 + $0x128] sm:$0xff]
      %v3826 = vld [vmem:[#allocation3 + $0x130] sm:$0xff]
      %v3827 = vld [vmem:[#allocation3 + $0x138] sm:$0xff]
      %v3828 = vld [vmem:[#allocation3 + $0x140] sm:$0xf]
      %v3829 = vld [vmem:[#allocation3 + $0x144] sm:$0xff]
      %v3830 = vld [vmem:[#allocation3 + $0x14c] sm:$0xff]
      %v3831 = vld [vmem:[#allocation3 + $0x154] sm:$0xff]
      %v3832 = vld [vmem:[#allocation3 + $0x15c] sm:$0xff]
      %v3833 = vld [vmem:[#allocation3 + $0x164] sm:$0xf]
      %v3834 = vld [vmem:[#allocation3 + $0x168] sm:$0xff]
      %v3835 = vld [vmem:[#allocation3 + $0x170] sm:$0xff]
      %v3836 = vld [vmem:[#allocation3 + $0x178] sm:$0xff]
      %v3837 = vld [vmem:[#allocation3 + $0x180] sm:$0xff]
      %v3838 = vld [vmem:[#allocation3 + $0x188] sm:$0xf]
      %v3839 = vld [vmem:[#allocation3 + $0x18c] sm:$0xff]
      %v3840 = vld [vmem:[#allocation3 + $0x194] sm:$0xff]
      %v3841 = vld [vmem:[#allocation3 + $0x19c] sm:$0xff]
      %v3842 = vld [vmem:[#allocation3 + $0x1a4] sm:$0xff]
      %v3843 = vld [vmem:[#allocation3 + $0x1ac] sm:$0xf]
      %v3844 = vld [vmem:[#allocation3 + $0x1b0] sm:$0xff]
      %v3845 = vld [vmem:[#allocation3 + $0x1b8] sm:$0xff]
      %v3846 = vld [vmem:[#allocation3 + $0x1c0] sm:$0xff]
      %v3847 = vld [vmem:[#allocation3 + $0x1c8] sm:$0xff]
      %v3848 = vld [vmem:[#allocation3 + $0x1d0] sm:$0xf]
      %v3849 = vld [vmem:[#allocation3 + $0x1d4] sm:$0xff]
      %v3850 = vld [vmem:[#allocation3 + $0x1dc] sm:$0xff]
      %v3851 = vld [vmem:[#allocation3 + $0x1e4] sm:$0xff]
      %v3852 = vld [vmem:[#allocation3 + $0x1ec] sm:$0xff]
      %v3853 = vld [vmem:[#allocation3 + $0x1f4] sm:$0xf]
      %v3854 = vld [vmem:[#allocation3 + $0x1f8] sm:$0xff]
      %v3855 = vld [vmem:[#allocation3 + $0x200] sm:$0xff]
      %v3856 = vld [vmem:[#allocation3 + $0x208] sm:$0xff]
      %v3857 = vld [vmem:[#allocation3 + $0x210] sm:$0xff]
      %v3858 = vld [vmem:[#allocation3 + $0x218] sm:$0xf]
      %v3859 = vld [vmem:[#allocation3 + $0x21c] sm:$0xff]
      %v3860 = vld [vmem:[#allocation3 + $0x224] sm:$0xff]
      %v3861 = vld [vmem:[#allocation3 + $0x22c] sm:$0xff]
      %v3862 = vld [vmem:[#allocation3 + $0x234] sm:$0xff]
      %v3863 = vld [vmem:[#allocation3 + $0x23c] sm:$0xf]
      %v3864 = vld [vmem:[#allocation3 + $0x240] sm:$0xff]
      %v3865 = vld [vmem:[#allocation3 + $0x248] sm:$0xff]
      %v3866 = vld [vmem:[#allocation3 + $0x250] sm:$0xff]
      %v3867 = vld [vmem:[#allocation3 + $0x258] sm:$0xff]
      %v3868 = vld [vmem:[#allocation3 + $0x260] sm:$0xf]
      %v3869 = vld [vmem:[#allocation3 + $0x264] sm:$0xff]
      %v3870 = vld [vmem:[#allocation3 + $0x26c] sm:$0xff]
      %v3871 = vld [vmem:[#allocation3 + $0x274] sm:$0xff]
      %v3872 = vld [vmem:[#allocation3 + $0x27c] sm:$0xff]
      %v3873 = vld [vmem:[#allocation3 + $0x284] sm:$0xf]
      %v3874 = vld [vmem:[#allocation3 + $0x288] sm:$0xff]
      %v3875 = vld [vmem:[#allocation3 + $0x290] sm:$0xff]
      %v3876 = vld [vmem:[#allocation3 + $0x298] sm:$0xff]
      %v3877 = vld [vmem:[#allocation3 + $0x2a0] sm:$0xff]
      %v3878 = vld [vmem:[#allocation3 + $0x2a8] sm:$0xf]
      %v3879 = vld [vmem:[#allocation3 + $0x2ac] sm:$0xff]
      %v3880 = vld [vmem:[#allocation3 + $0x2b4] sm:$0xff]
      %v3881 = vld [vmem:[#allocation3 + $0x2bc] sm:$0xff]
      %v3882 = vld [vmem:[#allocation3 + $0x2c4] sm:$0xff]
      %v3883 = vld [vmem:[#allocation3 + $0x2cc] sm:$0xf]
      %v3884 = vld [vmem:[#allocation3 + $0x2d0] sm:$0xff]
      %v3885 = vld [vmem:[#allocation3 + $0x2d8] sm:$0xff]
      %v3886 = vld [vmem:[#allocation3 + $0x2e0] sm:$0xff]
      %v3887 = vld [vmem:[#allocation3 + $0x2e8] sm:$0xff]
      %v3888 = vld [vmem:[#allocation3 + $0x2f0] sm:$0xf]
      %v3889 = vld [vmem:[#allocation3 + $0x2f4] sm:$0xff]
      %v3890 = vld [vmem:[#allocation3 + $0x2fc] sm:$0xff]
      %v3891 = vld [vmem:[#allocation3 + $0x304] sm:$0xff]
      %v3892 = vld [vmem:[#allocation3 + $0x30c] sm:$0xff]
      %v3893 = vld [vmem:[#allocation3 + $0x314] sm:$0xf]
      %v3894 = vld [vmem:[#allocation3 + $0x318] sm:$0xff]
      %v3895 = vld [vmem:[#allocation3 + $0x320] sm:$0xff]
      %v3896 = vld [vmem:[#allocation3 + $0x328] sm:$0xff]
      %v3897 = vld [vmem:[#allocation3 + $0x330] sm:$0xff]
      %v3898 = vld [vmem:[#allocation3 + $0x338] sm:$0xf]
      %v3899 = vld [vmem:[#allocation3 + $0x33c] sm:$0xff]
      %v3900 = vld [vmem:[#allocation3 + $0x344] sm:$0xff]
      %v3901 = vld [vmem:[#allocation3 + $0x34c] sm:$0xff]
      %v3902 = vld [vmem:[#allocation3 + $0x354] sm:$0xff]
      %v3903 = vld [vmem:[#allocation3 + $0x35c] sm:$0xf]
      %v3904 = vld [vmem:[#allocation3 + $0x360] sm:$0xff]
      %v3905 = vld [vmem:[#allocation3 + $0x368] sm:$0xff]
      %v3906 = vld [vmem:[#allocation3 + $0x370] sm:$0xff]
      %v3907 = vld [vmem:[#allocation3 + $0x378] sm:$0xff]
      %v3908 = vld [vmem:[#allocation3 + $0x380] sm:$0xf]
      %v3909 = vld [vmem:[#allocation3 + $0x384] sm:$0xff]
      %v3910 = vld [vmem:[#allocation3 + $0x38c] sm:$0xff]
      %v3911 = vld [vmem:[#allocation3 + $0x394] sm:$0xff]
      %v3912 = vld [vmem:[#allocation3 + $0x39c] sm:$0xff]
      %v3913 = vld [vmem:[#allocation3 + $0x3a4] sm:$0xf]
      %v3914 = vld [vmem:[#allocation3 + $0x3a8] sm:$0xff]
      %v3915 = vld [vmem:[#allocation3 + $0x3b0] sm:$0xff]
      %v3916 = vld [vmem:[#allocation3 + $0x3b8] sm:$0xff]
      %v3917 = vld [vmem:[#allocation3 + $0x3c0] sm:$0xff]
      %v3918 = vld [vmem:[#allocation3 + $0x3c8] sm:$0xf]
      %v3919 = vld [vmem:[#allocation3 + $0x3cc] sm:$0xff]
      %v3920 = vld [vmem:[#allocation3 + $0x3d4] sm:$0xff]
      %v3921 = vld [vmem:[#allocation3 + $0x3dc] sm:$0xff]
      %v3922 = vld [vmem:[#allocation3 + $0x3e4] sm:$0xff]
      %v3923 = vld [vmem:[#allocation3 + $0x3ec] sm:$0xf]
      %v3924 = vld [vmem:[#allocation3 + $0x3f0] sm:$0xff]
      %v3925 = vld [vmem:[#allocation3 + $0x3f8] sm:$0xff]
      %v3926 = vld [vmem:[#allocation3 + $0x400] sm:$0xff]
      %v3927 = vld [vmem:[#allocation3 + $0x408] sm:$0xff]
      %v3928 = vld [vmem:[#allocation3 + $0x410] sm:$0xf]
      %v3929 = vld [vmem:[#allocation3 + $0x414] sm:$0xff]
      %v3930 = vld [vmem:[#allocation3 + $0x41c] sm:$0xff]
      %v3931 = vld [vmem:[#allocation3 + $0x424] sm:$0xff]
      %v3932 = vld [vmem:[#allocation3 + $0x42c] sm:$0xff]
      %v3933 = vld [vmem:[#allocation3 + $0x434] sm:$0xf]
      %v3934 = vld [vmem:[#allocation3 + $0x438] sm:$0xff]
      %v3935 = vld [vmem:[#allocation3 + $0x440] sm:$0xff]
      %v3936 = vld [vmem:[#allocation3 + $0x448] sm:$0xff]
      %v3937 = vld [vmem:[#allocation3 + $0x450] sm:$0xff]
      %v3938 = vld [vmem:[#allocation3 + $0x458] sm:$0xf]
      %v3939 = vld [vmem:[#allocation3 + $0x45c] sm:$0xff]
      %v3940 = vld [vmem:[#allocation3 + $0x464] sm:$0xff]
      %v3941 = vld [vmem:[#allocation3 + $0x46c] sm:$0xff]
      %v3942 = vld [vmem:[#allocation3 + $0x474] sm:$0xff]
      %v3943 = vld [vmem:[#allocation3 + $0x47c] sm:$0xf]
      %v3944 = vld [vmem:[%s5] sm:$0xf]
      %v3945 = vld [vmem:[%s5 + $0x4] sm:$0xf]
      %v3946 = vld [vmem:[%s5 + $0x8] sm:$0xf]
      %v3947 = vld [vmem:[%s5 + $0xc] sm:$0xf]
      %v3948 = vld [vmem:[%s5 + $0x10] sm:$0xf]
      %v3949 = vld [vmem:[%s5 + $0x14] sm:$0xf]
      %v3950 = vld [vmem:[%s5 + $0x18] sm:$0xf]
      %v3951 = vld [vmem:[%s5 + $0x1c] sm:$0xf]
      %v3952 = vld [vmem:[%s5 + $0x20] sm:$0xf]
      %v3953 = vld [vmem:[%s5 + $0x24] sm:$0xf]
      %v3954 = vld [vmem:[%s5 + $0x28] sm:$0xf]
      %v3955 = vld [vmem:[%s5 + $0x2c] sm:$0xf]
      %v3956 = vld [vmem:[%s5 + $0x30] sm:$0xf]
      %v3957 = vld [vmem:[%s5 + $0x34] sm:$0xf]
      %v3958 = vld [vmem:[%s5 + $0x38] sm:$0xf]
      %v3959 = vld [vmem:[%s5 + $0x3c] sm:$0xf]
      %v3960 = vld [vmem:[%s5 + $0x40] sm:$0xf]
      %v3961 = vld [vmem:[%s5 + $0x44] sm:$0xf]
      %v3962 = vld [vmem:[%s5 + $0x48] sm:$0xf]
      %v3963 = vld [vmem:[%s5 + $0x4c] sm:$0xf]
      %v3964 = vld [vmem:[%s5 + $0x50] sm:$0xf]
      %v3965 = vld [vmem:[%s5 + $0x54] sm:$0xf]
      %v3966 = vld [vmem:[%s5 + $0x58] sm:$0xf]
      %v3967 = vld [vmem:[%s5 + $0x5c] sm:$0xf]
      %v3968 = vld [vmem:[%s5 + $0x60] sm:$0xf]
      %v3969 = vld [vmem:[%s5 + $0x64] sm:$0xf]
      %v3970 = vld [vmem:[%s5 + $0x68] sm:$0xf]
      %v3971 = vld [vmem:[%s5 + $0x6c] sm:$0xf]
      %v3972 = vld [vmem:[%s5 + $0x70] sm:$0xf]
      %v3973 = vld [vmem:[%s5 + $0x74] sm:$0xf]
      %v3974 = vld [vmem:[%s5 + $0x78] sm:$0xf]
      %v3975 = vld [vmem:[%s5 + $0x7c] sm:$0xf]
      %v3976 = vld [vmem:[%s5 + $0x80] sm:$0xf]
      %v3977 = vld [vmem:[%s5 + $0x84] sm:$0xf]
      %v3978 = vld [vmem:[%s5 + $0x88] sm:$0xf]
      %v3979 = vld [vmem:[%s5 + $0x8c] sm:$0xf]
      %v3980 = vld [vmem:[%s5 + $0x90] sm:$0xf]
      %v3981 = vld [vmem:[%s5 + $0x94] sm:$0xf]
      %v3982 = vld [vmem:[%s5 + $0x98] sm:$0xf]
      %v3983 = vld [vmem:[%s5 + $0x9c] sm:$0xf]
      %v3984 = vld [vmem:[%s5 + $0xa0] sm:$0xf]
      %v3985 = vld [vmem:[%s5 + $0xa4] sm:$0xf]
      %v3986 = vld [vmem:[%s5 + $0xa8] sm:$0xf]
      %v3987 = vld [vmem:[%s5 + $0xac] sm:$0xf]
      %v3988 = vld [vmem:[%s5 + $0xb0] sm:$0xf]
      %v3989 = vld [vmem:[%s5 + $0xb4] sm:$0xf]
      %v3990 = vld [vmem:[%s5 + $0xb8] sm:$0xf]
      %v3991 = vld [vmem:[%s5 + $0xbc] sm:$0xf]
      %v3992 = vld [vmem:[%s5 + $0xc0] sm:$0xf]
      %v3993 = vld [vmem:[%s5 + $0xc4] sm:$0xf]
      %v3994 = vld [vmem:[%s5 + $0xc8] sm:$0xf]
      %v3995 = vld [vmem:[%s5 + $0xcc] sm:$0xf]
      %v3996 = vld [vmem:[%s5 + $0xd0] sm:$0xf]
      %v3997 = vld [vmem:[%s5 + $0xd4] sm:$0xf]
      %v3998 = vld [vmem:[%s5 + $0xd8] sm:$0xf]
      %v3999 = vld [vmem:[%s5 + $0xdc] sm:$0xf]
      %v4000 = vld [vmem:[%s5 + $0xe0] sm:$0xf]
      %v4001 = vld [vmem:[%s5 + $0xe4] sm:$0xf]
      %v4002 = vld [vmem:[%s5 + $0xe8] sm:$0xf]
      %v4003 = vld [vmem:[%s5 + $0xec] sm:$0xf]
      %v4004 = vld [vmem:[%s5 + $0xf0] sm:$0xf]
      %v4005 = vld [vmem:[%s5 + $0xf4] sm:$0xf]
      %v4006 = vld [vmem:[%s5 + $0xf8] sm:$0xf]
      %v4007 = vld [vmem:[%s5 + $0xfc] sm:$0xf]
      %v4008 = vld [vmem:[%s5 + $0x100] sm:$0xf]
      %v4009 = vld [vmem:[%s5 + $0x104] sm:$0xf]
      %v4010 = vld [vmem:[%s5 + $0x108] sm:$0xf]
      %v4011 = vld [vmem:[%s5 + $0x10c] sm:$0xf]
      %v4012 = vld [vmem:[%s5 + $0x110] sm:$0xf]
      %v4013 = vld [vmem:[%s5 + $0x114] sm:$0xf]
      %v4014 = vld [vmem:[%s5 + $0x118] sm:$0xf]
      %v4015 = vld [vmem:[%s5 + $0x11c] sm:$0xf]
      %v4016 = vld [vmem:[%s5 + $0x120] sm:$0xf]
      %v4017 = vld [vmem:[%s5 + $0x124] sm:$0xf]
      %v4018 = vld [vmem:[%s5 + $0x128] sm:$0xf]
      %v4019 = vld [vmem:[%s5 + $0x12c] sm:$0xf]
      %v4020 = vld [vmem:[%s5 + $0x130] sm:$0xf]
      %v4021 = vld [vmem:[%s5 + $0x134] sm:$0xf]
      %v4022 = vld [vmem:[%s5 + $0x138] sm:$0xf]
      %v4023 = vld [vmem:[%s5 + $0x13c] sm:$0xf]
      %v4024 = vld [vmem:[%s5 + $0x140] sm:$0xf]
      %v4025 = vld [vmem:[%s5 + $0x144] sm:$0xf]
      %v4026 = vld [vmem:[%s5 + $0x148] sm:$0xf]
      %v4027 = vld [vmem:[%s5 + $0x14c] sm:$0xf]
      %v4028 = vld [vmem:[%s5 + $0x150] sm:$0xf]
      %v4029 = vld [vmem:[%s5 + $0x154] sm:$0xf]
      %v4030 = vld [vmem:[%s5 + $0x158] sm:$0xf]
      %v4031 = vld [vmem:[%s5 + $0x15c] sm:$0xf]
      %v4032 = vld [vmem:[%s5 + $0x160] sm:$0xf]
      %v4033 = vld [vmem:[%s5 + $0x164] sm:$0xf]
      %v4034 = vld [vmem:[%s5 + $0x168] sm:$0xf]
      %v4035 = vld [vmem:[%s5 + $0x16c] sm:$0xf]
      %v4036 = vld [vmem:[%s5 + $0x170] sm:$0xf]
      %v4037 = vld [vmem:[%s5 + $0x174] sm:$0xf]
      %v4038 = vld [vmem:[%s5 + $0x178] sm:$0xf]
      %v4039 = vld [vmem:[%s5 + $0x17c] sm:$0xf]
      %v4040 = vld [vmem:[%s5 + $0x180] sm:$0xf]
      %v4041 = vld [vmem:[%s5 + $0x184] sm:$0xf]
      %v4042 = vld [vmem:[%s5 + $0x188] sm:$0xf]
      %v4043 = vld [vmem:[%s5 + $0x18c] sm:$0xf]
      %v4044 = vld [vmem:[%s5 + $0x190] sm:$0xf]
      %v4045 = vld [vmem:[%s5 + $0x194] sm:$0xf]
      %v4046 = vld [vmem:[%s5 + $0x198] sm:$0xf]
      %v4047 = vld [vmem:[%s5 + $0x19c] sm:$0xf]
      %v4048 = vld [vmem:[%s5 + $0x1a0] sm:$0xf]
      %v4049 = vld [vmem:[%s5 + $0x1a4] sm:$0xf]
      %v4050 = vld [vmem:[%s5 + $0x1a8] sm:$0xf]
      %v4051 = vld [vmem:[%s5 + $0x1ac] sm:$0xf]
      %v4052 = vld [vmem:[%s5 + $0x1b0] sm:$0xf]
      %v4053 = vld [vmem:[%s5 + $0x1b4] sm:$0xf]
      %v4054 = vld [vmem:[%s5 + $0x1b8] sm:$0xf]
      %v4055 = vld [vmem:[%s5 + $0x1bc] sm:$0xf]
      %v4056 = vld [vmem:[%s5 + $0x1c0] sm:$0xf]
      %v4057 = vld [vmem:[%s5 + $0x1c4] sm:$0xf]
      %v4058 = vld [vmem:[%s5 + $0x1c8] sm:$0xf]
      %v4059 = vld [vmem:[%s5 + $0x1cc] sm:$0xf]
      %v4060 = vld [vmem:[%s5 + $0x1d0] sm:$0xf]
      %v4061 = vld [vmem:[%s5 + $0x1d4] sm:$0xf]
      %v4062 = vld [vmem:[%s5 + $0x1d8] sm:$0xf]
      %v4063 = vld [vmem:[%s5 + $0x1dc] sm:$0xf]
      %v4064 = vld [vmem:[%s5 + $0x1e0] sm:$0xf]
      %v4065 = vld [vmem:[%s5 + $0x1e4] sm:$0xf]
      %v4066 = vld [vmem:[%s5 + $0x1e8] sm:$0xf]
      %v4067 = vld [vmem:[%s5 + $0x1ec] sm:$0xf]
      %v4068 = vld [vmem:[%s5 + $0x1f0] sm:$0xf]
      %v4069 = vld [vmem:[%s5 + $0x1f4] sm:$0xf]
      %v4070 = vld [vmem:[%s5 + $0x1f8] sm:$0xf]
      %v4071 = vld [vmem:[%s5 + $0x1fc] sm:$0xf]
      %v4072 = vld [vmem:[%s5 + $0x200] sm:$0xf]
      %v4073 = vld [vmem:[%s5 + $0x204] sm:$0xf]
      %v4074 = vld [vmem:[%s5 + $0x208] sm:$0xf]
      %v4075 = vld [vmem:[%s5 + $0x20c] sm:$0xf]
      %v4076 = vld [vmem:[%s5 + $0x210] sm:$0xf]
      %v4077 = vld [vmem:[%s5 + $0x214] sm:$0xf]
      %v4078 = vld [vmem:[%s5 + $0x218] sm:$0xf]
      %v4079 = vld [vmem:[%s5 + $0x21c] sm:$0xf]
      %v4080 = vld [vmem:[%s5 + $0x220] sm:$0xf]
      %v4081 = vld [vmem:[%s5 + $0x224] sm:$0xf]
      %v4082 = vld [vmem:[%s5 + $0x228] sm:$0xf]
      %v4083 = vld [vmem:[%s5 + $0x22c] sm:$0xf]
      %v4084 = vld [vmem:[%s5 + $0x230] sm:$0xf]
      %v4085 = vld [vmem:[%s5 + $0x234] sm:$0xf]
      %v4086 = vld [vmem:[%s5 + $0x238] sm:$0xf]
      %v4087 = vld [vmem:[%s5 + $0x23c] sm:$0xf]
      %v4248 = vunpack.c.l.b16 %v3784
      %v4249 = vunpack.c.h.b16 %v3784
      %v4250 = vunpack.c.l.b16 %v3785
      %v4251 = vunpack.c.h.b16 %v3785
      %v4252 = vunpack.c.l.b16 %v3786
      %v4253 = vunpack.c.h.b16 %v3786
      %v4254 = vunpack.c.l.b16 %v3787
      %v4255 = vunpack.c.h.b16 %v3787
      %v4256 = vunpack.c.l.b16 %v3788
      %v4257 = vunpack.c.l.b16 %v3789
      %v4258 = vunpack.c.h.b16 %v3789
      %v4259 = vunpack.c.l.b16 %v3790
      %v4260 = vunpack.c.h.b16 %v3790
      %v4261 = vunpack.c.l.b16 %v3791
      %v4262 = vunpack.c.h.b16 %v3791
      %v4263 = vunpack.c.l.b16 %v3792
      %v4264 = vunpack.c.h.b16 %v3792
      %v4265 = vunpack.c.l.b16 %v3793
      %v4266 = vunpack.c.l.b16 %v3794
      %v4267 = vunpack.c.h.b16 %v3794
      %v4268 = vunpack.c.l.b16 %v3795
      %v4269 = vunpack.c.h.b16 %v3795
      %v4270 = vunpack.c.l.b16 %v3796
      %v4271 = vunpack.c.h.b16 %v3796
      %v4272 = vunpack.c.l.b16 %v3797
      %v4273 = vunpack.c.h.b16 %v3797
      %v4274 = vunpack.c.l.b16 %v3798
      %v4275 = vunpack.c.l.b16 %v3799
      %v4276 = vunpack.c.h.b16 %v3799
      %v4277 = vunpack.c.l.b16 %v3800
      %v4278 = vunpack.c.h.b16 %v3800
      %v4279 = vunpack.c.l.b16 %v3801
      %v4280 = vunpack.c.h.b16 %v3801
      %v4281 = vunpack.c.l.b16 %v3802
      %v4282 = vunpack.c.h.b16 %v3802
      %v4283 = vunpack.c.l.b16 %v3803
      %v4284 = vunpack.c.l.b16 %v3804
      %v4285 = vunpack.c.h.b16 %v3804
      %v4286 = vunpack.c.l.b16 %v3805
      %v4287 = vunpack.c.h.b16 %v3805
      %v4288 = vunpack.c.l.b16 %v3806
      %v4289 = vunpack.c.h.b16 %v3806
      %v4290 = vunpack.c.l.b16 %v3807
      %v4291 = vunpack.c.h.b16 %v3807
      %v4292 = vunpack.c.l.b16 %v3808
      %v4293 = vunpack.c.l.b16 %v3809
      %v4294 = vunpack.c.h.b16 %v3809
      %v4295 = vunpack.c.l.b16 %v3810
      %v4296 = vunpack.c.h.b16 %v3810
      %v4297 = vunpack.c.l.b16 %v3811
      %v4298 = vunpack.c.h.b16 %v3811
      %v4299 = vunpack.c.l.b16 %v3812
      %v4300 = vunpack.c.h.b16 %v3812
      %v4301 = vunpack.c.l.b16 %v3813
      %v4302 = vunpack.c.l.b16 %v3814
      %v4303 = vunpack.c.h.b16 %v3814
      %v4304 = vunpack.c.l.b16 %v3815
      %v4305 = vunpack.c.h.b16 %v3815
      %v4306 = vunpack.c.l.b16 %v3816
      %v4307 = vunpack.c.h.b16 %v3816
      %v4308 = vunpack.c.l.b16 %v3817
      %v4309 = vunpack.c.h.b16 %v3817
      %v4310 = vunpack.c.l.b16 %v3818
      %v4311 = vunpack.c.l.b16 %v3819
      %v4312 = vunpack.c.h.b16 %v3819
      %v4313 = vunpack.c.l.b16 %v3820
      %v4314 = vunpack.c.h.b16 %v3820
      %v4315 = vunpack.c.l.b16 %v3821
      %v4316 = vunpack.c.h.b16 %v3821
      %v4317 = vunpack.c.l.b16 %v3822
      %v4318 = vunpack.c.h.b16 %v3822
      %v4319 = vunpack.c.l.b16 %v3823
      %v4320 = vunpack.c.l.b16 %v3824
      %v4321 = vunpack.c.h.b16 %v3824
      %v4322 = vunpack.c.l.b16 %v3825
      %v4323 = vunpack.c.h.b16 %v3825
      %v4324 = vunpack.c.l.b16 %v3826
      %v4325 = vunpack.c.h.b16 %v3826
      %v4326 = vunpack.c.l.b16 %v3827
      %v4327 = vunpack.c.h.b16 %v3827
      %v4328 = vunpack.c.l.b16 %v3828
      %v4329 = vunpack.c.l.b16 %v3829
      %v4330 = vunpack.c.h.b16 %v3829
      %v4331 = vunpack.c.l.b16 %v3830
      %v4332 = vunpack.c.h.b16 %v3830
      %v4333 = vunpack.c.l.b16 %v3831
      %v4334 = vunpack.c.h.b16 %v3831
      %v4335 = vunpack.c.l.b16 %v3832
      %v4336 = vunpack.c.h.b16 %v3832
      %v4337 = vunpack.c.l.b16 %v3833
      %v4338 = vunpack.c.l.b16 %v3834
      %v4339 = vunpack.c.h.b16 %v3834
      %v4340 = vunpack.c.l.b16 %v3835
      %v4341 = vunpack.c.h.b16 %v3835
      %v4342 = vunpack.c.l.b16 %v3836
      %v4343 = vunpack.c.h.b16 %v3836
      %v4344 = vunpack.c.l.b16 %v3837
      %v4345 = vunpack.c.h.b16 %v3837
      %v4346 = vunpack.c.l.b16 %v3838
      %v4347 = vunpack.c.l.b16 %v3839
      %v4348 = vunpack.c.h.b16 %v3839
      %v4349 = vunpack.c.l.b16 %v3840
      %v4350 = vunpack.c.h.b16 %v3840
      %v4351 = vunpack.c.l.b16 %v3841
      %v4352 = vunpack.c.h.b16 %v3841
      %v4353 = vunpack.c.l.b16 %v3842
      %v4354 = vunpack.c.h.b16 %v3842
      %v4355 = vunpack.c.l.b16 %v3843
      %v4356 = vunpack.c.l.b16 %v3844
      %v4357 = vunpack.c.h.b16 %v3844
      %v4358 = vunpack.c.l.b16 %v3845
      %v4359 = vunpack.c.h.b16 %v3845
      %v4360 = vunpack.c.l.b16 %v3846
      %v4361 = vunpack.c.h.b16 %v3846
      %v4362 = vunpack.c.l.b16 %v3847
      %v4363 = vunpack.c.h.b16 %v3847
      %v4364 = vunpack.c.l.b16 %v3848
      %v4365 = vunpack.c.l.b16 %v3849
      %v4366 = vunpack.c.h.b16 %v3849
      %v4367 = vunpack.c.l.b16 %v3850
      %v4368 = vunpack.c.h.b16 %v3850
      %v4369 = vunpack.c.l.b16 %v3851
      %v4370 = vunpack.c.h.b16 %v3851
      %v4371 = vunpack.c.l.b16 %v3852
      %v4372 = vunpack.c.h.b16 %v3852
      %v4373 = vunpack.c.l.b16 %v3853
      %v4374 = vunpack.c.l.b16 %v3854
      %v4375 = vunpack.c.h.b16 %v3854
      %v4376 = vunpack.c.l.b16 %v3855
      %v4377 = vunpack.c.h.b16 %v3855
      %v4378 = vunpack.c.l.b16 %v3856
      %v4379 = vunpack.c.h.b16 %v3856
      %v4380 = vunpack.c.l.b16 %v3857
      %v4381 = vunpack.c.h.b16 %v3857
      %v4382 = vunpack.c.l.b16 %v3858
      %v4383 = vunpack.c.l.b16 %v3859
      %v4384 = vunpack.c.h.b16 %v3859
      %v4385 = vunpack.c.l.b16 %v3860
      %v4386 = vunpack.c.h.b16 %v3860
      %v4387 = vunpack.c.l.b16 %v3861
      %v4388 = vunpack.c.h.b16 %v3861
      %v4389 = vunpack.c.l.b16 %v3862
      %v4390 = vunpack.c.h.b16 %v3862
      %v4391 = vunpack.c.l.b16 %v3863
      %v4392 = vunpack.c.l.b16 %v3864
      %v4393 = vunpack.c.h.b16 %v3864
      %v4394 = vunpack.c.l.b16 %v3865
      %v4395 = vunpack.c.h.b16 %v3865
      %v4396 = vunpack.c.l.b16 %v3866
      %v4397 = vunpack.c.h.b16 %v3866
      %v4398 = vunpack.c.l.b16 %v3867
      %v4399 = vunpack.c.h.b16 %v3867
      %v4400 = vunpack.c.l.b16 %v3868
      %v4401 = vunpack.c.l.b16 %v3869
      %v4402 = vunpack.c.h.b16 %v3869
      %v4403 = vunpack.c.l.b16 %v3870
      %v4404 = vunpack.c.h.b16 %v3870
      %v4405 = vunpack.c.l.b16 %v3871
      %v4406 = vunpack.c.h.b16 %v3871
      %v4407 = vunpack.c.l.b16 %v3872
      %v4408 = vunpack.c.h.b16 %v3872
      %v4409 = vunpack.c.l.b16 %v3873
      %v4410 = vunpack.c.l.b16 %v3874
      %v4411 = vunpack.c.h.b16 %v3874
      %v4412 = vunpack.c.l.b16 %v3875
      %v4413 = vunpack.c.h.b16 %v3875
      %v4414 = vunpack.c.l.b16 %v3876
      %v4415 = vunpack.c.h.b16 %v3876
      %v4416 = vunpack.c.l.b16 %v3877
      %v4417 = vunpack.c.h.b16 %v3877
      %v4418 = vunpack.c.l.b16 %v3878
      %v4419 = vunpack.c.l.b16 %v3879
      %v4420 = vunpack.c.h.b16 %v3879
      %v4421 = vunpack.c.l.b16 %v3880
      %v4422 = vunpack.c.h.b16 %v3880
      %v4423 = vunpack.c.l.b16 %v3881
      %v4424 = vunpack.c.h.b16 %v3881
      %v4425 = vunpack.c.l.b16 %v3882
      %v4426 = vunpack.c.h.b16 %v3882
      %v4427 = vunpack.c.l.b16 %v3883
      %v4428 = vunpack.c.l.b16 %v3884
      %v4429 = vunpack.c.h.b16 %v3884
      %v4430 = vunpack.c.l.b16 %v3885
      %v4431 = vunpack.c.h.b16 %v3885
      %v4432 = vunpack.c.l.b16 %v3886
      %v4433 = vunpack.c.h.b16 %v3886
      %v4434 = vunpack.c.l.b16 %v3887
      %v4435 = vunpack.c.h.b16 %v3887
      %v4436 = vunpack.c.l.b16 %v3888
      %v4437 = vunpack.c.l.b16 %v3889
      %v4438 = vunpack.c.h.b16 %v3889
      %v4439 = vunpack.c.l.b16 %v3890
      %v4440 = vunpack.c.h.b16 %v3890
      %v4441 = vunpack.c.l.b16 %v3891
      %v4442 = vunpack.c.h.b16 %v3891
      %v4443 = vunpack.c.l.b16 %v3892
      %v4444 = vunpack.c.h.b16 %v3892
      %v4445 = vunpack.c.l.b16 %v3893
      %v4446 = vunpack.c.l.b16 %v3894
      %v4447 = vunpack.c.h.b16 %v3894
      %v4448 = vunpack.c.l.b16 %v3895
      %v4449 = vunpack.c.h.b16 %v3895
      %v4450 = vunpack.c.l.b16 %v3896
      %v4451 = vunpack.c.h.b16 %v3896
      %v4452 = vunpack.c.l.b16 %v3897
      %v4453 = vunpack.c.h.b16 %v3897
      %v4454 = vunpack.c.l.b16 %v3898
      %v4455 = vunpack.c.l.b16 %v3899
      %v4456 = vunpack.c.h.b16 %v3899
      %v4457 = vunpack.c.l.b16 %v3900
      %v4458 = vunpack.c.h.b16 %v3900
      %v4459 = vunpack.c.l.b16 %v3901
      %v4460 = vunpack.c.h.b16 %v3901
      %v4461 = vunpack.c.l.b16 %v3902
      %v4462 = vunpack.c.h.b16 %v3902
      %v4463 = vunpack.c.l.b16 %v3903
      %v4464 = vunpack.c.l.b16 %v3904
      %v4465 = vunpack.c.h.b16 %v3904
      %v4466 = vunpack.c.l.b16 %v3905
      %v4467 = vunpack.c.h.b16 %v3905
      %v4468 = vunpack.c.l.b16 %v3906
      %v4469 = vunpack.c.h.b16 %v3906
      %v4470 = vunpack.c.l.b16 %v3907
      %v4471 = vunpack.c.h.b16 %v3907
      %v4472 = vunpack.c.l.b16 %v3908
      %v4473 = vunpack.c.l.b16 %v3909
      %v4474 = vunpack.c.h.b16 %v3909
      %v4475 = vunpack.c.l.b16 %v3910
      %v4476 = vunpack.c.h.b16 %v3910
      %v4477 = vunpack.c.l.b16 %v3911
      %v4478 = vunpack.c.h.b16 %v3911
      %v4479 = vunpack.c.l.b16 %v3912
      %v4480 = vunpack.c.h.b16 %v3912
      %v4481 = vunpack.c.l.b16 %v3913
      %v4482 = vunpack.c.l.b16 %v3914
      %v4483 = vunpack.c.h.b16 %v3914
      %v4484 = vunpack.c.l.b16 %v3915
      %v4485 = vunpack.c.h.b16 %v3915
      %v4486 = vunpack.c.l.b16 %v3916
      %v4487 = vunpack.c.h.b16 %v3916
      %v4488 = vunpack.c.l.b16 %v3917
      %v4489 = vunpack.c.h.b16 %v3917
      %v4490 = vunpack.c.l.b16 %v3918
      %v4491 = vunpack.c.l.b16 %v3919
      %v4492 = vunpack.c.h.b16 %v3919
      %v4493 = vunpack.c.l.b16 %v3920
      %v4494 = vunpack.c.h.b16 %v3920
      %v4495 = vunpack.c.l.b16 %v3921
      %v4496 = vunpack.c.h.b16 %v3921
      %v4497 = vunpack.c.l.b16 %v3922
      %v4498 = vunpack.c.h.b16 %v3922
      %v4499 = vunpack.c.l.b16 %v3923
      %v4500 = vunpack.c.l.b16 %v3924
      %v4501 = vunpack.c.h.b16 %v3924
      %v4502 = vunpack.c.l.b16 %v3925
      %v4503 = vunpack.c.h.b16 %v3925
      %v4504 = vunpack.c.l.b16 %v3926
      %v4505 = vunpack.c.h.b16 %v3926
      %v4506 = vunpack.c.l.b16 %v3927
      %v4507 = vunpack.c.h.b16 %v3927
      %v4508 = vunpack.c.l.b16 %v3928
      %v4509 = vunpack.c.l.b16 %v3929
      %v4510 = vunpack.c.h.b16 %v3929
      %v4511 = vunpack.c.l.b16 %v3930
      %v4512 = vunpack.c.h.b16 %v3930
      %v4513 = vunpack.c.l.b16 %v3931
      %v4514 = vunpack.c.h.b16 %v3931
      %v4515 = vunpack.c.l.b16 %v3932
      %v4516 = vunpack.c.h.b16 %v3932
      %v4517 = vunpack.c.l.b16 %v3933
      %v4518 = vunpack.c.l.b16 %v3934
      %v4519 = vunpack.c.h.b16 %v3934
      %v4520 = vunpack.c.l.b16 %v3935
      %v4521 = vunpack.c.h.b16 %v3935
      %v4522 = vunpack.c.l.b16 %v3936
      %v4523 = vunpack.c.h.b16 %v3936
      %v4524 = vunpack.c.l.b16 %v3937
      %v4525 = vunpack.c.h.b16 %v3937
      %v4526 = vunpack.c.l.b16 %v3938
      %v4527 = vunpack.c.l.b16 %v3939
      %v4528 = vunpack.c.h.b16 %v3939
      %v4529 = vunpack.c.l.b16 %v3940
      %v4530 = vunpack.c.h.b16 %v3940
      %v4531 = vunpack.c.l.b16 %v3941
      %v4532 = vunpack.c.h.b16 %v3941
      %v4533 = vunpack.c.l.b16 %v3942
      %v4534 = vunpack.c.h.b16 %v3942
      %v4535 = vunpack.c.l.b16 %v3943
      %v4536 = vpack.c.b16 %v4257, %v4248
      %v4537 = vpack.c.b16 %v4258, %v4249
      %v4538 = vpack.c.b16 %v4259, %v4250
      %v4539 = vpack.c.b16 %v4260, %v4251
      %v4540 = vpack.c.b16 %v4261, %v4252
      %v4541 = vpack.c.b16 %v4262, %v4253
      %v4542 = vpack.c.b16 %v4263, %v4254
      %v4543 = vpack.c.b16 %v4264, %v4255
      %v4544 = vpack.c.b16 %v4265, %v4256
      %v4545 = vpack.c.b16 %v4275, %v4266
      %v4546 = vpack.c.b16 %v4276, %v4267
      %v4547 = vpack.c.b16 %v4277, %v4268
      %v4548 = vpack.c.b16 %v4278, %v4269
      %v4549 = vpack.c.b16 %v4279, %v4270
      %v4550 = vpack.c.b16 %v4280, %v4271
      %v4551 = vpack.c.b16 %v4281, %v4272
      %v4552 = vpack.c.b16 %v4282, %v4273
      %v4553 = vpack.c.b16 %v4283, %v4274
      %v4554 = vpack.c.b16 %v4293, %v4284
      %v4555 = vpack.c.b16 %v4294, %v4285
      %v4556 = vpack.c.b16 %v4295, %v4286
      %v4557 = vpack.c.b16 %v4296, %v4287
      %v4558 = vpack.c.b16 %v4297, %v4288
      %v4559 = vpack.c.b16 %v4298, %v4289
      %v4560 = vpack.c.b16 %v4299, %v4290
      %v4561 = vpack.c.b16 %v4300, %v4291
      %v4562 = vpack.c.b16 %v4301, %v4292
      %v4563 = vpack.c.b16 %v4311, %v4302
      %v4564 = vpack.c.b16 %v4312, %v4303
      %v4565 = vpack.c.b16 %v4313, %v4304
      %v4566 = vpack.c.b16 %v4314, %v4305
      %v4567 = vpack.c.b16 %v4315, %v4306
      %v4568 = vpack.c.b16 %v4316, %v4307
      %v4569 = vpack.c.b16 %v4317, %v4308
      %v4570 = vpack.c.b16 %v4318, %v4309
      %v4571 = vpack.c.b16 %v4319, %v4310
      %v4572 = vpack.c.b16 %v4329, %v4320
      %v4573 = vpack.c.b16 %v4330, %v4321
      %v4574 = vpack.c.b16 %v4331, %v4322
      %v4575 = vpack.c.b16 %v4332, %v4323
      %v4576 = vpack.c.b16 %v4333, %v4324
      %v4577 = vpack.c.b16 %v4334, %v4325
      %v4578 = vpack.c.b16 %v4335, %v4326
      %v4579 = vpack.c.b16 %v4336, %v4327
      %v4580 = vpack.c.b16 %v4337, %v4328
      %v4581 = vpack.c.b16 %v4347, %v4338
      %v4582 = vpack.c.b16 %v4348, %v4339
      %v4583 = vpack.c.b16 %v4349, %v4340
      %v4584 = vpack.c.b16 %v4350, %v4341
      %v4585 = vpack.c.b16 %v4351, %v4342
      %v4586 = vpack.c.b16 %v4352, %v4343
      %v4587 = vpack.c.b16 %v4353, %v4344
      %v4588 = vpack.c.b16 %v4354, %v4345
      %v4589 = vpack.c.b16 %v4355, %v4346
      %v4590 = vpack.c.b16 %v4365, %v4356
      %v4591 = vpack.c.b16 %v4366, %v4357
      %v4592 = vpack.c.b16 %v4367, %v4358
      %v4593 = vpack.c.b16 %v4368, %v4359
      %v4594 = vpack.c.b16 %v4369, %v4360
      %v4595 = vpack.c.b16 %v4370, %v4361
      %v4596 = vpack.c.b16 %v4371, %v4362
      %v4597 = vpack.c.b16 %v4372, %v4363
      %v4598 = vpack.c.b16 %v4373, %v4364
      %v4599 = vpack.c.b16 %v4383, %v4374
      %v4600 = vpack.c.b16 %v4384, %v4375
      %v4601 = vpack.c.b16 %v4385, %v4376
      %v4602 = vpack.c.b16 %v4386, %v4377
      %v4603 = vpack.c.b16 %v4387, %v4378
      %v4604 = vpack.c.b16 %v4388, %v4379
      %v4605 = vpack.c.b16 %v4389, %v4380
      %v4606 = vpack.c.b16 %v4390, %v4381
      %v4607 = vpack.c.b16 %v4391, %v4382
      %v4608 = vpack.c.b16 %v4401, %v4392
      %v4609 = vpack.c.b16 %v4402, %v4393
      %v4610 = vpack.c.b16 %v4403, %v4394
      %v4611 = vpack.c.b16 %v4404, %v4395
      %v4612 = vpack.c.b16 %v4405, %v4396
      %v4613 = vpack.c.b16 %v4406, %v4397
      %v4614 = vpack.c.b16 %v4407, %v4398
      %v4615 = vpack.c.b16 %v4408, %v4399
      %v4616 = vpack.c.b16 %v4409, %v4400
      %v4617 = vpack.c.b16 %v4419, %v4410
      %v4618 = vpack.c.b16 %v4420, %v4411
      %v4619 = vpack.c.b16 %v4421, %v4412
      %v4620 = vpack.c.b16 %v4422, %v4413
      %v4621 = vpack.c.b16 %v4423, %v4414
      %v4622 = vpack.c.b16 %v4424, %v4415
      %v4623 = vpack.c.b16 %v4425, %v4416
      %v4624 = vpack.c.b16 %v4426, %v4417
      %v4625 = vpack.c.b16 %v4427, %v4418
      %v4626 = vpack.c.b16 %v4437, %v4428
      %v4627 = vpack.c.b16 %v4438, %v4429
      %v4628 = vpack.c.b16 %v4439, %v4430
      %v4629 = vpack.c.b16 %v4440, %v4431
      %v4630 = vpack.c.b16 %v4441, %v4432
      %v4631 = vpack.c.b16 %v4442, %v4433
      %v4632 = vpack.c.b16 %v4443, %v4434
      %v4633 = vpack.c.b16 %v4444, %v4435
      %v4634 = vpack.c.b16 %v4445, %v4436
      %v4635 = vpack.c.b16 %v4455, %v4446
      %v4636 = vpack.c.b16 %v4456, %v4447
      %v4637 = vpack.c.b16 %v4457, %v4448
      %v4638 = vpack.c.b16 %v4458, %v4449
      %v4639 = vpack.c.b16 %v4459, %v4450
      %v4640 = vpack.c.b16 %v4460, %v4451
      %v4641 = vpack.c.b16 %v4461, %v4452
      %v4642 = vpack.c.b16 %v4462, %v4453
      %v4643 = vpack.c.b16 %v4463, %v4454
      %v4644 = vpack.c.b16 %v4473, %v4464
      %v4645 = vpack.c.b16 %v4474, %v4465
      %v4646 = vpack.c.b16 %v4475, %v4466
      %v4647 = vpack.c.b16 %v4476, %v4467
      %v4648 = vpack.c.b16 %v4477, %v4468
      %v4649 = vpack.c.b16 %v4478, %v4469
      %v4650 = vpack.c.b16 %v4479, %v4470
      %v4651 = vpack.c.b16 %v4480, %v4471
      %v4652 = vpack.c.b16 %v4481, %v4472
      %v4653 = vpack.c.b16 %v4491, %v4482
      %v4654 = vpack.c.b16 %v4492, %v4483
      %v4655 = vpack.c.b16 %v4493, %v4484
      %v4656 = vpack.c.b16 %v4494, %v4485
      %v4657 = vpack.c.b16 %v4495, %v4486
      %v4658 = vpack.c.b16 %v4496, %v4487
      %v4659 = vpack.c.b16 %v4497, %v4488
      %v4660 = vpack.c.b16 %v4498, %v4489
      %v4661 = vpack.c.b16 %v4499, %v4490
      %v4662 = vpack.c.b16 %v4509, %v4500
      %v4663 = vpack.c.b16 %v4510, %v4501
      %v4664 = vpack.c.b16 %v4511, %v4502
      %v4665 = vpack.c.b16 %v4512, %v4503
      %v4666 = vpack.c.b16 %v4513, %v4504
      %v4667 = vpack.c.b16 %v4514, %v4505
      %v4668 = vpack.c.b16 %v4515, %v4506
      %v4669 = vpack.c.b16 %v4516, %v4507
      %v4670 = vpack.c.b16 %v4517, %v4508
      %v4671 = vpack.c.b16 %v4527, %v4518
      %v4672 = vpack.c.b16 %v4528, %v4519
      %v4673 = vpack.c.b16 %v4529, %v4520
      %v4674 = vpack.c.b16 %v4530, %v4521
      %v4675 = vpack.c.b16 %v4531, %v4522
      %v4676 = vpack.c.b16 %v4532, %v4523
      %v4677 = vpack.c.b16 %v4533, %v4524
      %v4678 = vpack.c.b16 %v4534, %v4525
      %v4679 = vpack.c.b16 %v4535, %v4526
      %v4968 = vunpack.c.l.b16 %v3944
      %v4969 = vunpack.c.l.b16 %v3945
      %v4970 = vunpack.c.l.b16 %v3946
      %v4971 = vunpack.c.l.b16 %v3947
      %v4972 = vunpack.c.l.b16 %v3948
      %v4973 = vunpack.c.l.b16 %v3949
      %v4974 = vunpack.c.l.b16 %v3950
      %v4975 = vunpack.c.l.b16 %v3951
      %v4976 = vunpack.c.l.b16 %v3952
      %v4977 = vunpack.c.l.b16 %v3953
      %v4978 = vunpack.c.l.b16 %v3954
      %v4979 = vunpack.c.l.b16 %v3955
      %v4980 = vunpack.c.l.b16 %v3956
      %v4981 = vunpack.c.l.b16 %v3957
      %v4982 = vunpack.c.l.b16 %v3958
      %v4983 = vunpack.c.l.b16 %v3959
      %v4984 = vunpack.c.l.b16 %v3960
      %v4985 = vunpack.c.l.b16 %v3961
      %v4986 = vunpack.c.l.b16 %v3962
      %v4987 = vunpack.c.l.b16 %v3963
      %v4988 = vunpack.c.l.b16 %v3964
      %v4989 = vunpack.c.l.b16 %v3965
      %v4990 = vunpack.c.l.b16 %v3966
      %v4991 = vunpack.c.l.b16 %v3967
      %v4992 = vunpack.c.l.b16 %v3968
      %v4993 = vunpack.c.l.b16 %v3969
      %v4994 = vunpack.c.l.b16 %v3970
      %v4995 = vunpack.c.l.b16 %v3971
      %v4996 = vunpack.c.l.b16 %v3972
      %v4997 = vunpack.c.l.b16 %v3973
      %v4998 = vunpack.c.l.b16 %v3974
      %v4999 = vunpack.c.l.b16 %v3975
      %v5000 = vunpack.c.l.b16 %v3976
      %v5001 = vunpack.c.l.b16 %v3977
      %v5002 = vunpack.c.l.b16 %v3978
      %v5003 = vunpack.c.l.b16 %v3979
      %v5004 = vunpack.c.l.b16 %v3980
      %v5005 = vunpack.c.l.b16 %v3981
      %v5006 = vunpack.c.l.b16 %v3982
      %v5007 = vunpack.c.l.b16 %v3983
      %v5008 = vunpack.c.l.b16 %v3984
      %v5009 = vunpack.c.l.b16 %v3985
      %v5010 = vunpack.c.l.b16 %v3986
      %v5011 = vunpack.c.l.b16 %v3987
      %v5012 = vunpack.c.l.b16 %v3988
      %v5013 = vunpack.c.l.b16 %v3989
      %v5014 = vunpack.c.l.b16 %v3990
      %v5015 = vunpack.c.l.b16 %v3991
      %v5016 = vunpack.c.l.b16 %v3992
      %v5017 = vunpack.c.l.b16 %v3993
      %v5018 = vunpack.c.l.b16 %v3994
      %v5019 = vunpack.c.l.b16 %v3995
      %v5020 = vunpack.c.l.b16 %v3996
      %v5021 = vunpack.c.l.b16 %v3997
      %v5022 = vunpack.c.l.b16 %v3998
      %v5023 = vunpack.c.l.b16 %v3999
      %v5024 = vunpack.c.l.b16 %v4000
      %v5025 = vunpack.c.l.b16 %v4001
      %v5026 = vunpack.c.l.b16 %v4002
      %v5027 = vunpack.c.l.b16 %v4003
      %v5028 = vunpack.c.l.b16 %v4004
      %v5029 = vunpack.c.l.b16 %v4005
      %v5030 = vunpack.c.l.b16 %v4006
      %v5031 = vunpack.c.l.b16 %v4007
      %v5032 = vunpack.c.l.b16 %v4008
      %v5033 = vunpack.c.l.b16 %v4009
      %v5034 = vunpack.c.l.b16 %v4010
      %v5035 = vunpack.c.l.b16 %v4011
      %v5036 = vunpack.c.l.b16 %v4012
      %v5037 = vunpack.c.l.b16 %v4013
      %v5038 = vunpack.c.l.b16 %v4014
      %v5039 = vunpack.c.l.b16 %v4015
      %v5040 = vunpack.c.l.b16 %v4016
      %v5041 = vunpack.c.l.b16 %v4017
      %v5042 = vunpack.c.l.b16 %v4018
      %v5043 = vunpack.c.l.b16 %v4019
      %v5044 = vunpack.c.l.b16 %v4020
      %v5045 = vunpack.c.l.b16 %v4021
      %v5046 = vunpack.c.l.b16 %v4022
      %v5047 = vunpack.c.l.b16 %v4023
      %v5048 = vunpack.c.l.b16 %v4024
      %v5049 = vunpack.c.l.b16 %v4025
      %v5050 = vunpack.c.l.b16 %v4026
      %v5051 = vunpack.c.l.b16 %v4027
      %v5052 = vunpack.c.l.b16 %v4028
      %v5053 = vunpack.c.l.b16 %v4029
      %v5054 = vunpack.c.l.b16 %v4030
      %v5055 = vunpack.c.l.b16 %v4031
      %v5056 = vunpack.c.l.b16 %v4032
      %v5057 = vunpack.c.l.b16 %v4033
      %v5058 = vunpack.c.l.b16 %v4034
      %v5059 = vunpack.c.l.b16 %v4035
      %v5060 = vunpack.c.l.b16 %v4036
      %v5061 = vunpack.c.l.b16 %v4037
      %v5062 = vunpack.c.l.b16 %v4038
      %v5063 = vunpack.c.l.b16 %v4039
      %v5064 = vunpack.c.l.b16 %v4040
      %v5065 = vunpack.c.l.b16 %v4041
      %v5066 = vunpack.c.l.b16 %v4042
      %v5067 = vunpack.c.l.b16 %v4043
      %v5068 = vunpack.c.l.b16 %v4044
      %v5069 = vunpack.c.l.b16 %v4045
      %v5070 = vunpack.c.l.b16 %v4046
      %v5071 = vunpack.c.l.b16 %v4047
      %v5072 = vunpack.c.l.b16 %v4048
      %v5073 = vunpack.c.l.b16 %v4049
      %v5074 = vunpack.c.l.b16 %v4050
      %v5075 = vunpack.c.l.b16 %v4051
      %v5076 = vunpack.c.l.b16 %v4052
      %v5077 = vunpack.c.l.b16 %v4053
      %v5078 = vunpack.c.l.b16 %v4054
      %v5079 = vunpack.c.l.b16 %v4055
      %v5080 = vunpack.c.l.b16 %v4056
      %v5081 = vunpack.c.l.b16 %v4057
      %v5082 = vunpack.c.l.b16 %v4058
      %v5083 = vunpack.c.l.b16 %v4059
      %v5084 = vunpack.c.l.b16 %v4060
      %v5085 = vunpack.c.l.b16 %v4061
      %v5086 = vunpack.c.l.b16 %v4062
      %v5087 = vunpack.c.l.b16 %v4063
      %v5088 = vunpack.c.l.b16 %v4064
      %v5089 = vunpack.c.l.b16 %v4065
      %v5090 = vunpack.c.l.b16 %v4066
      %v5091 = vunpack.c.l.b16 %v4067
      %v5092 = vunpack.c.l.b16 %v4068
      %v5093 = vunpack.c.l.b16 %v4069
      %v5094 = vunpack.c.l.b16 %v4070
      %v5095 = vunpack.c.l.b16 %v4071
      %v5096 = vunpack.c.l.b16 %v4072
      %v5097 = vunpack.c.l.b16 %v4073
      %v5098 = vunpack.c.l.b16 %v4074
      %v5099 = vunpack.c.l.b16 %v4075
      %v5100 = vunpack.c.l.b16 %v4076
      %v5101 = vunpack.c.l.b16 %v4077
      %v5102 = vunpack.c.l.b16 %v4078
      %v5103 = vunpack.c.l.b16 %v4079
      %v5104 = vunpack.c.l.b16 %v4080
      %v5105 = vunpack.c.l.b16 %v4081
      %v5106 = vunpack.c.l.b16 %v4082
      %v5107 = vunpack.c.l.b16 %v4083
      %v5108 = vunpack.c.l.b16 %v4084
      %v5109 = vunpack.c.l.b16 %v4085
      %v5110 = vunpack.c.l.b16 %v4086
      %v5111 = vunpack.c.l.b16 %v4087
      %v5112 = vpack.c.b16 %v4969, %v4968
      %v5113 = vpack.c.b16 %v4971, %v4970
      %v5114 = vpack.c.b16 %v4973, %v4972
      %v5115 = vpack.c.b16 %v4975, %v4974
      %v5116 = vpack.c.b16 %v4977, %v4976
      %v5117 = vpack.c.b16 %v4979, %v4978
      %v5118 = vpack.c.b16 %v4981, %v4980
      %v5119 = vpack.c.b16 %v4983, %v4982
      %v5120 = vpack.c.b16 %v4985, %v4984
      %v5121 = vpack.c.b16 %v4987, %v4986
      %v5122 = vpack.c.b16 %v4989, %v4988
      %v5123 = vpack.c.b16 %v4991, %v4990
      %v5124 = vpack.c.b16 %v4993, %v4992
      %v5125 = vpack.c.b16 %v4995, %v4994
      %v5126 = vpack.c.b16 %v4997, %v4996
      %v5127 = vpack.c.b16 %v4999, %v4998
      %v5128 = vpack.c.b16 %v5001, %v5000
      %v5129 = vpack.c.b16 %v5003, %v5002
      %v5130 = vpack.c.b16 %v5005, %v5004
      %v5131 = vpack.c.b16 %v5007, %v5006
      %v5132 = vpack.c.b16 %v5009, %v5008
      %v5133 = vpack.c.b16 %v5011, %v5010
      %v5134 = vpack.c.b16 %v5013, %v5012
      %v5135 = vpack.c.b16 %v5015, %v5014
      %v5136 = vpack.c.b16 %v5017, %v5016
      %v5137 = vpack.c.b16 %v5019, %v5018
      %v5138 = vpack.c.b16 %v5021, %v5020
      %v5139 = vpack.c.b16 %v5023, %v5022
      %v5140 = vpack.c.b16 %v5025, %v5024
      %v5141 = vpack.c.b16 %v5027, %v5026
      %v5142 = vpack.c.b16 %v5029, %v5028
      %v5143 = vpack.c.b16 %v5031, %v5030
      %v5144 = vpack.c.b16 %v5033, %v5032
      %v5145 = vpack.c.b16 %v5035, %v5034
      %v5146 = vpack.c.b16 %v5037, %v5036
      %v5147 = vpack.c.b16 %v5039, %v5038
      %v5148 = vpack.c.b16 %v5041, %v5040
      %v5149 = vpack.c.b16 %v5043, %v5042
      %v5150 = vpack.c.b16 %v5045, %v5044
      %v5151 = vpack.c.b16 %v5047, %v5046
      %v5152 = vpack.c.b16 %v5049, %v5048
      %v5153 = vpack.c.b16 %v5051, %v5050
      %v5154 = vpack.c.b16 %v5053, %v5052
      %v5155 = vpack.c.b16 %v5055, %v5054
      %v5156 = vpack.c.b16 %v5057, %v5056
      %v5157 = vpack.c.b16 %v5059, %v5058
      %v5158 = vpack.c.b16 %v5061, %v5060
      %v5159 = vpack.c.b16 %v5063, %v5062
      %v5160 = vpack.c.b16 %v5065, %v5064
      %v5161 = vpack.c.b16 %v5067, %v5066
      %v5162 = vpack.c.b16 %v5069, %v5068
      %v5163 = vpack.c.b16 %v5071, %v5070
      %v5164 = vpack.c.b16 %v5073, %v5072
      %v5165 = vpack.c.b16 %v5075, %v5074
      %v5166 = vpack.c.b16 %v5077, %v5076
      %v5167 = vpack.c.b16 %v5079, %v5078
      %v5168 = vpack.c.b16 %v5081, %v5080
      %v5169 = vpack.c.b16 %v5083, %v5082
      %v5170 = vpack.c.b16 %v5085, %v5084
      %v5171 = vpack.c.b16 %v5087, %v5086
      %v5172 = vpack.c.b16 %v5089, %v5088
      %v5173 = vpack.c.b16 %v5091, %v5090
      %v5174 = vpack.c.b16 %v5093, %v5092
      %v5175 = vpack.c.b16 %v5095, %v5094
      %v5176 = vpack.c.b16 %v5097, %v5096
      %v5177 = vpack.c.b16 %v5099, %v5098
      %v5178 = vpack.c.b16 %v5101, %v5100
      %v5179 = vpack.c.b16 %v5103, %v5102
      %v5180 = vpack.c.b16 %v5105, %v5104
      %v5181 = vpack.c.b16 %v5107, %v5106
      %v5182 = vpack.c.b16 %v5109, %v5108
      %v5183 = vpack.c.b16 %v5111, %v5110
      %5256 = vmatprep.subr.bf16.mxu0 0
      %5257 = vmatpush1.bf16.msra.mxu0 %v5119
      %5258 = vmatprep.subr.bf16.mxu0 0
      %5259 = vmatpush1.bf16.msra.mxu0 %v5118
      %5260 = vmatprep.subr.bf16.mxu0 0
      %5261 = vmatpush1.bf16.msra.mxu0 %v5117
      %5262 = vmatprep.subr.bf16.mxu0 0
      %5263 = vmatpush1.bf16.msra.mxu0 %v5116
      %5264 = vmatprep.subr.bf16.mxu0 0
      %5265 = vmatpush1.bf16.msra.mxu0 %v5115
      %5266 = vmatprep.subr.bf16.mxu0 0
      %5267 = vmatpush1.bf16.msra.mxu0 %v5114
      %5268 = vmatprep.subr.bf16.mxu0 0
      %5269 = vmatpush1.bf16.msra.mxu0 %v5113
      %5270 = vmatprep.subr.bf16.mxu0 0
      %5271 = vmatpush1.bf16.msra.mxu0 %v5112
      %5272 = vmatprep.subr.bf16.mxu0 0
      %5273 = vmatpush2.bf16.msra.mxu0 %v5127
      %5274 = vmatprep.subr.bf16.mxu0 0
      %5275 = vmatpush2.bf16.msra.mxu0 %v5126
      %5276 = vmatprep.subr.bf16.mxu0 0
      %5277 = vmatpush2.bf16.msra.mxu0 %v5125
      %5278 = vmatprep.subr.bf16.mxu0 0
      %5279 = vmatpush2.bf16.msra.mxu0 %v5124
      %5280 = vmatprep.subr.bf16.mxu0 0
      %5281 = vmatpush2.bf16.msra.mxu0 %v5123
      %5282 = vmatprep.subr.bf16.mxu0 0
      %5283 = vmatpush2.bf16.msra.mxu0 %v5122
      %5284 = vmatprep.subr.bf16.mxu0 0
      %5285 = vmatpush2.bf16.msra.mxu0 %v5121
      %5286 = vmatprep.subr.bf16.mxu0 0
      %5287 = vmatpush2.bf16.msra.mxu0 %v5120
      %5288 = vmatprep.mubr.bf16.mxu0 %v4537
      %5289 = vmatmul.mubr.bf16.gmra.mxu0 %v4536
      %v5290 = vpop.f32.mrf.mxu0
      %v5291 = vadd.f32 0.0, %v5290
      %v5292 = vpop.f32.mrf.mxu0
      %v5293 = vpop.f32.mrf.mxu0
      %v5294 = vadd.f32 0.0, %v5293
      %v5295 = vpop.f32.mrf.mxu0
      %5296 = vmatprep.mubr.bf16.mxu0 %v4546
      %5297 = vmatmul.mubr.bf16.gmra.mxu0 %v4545
      %v5298 = vpop.f32.mrf.mxu0
      %v5299 = vadd.f32 0.0, %v5298
      %v5300 = vpop.f32.mrf.mxu0
      %v5301 = vpop.f32.mrf.mxu0
      %v5302 = vadd.f32 0.0, %v5301
      %v5303 = vpop.f32.mrf.mxu0
      %5304 = vmatprep.mubr.bf16.mxu0 %v4555
      %5305 = vmatmul.mubr.bf16.gmra.mxu0 %v4554
      %v5306 = vpop.f32.mrf.mxu0
      %v5307 = vadd.f32 0.0, %v5306
      %v5308 = vpop.f32.mrf.mxu0
      %v5309 = vpop.f32.mrf.mxu0
      %v5310 = vadd.f32 0.0, %v5309
      %v5311 = vpop.f32.mrf.mxu0
      %5312 = vmatprep.mubr.bf16.mxu0 %v4564
      %5313 = vmatmul.mubr.bf16.gmra.mxu0 %v4563
      %v5314 = vpop.f32.mrf.mxu0
      %v5315 = vadd.f32 0.0, %v5314
      %v5316 = vpop.f32.mrf.mxu0
      %v5317 = vpop.f32.mrf.mxu0
      %v5318 = vadd.f32 0.0, %v5317
      %v5319 = vpop.f32.mrf.mxu0
      %5320 = vmatprep.mubr.bf16.mxu0 %v4573
      %5321 = vmatmul.mubr.bf16.gmra.mxu0 %v4572
      %v5322 = vpop.f32.mrf.mxu0
      %v5323 = vadd.f32 0.0, %v5322
      %v5324 = vpop.f32.mrf.mxu0
      %v5325 = vpop.f32.mrf.mxu0
      %v5326 = vadd.f32 0.0, %v5325
      %v5327 = vpop.f32.mrf.mxu0
      %5328 = vmatprep.mubr.bf16.mxu0 %v4582
      %5329 = vmatmul.mubr.bf16.gmra.mxu0 %v4581
      %v5330 = vpop.f32.mrf.mxu0
      %v5331 = vadd.f32 0.0, %v5330
      %v5332 = vpop.f32.mrf.mxu0
      %v5333 = vpop.f32.mrf.mxu0
      %v5334 = vadd.f32 0.0, %v5333
      %v5335 = vpop.f32.mrf.mxu0
      %5336 = vmatprep.mubr.bf16.mxu0 %v4591
      %5337 = vmatmul.mubr.bf16.gmra.mxu0 %v4590
      %v5338 = vpop.f32.mrf.mxu0
      %v5339 = vadd.f32 0.0, %v5338
      %v5340 = vpop.f32.mrf.mxu0
      %v5341 = vpop.f32.mrf.mxu0
      %v5342 = vadd.f32 0.0, %v5341
      %v5343 = vpop.f32.mrf.mxu0
      %5344 = vmatprep.mubr.bf16.mxu0 %v4600
      %5345 = vmatmul.mubr.bf16.gmra.mxu0 %v4599
      %v5346 = vpop.f32.mrf.mxu0
      %v5347 = vadd.f32 0.0, %v5346
      %v5348 = vpop.f32.mrf.mxu0
      %v5349 = vpop.f32.mrf.mxu0
      %v5350 = vadd.f32 0.0, %v5349
      %v5351 = vpop.f32.mrf.mxu0
      %5352 = vmatprep.mubr.bf16.mxu0 %v4609
      %5353 = vmatmul.mubr.bf16.gmra.mxu0 %v4608
      %v5354 = vpop.f32.mrf.mxu0
      %v5355 = vadd.f32 0.0, %v5354
      %v5356 = vpop.f32.mrf.mxu0
      %v5357 = vpop.f32.mrf.mxu0
      %v5358 = vadd.f32 0.0, %v5357
      %v5359 = vpop.f32.mrf.mxu0
      %5360 = vmatprep.mubr.bf16.mxu0 %v4618
      %5361 = vmatmul.mubr.bf16.gmra.mxu0 %v4617
      %v5362 = vpop.f32.mrf.mxu0
      %v5363 = vadd.f32 0.0, %v5362
      %v5364 = vpop.f32.mrf.mxu0
      %v5365 = vpop.f32.mrf.mxu0
      %v5366 = vadd.f32 0.0, %v5365
      %v5367 = vpop.f32.mrf.mxu0
      %5368 = vmatprep.mubr.bf16.mxu0 %v4627
      %5369 = vmatmul.mubr.bf16.gmra.mxu0 %v4626
      %v5370 = vpop.f32.mrf.mxu0
      %v5371 = vadd.f32 0.0, %v5370
      %v5372 = vpop.f32.mrf.mxu0
      %v5373 = vpop.f32.mrf.mxu0
      %v5374 = vadd.f32 0.0, %v5373
      %v5375 = vpop.f32.mrf.mxu0
      %5376 = vmatprep.mubr.bf16.mxu0 %v4636
      %5377 = vmatmul.mubr.bf16.gmra.mxu0 %v4635
      %v5378 = vpop.f32.mrf.mxu0
      %v5379 = vadd.f32 0.0, %v5378
      %v5380 = vpop.f32.mrf.mxu0
      %v5381 = vpop.f32.mrf.mxu0
      %v5382 = vadd.f32 0.0, %v5381
      %v5383 = vpop.f32.mrf.mxu0
      %5384 = vmatprep.mubr.bf16.mxu0 %v4645
      %5385 = vmatmul.mubr.bf16.gmra.mxu0 %v4644
      %v5386 = vpop.f32.mrf.mxu0
      %v5387 = vadd.f32 0.0, %v5386
      %v5388 = vpop.f32.mrf.mxu0
      %v5389 = vpop.f32.mrf.mxu0
      %v5390 = vadd.f32 0.0, %v5389
      %v5391 = vpop.f32.mrf.mxu0
      %5392 = vmatprep.mubr.bf16.mxu0 %v4654
      %5393 = vmatmul.mubr.bf16.gmra.mxu0 %v4653
      %v5394 = vpop.f32.mrf.mxu0
      %v5395 = vadd.f32 0.0, %v5394
      %v5396 = vpop.f32.mrf.mxu0
      %v5397 = vpop.f32.mrf.mxu0
      %v5398 = vadd.f32 0.0, %v5397
      %v5399 = vpop.f32.mrf.mxu0
      %5400 = vmatprep.mubr.bf16.mxu0 %v4663
      %5401 = vmatmul.mubr.bf16.gmra.mxu0 %v4662
      %v5402 = vpop.f32.mrf.mxu0
      %v5403 = vadd.f32 0.0, %v5402
      %v5404 = vpop.f32.mrf.mxu0
      %v5405 = vpop.f32.mrf.mxu0
      %v5406 = vadd.f32 0.0, %v5405
      %v5407 = vpop.f32.mrf.mxu0
      %5408 = vmatprep.mubr.bf16.mxu0 %v4672
      %5409 = vmatmul.mubr.bf16.gmra.mxu0 %v4671
      %v5410 = vpop.f32.mrf.mxu0
      %v5411 = vadd.f32 0.0, %v5410
      %v5412 = vpop.f32.mrf.mxu0
      %v5413 = vpop.f32.mrf.mxu0
      %v5414 = vadd.f32 0.0, %v5413
      %v5415 = vpop.f32.mrf.mxu0
      %5416 = vdwg.mxu0
      %5417 = vmatprep.subr.bf16.mxu0 0
      %5418 = vmatpush1.bf16.msra.mxu0 %v5135
      %5419 = vmatprep.subr.bf16.mxu0 0
      %5420 = vmatpush1.bf16.msra.mxu0 %v5134
      %5421 = vmatprep.subr.bf16.mxu0 0
      %5422 = vmatpush1.bf16.msra.mxu0 %v5133
      %5423 = vmatprep.subr.bf16.mxu0 0
      %5424 = vmatpush1.bf16.msra.mxu0 %v5132
      %5425 = vmatprep.subr.bf16.mxu0 0
      %5426 = vmatpush1.bf16.msra.mxu0 %v5131
      %5427 = vmatprep.subr.bf16.mxu0 0
      %5428 = vmatpush1.bf16.msra.mxu0 %v5130
      %5429 = vmatprep.subr.bf16.mxu0 0
      %5430 = vmatpush1.bf16.msra.mxu0 %v5129
      %5431 = vmatprep.subr.bf16.mxu0 0
      %5432 = vmatpush1.bf16.msra.mxu0 %v5128
      %5433 = vmatprep.subr.bf16.mxu0 0
      %5434 = vmatpush2.bf16.msra.mxu0 %v5143
      %5435 = vmatprep.subr.bf16.mxu0 0
      %5436 = vmatpush2.bf16.msra.mxu0 %v5142
      %5437 = vmatprep.subr.bf16.mxu0 0
      %5438 = vmatpush2.bf16.msra.mxu0 %v5141
      %5439 = vmatprep.subr.bf16.mxu0 0
      %5440 = vmatpush2.bf16.msra.mxu0 %v5140
      %5441 = vmatprep.subr.bf16.mxu0 0
      %5442 = vmatpush2.bf16.msra.mxu0 %v5139
      %5443 = vmatprep.subr.bf16.mxu0 0
      %5444 = vmatpush2.bf16.msra.mxu0 %v5138
      %5445 = vmatprep.subr.bf16.mxu0 0
      %5446 = vmatpush2.bf16.msra.mxu0 %v5137
      %5447 = vmatprep.subr.bf16.mxu0 0
      %5448 = vmatpush2.bf16.msra.mxu0 %v5136
      %5449 = vmatprep.mubr.bf16.mxu0 %v4539
      %5450 = vmatmul.mubr.bf16.gmra.mxu0 %v4538
      %v5451 = vpop.f32.mrf.mxu0
      %v5452 = vadd.f32 %v5291, %v5451
      %v5453 = vpop.f32.mrf.mxu0
      %v5454 = vpop.f32.mrf.mxu0
      %v5455 = vadd.f32 %v5294, %v5454
      %v5456 = vpop.f32.mrf.mxu0
      %5457 = vmatprep.mubr.bf16.mxu0 %v4548
      %5458 = vmatmul.mubr.bf16.gmra.mxu0 %v4547
      %v5459 = vpop.f32.mrf.mxu0
      %v5460 = vadd.f32 %v5299, %v5459
      %v5461 = vpop.f32.mrf.mxu0
      %v5462 = vpop.f32.mrf.mxu0
      %v5463 = vadd.f32 %v5302, %v5462
      %v5464 = vpop.f32.mrf.mxu0
      %5465 = vmatprep.mubr.bf16.mxu0 %v4557
      %5466 = vmatmul.mubr.bf16.gmra.mxu0 %v4556
      %v5467 = vpop.f32.mrf.mxu0
      %v5468 = vadd.f32 %v5307, %v5467
      %v5469 = vpop.f32.mrf.mxu0
      %v5470 = vpop.f32.mrf.mxu0
      %v5471 = vadd.f32 %v5310, %v5470
      %v5472 = vpop.f32.mrf.mxu0
      %5473 = vmatprep.mubr.bf16.mxu0 %v4566
      %5474 = vmatmul.mubr.bf16.gmra.mxu0 %v4565
      %v5475 = vpop.f32.mrf.mxu0
      %v5476 = vadd.f32 %v5315, %v5475
      %v5477 = vpop.f32.mrf.mxu0
      %v5478 = vpop.f32.mrf.mxu0
      %v5479 = vadd.f32 %v5318, %v5478
      %v5480 = vpop.f32.mrf.mxu0
      %5481 = vmatprep.mubr.bf16.mxu0 %v4575
      %5482 = vmatmul.mubr.bf16.gmra.mxu0 %v4574
      %v5483 = vpop.f32.mrf.mxu0
      %v5484 = vadd.f32 %v5323, %v5483
      %v5485 = vpop.f32.mrf.mxu0
      %v5486 = vpop.f32.mrf.mxu0
      %v5487 = vadd.f32 %v5326, %v5486
      %v5488 = vpop.f32.mrf.mxu0
      %5489 = vmatprep.mubr.bf16.mxu0 %v4584
      %5490 = vmatmul.mubr.bf16.gmra.mxu0 %v4583
      %v5491 = vpop.f32.mrf.mxu0
      %v5492 = vadd.f32 %v5331, %v5491
      %v5493 = vpop.f32.mrf.mxu0
      %v5494 = vpop.f32.mrf.mxu0
      %v5495 = vadd.f32 %v5334, %v5494
      %v5496 = vpop.f32.mrf.mxu0
      %5497 = vmatprep.mubr.bf16.mxu0 %v4593
      %5498 = vmatmul.mubr.bf16.gmra.mxu0 %v4592
      %v5499 = vpop.f32.mrf.mxu0
      %v5500 = vadd.f32 %v5339, %v5499
      %v5501 = vpop.f32.mrf.mxu0
      %v5502 = vpop.f32.mrf.mxu0
      %v5503 = vadd.f32 %v5342, %v5502
      %v5504 = vpop.f32.mrf.mxu0
      %5505 = vmatprep.mubr.bf16.mxu0 %v4602
      %5506 = vmatmul.mubr.bf16.gmra.mxu0 %v4601
      %v5507 = vpop.f32.mrf.mxu0
      %v5508 = vadd.f32 %v5347, %v5507
      %v5509 = vpop.f32.mrf.mxu0
      %v5510 = vpop.f32.mrf.mxu0
      %v5511 = vadd.f32 %v5350, %v5510
      %v5512 = vpop.f32.mrf.mxu0
      %5513 = vmatprep.mubr.bf16.mxu0 %v4611
      %5514 = vmatmul.mubr.bf16.gmra.mxu0 %v4610
      %v5515 = vpop.f32.mrf.mxu0
      %v5516 = vadd.f32 %v5355, %v5515
      %v5517 = vpop.f32.mrf.mxu0
      %v5518 = vpop.f32.mrf.mxu0
      %v5519 = vadd.f32 %v5358, %v5518
      %v5520 = vpop.f32.mrf.mxu0
      %5521 = vmatprep.mubr.bf16.mxu0 %v4620
      %5522 = vmatmul.mubr.bf16.gmra.mxu0 %v4619
      %v5523 = vpop.f32.mrf.mxu0
      %v5524 = vadd.f32 %v5363, %v5523
      %v5525 = vpop.f32.mrf.mxu0
      %v5526 = vpop.f32.mrf.mxu0
      %v5527 = vadd.f32 %v5366, %v5526
      %v5528 = vpop.f32.mrf.mxu0
      %5529 = vmatprep.mubr.bf16.mxu0 %v4629
      %5530 = vmatmul.mubr.bf16.gmra.mxu0 %v4628
      %v5531 = vpop.f32.mrf.mxu0
      %v5532 = vadd.f32 %v5371, %v5531
      %v5533 = vpop.f32.mrf.mxu0
      %v5534 = vpop.f32.mrf.mxu0
      %v5535 = vadd.f32 %v5374, %v5534
      %v5536 = vpop.f32.mrf.mxu0
      %5537 = vmatprep.mubr.bf16.mxu0 %v4638
      %5538 = vmatmul.mubr.bf16.gmra.mxu0 %v4637
      %v5539 = vpop.f32.mrf.mxu0
      %v5540 = vadd.f32 %v5379, %v5539
      %v5541 = vpop.f32.mrf.mxu0
      %v5542 = vpop.f32.mrf.mxu0
      %v5543 = vadd.f32 %v5382, %v5542
      %v5544 = vpop.f32.mrf.mxu0
      %5545 = vmatprep.mubr.bf16.mxu0 %v4647
      %5546 = vmatmul.mubr.bf16.gmra.mxu0 %v4646
      %v5547 = vpop.f32.mrf.mxu0
      %v5548 = vadd.f32 %v5387, %v5547
      %v5549 = vpop.f32.mrf.mxu0
      %v5550 = vpop.f32.mrf.mxu0
      %v5551 = vadd.f32 %v5390, %v5550
      %v5552 = vpop.f32.mrf.mxu0
      %5553 = vmatprep.mubr.bf16.mxu0 %v4656
      %5554 = vmatmul.mubr.bf16.gmra.mxu0 %v4655
      %v5555 = vpop.f32.mrf.mxu0
      %v5556 = vadd.f32 %v5395, %v5555
      %v5557 = vpop.f32.mrf.mxu0
      %v5558 = vpop.f32.mrf.mxu0
      %v5559 = vadd.f32 %v5398, %v5558
      %v5560 = vpop.f32.mrf.mxu0
      %5561 = vmatprep.mubr.bf16.mxu0 %v4665
      %5562 = vmatmul.mubr.bf16.gmra.mxu0 %v4664
      %v5563 = vpop.f32.mrf.mxu0
      %v5564 = vadd.f32 %v5403, %v5563
      %v5565 = vpop.f32.mrf.mxu0
      %v5566 = vpop.f32.mrf.mxu0
      %v5567 = vadd.f32 %v5406, %v5566
      %v5568 = vpop.f32.mrf.mxu0
      %5569 = vmatprep.mubr.bf16.mxu0 %v4674
      %5570 = vmatmul.mubr.bf16.gmra.mxu0 %v4673
      %v5571 = vpop.f32.mrf.mxu0
      %v5572 = vadd.f32 %v5411, %v5571
      %v5573 = vpop.f32.mrf.mxu0
      %v5574 = vpop.f32.mrf.mxu0
      %v5575 = vadd.f32 %v5414, %v5574
      %v5576 = vpop.f32.mrf.mxu0
      %5577 = vdwg.mxu0
      %5578 = vmatprep.subr.bf16.mxu0 0
      %5579 = vmatpush1.bf16.msra.mxu0 %v5151
      %5580 = vmatprep.subr.bf16.mxu0 0
      %5581 = vmatpush1.bf16.msra.mxu0 %v5150
      %5582 = vmatprep.subr.bf16.mxu0 0
      %5583 = vmatpush1.bf16.msra.mxu0 %v5149
      %5584 = vmatprep.subr.bf16.mxu0 0
      %5585 = vmatpush1.bf16.msra.mxu0 %v5148
      %5586 = vmatprep.subr.bf16.mxu0 0
      %5587 = vmatpush1.bf16.msra.mxu0 %v5147
      %5588 = vmatprep.subr.bf16.mxu0 0
      %5589 = vmatpush1.bf16.msra.mxu0 %v5146
      %5590 = vmatprep.subr.bf16.mxu0 0
      %5591 = vmatpush1.bf16.msra.mxu0 %v5145
      %5592 = vmatprep.subr.bf16.mxu0 0
      %5593 = vmatpush1.bf16.msra.mxu0 %v5144
      %5594 = vmatprep.subr.bf16.mxu0 0
      %5595 = vmatpush2.bf16.msra.mxu0 %v5159
      %5596 = vmatprep.subr.bf16.mxu0 0
      %5597 = vmatpush2.bf16.msra.mxu0 %v5158
      %5598 = vmatprep.subr.bf16.mxu0 0
      %5599 = vmatpush2.bf16.msra.mxu0 %v5157
      %5600 = vmatprep.subr.bf16.mxu0 0
      %5601 = vmatpush2.bf16.msra.mxu0 %v5156
      %5602 = vmatprep.subr.bf16.mxu0 0
      %5603 = vmatpush2.bf16.msra.mxu0 %v5155
      %5604 = vmatprep.subr.bf16.mxu0 0
      %5605 = vmatpush2.bf16.msra.mxu0 %v5154
      %5606 = vmatprep.subr.bf16.mxu0 0
      %5607 = vmatpush2.bf16.msra.mxu0 %v5153
      %5608 = vmatprep.subr.bf16.mxu0 0
      %5609 = vmatpush2.bf16.msra.mxu0 %v5152
      %5610 = vmatprep.mubr.bf16.mxu0 %v4541
      %5611 = vmatmul.mubr.bf16.gmra.mxu0 %v4540
      %v5612 = vpop.f32.mrf.mxu0
      %v5613 = vadd.f32 %v5452, %v5612
      %v5614 = vpop.f32.mrf.mxu0
      %v5615 = vpop.f32.mrf.mxu0
      %v5616 = vadd.f32 %v5455, %v5615
      %v5617 = vpop.f32.mrf.mxu0
      %5618 = vmatprep.mubr.bf16.mxu0 %v4550
      %5619 = vmatmul.mubr.bf16.gmra.mxu0 %v4549
      %v5620 = vpop.f32.mrf.mxu0
      %v5621 = vadd.f32 %v5460, %v5620
      %v5622 = vpop.f32.mrf.mxu0
      %v5623 = vpop.f32.mrf.mxu0
      %v5624 = vadd.f32 %v5463, %v5623
      %v5625 = vpop.f32.mrf.mxu0
      %5626 = vmatprep.mubr.bf16.mxu0 %v4559
      %5627 = vmatmul.mubr.bf16.gmra.mxu0 %v4558
      %v5628 = vpop.f32.mrf.mxu0
      %v5629 = vadd.f32 %v5468, %v5628
      %v5630 = vpop.f32.mrf.mxu0
      %v5631 = vpop.f32.mrf.mxu0
      %v5632 = vadd.f32 %v5471, %v5631
      %v5633 = vpop.f32.mrf.mxu0
      %5634 = vmatprep.mubr.bf16.mxu0 %v4568
      %5635 = vmatmul.mubr.bf16.gmra.mxu0 %v4567
      %v5636 = vpop.f32.mrf.mxu0
      %v5637 = vadd.f32 %v5476, %v5636
      %v5638 = vpop.f32.mrf.mxu0
      %v5639 = vpop.f32.mrf.mxu0
      %v5640 = vadd.f32 %v5479, %v5639
      %v5641 = vpop.f32.mrf.mxu0
      %5642 = vmatprep.mubr.bf16.mxu0 %v4577
      %5643 = vmatmul.mubr.bf16.gmra.mxu0 %v4576
      %v5644 = vpop.f32.mrf.mxu0
      %v5645 = vadd.f32 %v5484, %v5644
      %v5646 = vpop.f32.mrf.mxu0
      %v5647 = vpop.f32.mrf.mxu0
      %v5648 = vadd.f32 %v5487, %v5647
      %v5649 = vpop.f32.mrf.mxu0
      %5650 = vmatprep.mubr.bf16.mxu0 %v4586
      %5651 = vmatmul.mubr.bf16.gmra.mxu0 %v4585
      %v5652 = vpop.f32.mrf.mxu0
      %v5653 = vadd.f32 %v5492, %v5652
      %v5654 = vpop.f32.mrf.mxu0
      %v5655 = vpop.f32.mrf.mxu0
      %v5656 = vadd.f32 %v5495, %v5655
      %v5657 = vpop.f32.mrf.mxu0
      %5658 = vmatprep.mubr.bf16.mxu0 %v4595
      %5659 = vmatmul.mubr.bf16.gmra.mxu0 %v4594
      %v5660 = vpop.f32.mrf.mxu0
      %v5661 = vadd.f32 %v5500, %v5660
      %v5662 = vpop.f32.mrf.mxu0
      %v5663 = vpop.f32.mrf.mxu0
      %v5664 = vadd.f32 %v5503, %v5663
      %v5665 = vpop.f32.mrf.mxu0
      %5666 = vmatprep.mubr.bf16.mxu0 %v4604
      %5667 = vmatmul.mubr.bf16.gmra.mxu0 %v4603
      %v5668 = vpop.f32.mrf.mxu0
      %v5669 = vadd.f32 %v5508, %v5668
      %v5670 = vpop.f32.mrf.mxu0
      %v5671 = vpop.f32.mrf.mxu0
      %v5672 = vadd.f32 %v5511, %v5671
      %v5673 = vpop.f32.mrf.mxu0
      %5674 = vmatprep.mubr.bf16.mxu0 %v4613
      %5675 = vmatmul.mubr.bf16.gmra.mxu0 %v4612
      %v5676 = vpop.f32.mrf.mxu0
      %v5677 = vadd.f32 %v5516, %v5676
      %v5678 = vpop.f32.mrf.mxu0
      %v5679 = vpop.f32.mrf.mxu0
      %v5680 = vadd.f32 %v5519, %v5679
      %v5681 = vpop.f32.mrf.mxu0
      %5682 = vmatprep.mubr.bf16.mxu0 %v4622
      %5683 = vmatmul.mubr.bf16.gmra.mxu0 %v4621
      %v5684 = vpop.f32.mrf.mxu0
      %v5685 = vadd.f32 %v5524, %v5684
      %v5686 = vpop.f32.mrf.mxu0
      %v5687 = vpop.f32.mrf.mxu0
      %v5688 = vadd.f32 %v5527, %v5687
      %v5689 = vpop.f32.mrf.mxu0
      %5690 = vmatprep.mubr.bf16.mxu0 %v4631
      %5691 = vmatmul.mubr.bf16.gmra.mxu0 %v4630
      %v5692 = vpop.f32.mrf.mxu0
      %v5693 = vadd.f32 %v5532, %v5692
      %v5694 = vpop.f32.mrf.mxu0
      %v5695 = vpop.f32.mrf.mxu0
      %v5696 = vadd.f32 %v5535, %v5695
      %v5697 = vpop.f32.mrf.mxu0
      %5698 = vmatprep.mubr.bf16.mxu0 %v4640
      %5699 = vmatmul.mubr.bf16.gmra.mxu0 %v4639
      %v5700 = vpop.f32.mrf.mxu0
      %v5701 = vadd.f32 %v5540, %v5700
      %v5702 = vpop.f32.mrf.mxu0
      %v5703 = vpop.f32.mrf.mxu0
      %v5704 = vadd.f32 %v5543, %v5703
      %v5705 = vpop.f32.mrf.mxu0
      %5706 = vmatprep.mubr.bf16.mxu0 %v4649
      %5707 = vmatmul.mubr.bf16.gmra.mxu0 %v4648
      %v5708 = vpop.f32.mrf.mxu0
      %v5709 = vadd.f32 %v5548, %v5708
      %v5710 = vpop.f32.mrf.mxu0
      %v5711 = vpop.f32.mrf.mxu0
      %v5712 = vadd.f32 %v5551, %v5711
      %v5713 = vpop.f32.mrf.mxu0
      %5714 = vmatprep.mubr.bf16.mxu0 %v4658
      %5715 = vmatmul.mubr.bf16.gmra.mxu0 %v4657
      %v5716 = vpop.f32.mrf.mxu0
      %v5717 = vadd.f32 %v5556, %v5716
      %v5718 = vpop.f32.mrf.mxu0
      %v5719 = vpop.f32.mrf.mxu0
      %v5720 = vadd.f32 %v5559, %v5719
      %v5721 = vpop.f32.mrf.mxu0
      %5722 = vmatprep.mubr.bf16.mxu0 %v4667
      %5723 = vmatmul.mubr.bf16.gmra.mxu0 %v4666
      %v5724 = vpop.f32.mrf.mxu0
      %v5725 = vadd.f32 %v5564, %v5724
      %v5726 = vpop.f32.mrf.mxu0
      %v5727 = vpop.f32.mrf.mxu0
      %v5728 = vadd.f32 %v5567, %v5727
      %v5729 = vpop.f32.mrf.mxu0
      %5730 = vmatprep.mubr.bf16.mxu0 %v4676
      %5731 = vmatmul.mubr.bf16.gmra.mxu0 %v4675
      %v5732 = vpop.f32.mrf.mxu0
      %v5733 = vadd.f32 %v5572, %v5732
      %v5734 = vpop.f32.mrf.mxu0
      %v5735 = vpop.f32.mrf.mxu0
      %v5736 = vadd.f32 %v5575, %v5735
      %v5737 = vpop.f32.mrf.mxu0
      %5738 = vdwg.mxu0
      %5739 = vmatprep.subr.bf16.mxu0 0
      %5740 = vmatpush1.bf16.msra.mxu0 %v5167
      %5741 = vmatprep.subr.bf16.mxu0 0
      %5742 = vmatpush1.bf16.msra.mxu0 %v5166
      %5743 = vmatprep.subr.bf16.mxu0 0
      %5744 = vmatpush1.bf16.msra.mxu0 %v5165
      %5745 = vmatprep.subr.bf16.mxu0 0
      %5746 = vmatpush1.bf16.msra.mxu0 %v5164
      %5747 = vmatprep.subr.bf16.mxu0 0
      %5748 = vmatpush1.bf16.msra.mxu0 %v5163
      %5749 = vmatprep.subr.bf16.mxu0 0
      %5750 = vmatpush1.bf16.msra.mxu0 %v5162
      %5751 = vmatprep.subr.bf16.mxu0 0
      %5752 = vmatpush1.bf16.msra.mxu0 %v5161
      %5753 = vmatprep.subr.bf16.mxu0 0
      %5754 = vmatpush1.bf16.msra.mxu0 %v5160
      %5755 = vmatprep.subr.bf16.mxu0 0
      %5756 = vmatpush2.bf16.msra.mxu0 %v5175
      %5757 = vmatprep.subr.bf16.mxu0 0
      %5758 = vmatpush2.bf16.msra.mxu0 %v5174
      %5759 = vmatprep.subr.bf16.mxu0 0
      %5760 = vmatpush2.bf16.msra.mxu0 %v5173
      %5761 = vmatprep.subr.bf16.mxu0 0
      %5762 = vmatpush2.bf16.msra.mxu0 %v5172
      %5763 = vmatprep.subr.bf16.mxu0 0
      %5764 = vmatpush2.bf16.msra.mxu0 %v5171
      %5765 = vmatprep.subr.bf16.mxu0 0
      %5766 = vmatpush2.bf16.msra.mxu0 %v5170
      %5767 = vmatprep.subr.bf16.mxu0 0
      %5768 = vmatpush2.bf16.msra.mxu0 %v5169
      %5769 = vmatprep.subr.bf16.mxu0 0
      %5770 = vmatpush2.bf16.msra.mxu0 %v5168
      %5771 = vmatprep.mubr.bf16.mxu0 %v4543
      %5772 = vmatmul.mubr.bf16.gmra.mxu0 %v4542
      %v5773 = vpop.f32.mrf.mxu0
      %v5774 = vadd.f32 %v5613, %v5773
      %v5775 = vpop.f32.mrf.mxu0
      %v5776 = vpop.f32.mrf.mxu0
      %v5777 = vadd.f32 %v5616, %v5776
      %v5778 = vpop.f32.mrf.mxu0
      %5779 = vmatprep.mubr.bf16.mxu0 %v4552
      %5780 = vmatmul.mubr.bf16.gmra.mxu0 %v4551
      %v5781 = vpop.f32.mrf.mxu0
      %v5782 = vadd.f32 %v5621, %v5781
      %v5783 = vpop.f32.mrf.mxu0
      %v5784 = vpop.f32.mrf.mxu0
      %v5785 = vadd.f32 %v5624, %v5784
      %v5786 = vpop.f32.mrf.mxu0
      %5787 = vmatprep.mubr.bf16.mxu0 %v4561
      %5788 = vmatmul.mubr.bf16.gmra.mxu0 %v4560
      %v5789 = vpop.f32.mrf.mxu0
      %v5790 = vadd.f32 %v5629, %v5789
      %v5791 = vpop.f32.mrf.mxu0
      %v5792 = vpop.f32.mrf.mxu0
      %v5793 = vadd.f32 %v5632, %v5792
      %v5794 = vpop.f32.mrf.mxu0
      %5795 = vmatprep.mubr.bf16.mxu0 %v4570
      %5796 = vmatmul.mubr.bf16.gmra.mxu0 %v4569
      %v5797 = vpop.f32.mrf.mxu0
      %v5798 = vadd.f32 %v5637, %v5797
      %v5799 = vpop.f32.mrf.mxu0
      %v5800 = vpop.f32.mrf.mxu0
      %v5801 = vadd.f32 %v5640, %v5800
      %v5802 = vpop.f32.mrf.mxu0
      %5803 = vmatprep.mubr.bf16.mxu0 %v4579
      %5804 = vmatmul.mubr.bf16.gmra.mxu0 %v4578
      %v5805 = vpop.f32.mrf.mxu0
      %v5806 = vadd.f32 %v5645, %v5805
      %v5807 = vpop.f32.mrf.mxu0
      %v5808 = vpop.f32.mrf.mxu0
      %v5809 = vadd.f32 %v5648, %v5808
      %v5810 = vpop.f32.mrf.mxu0
      %5811 = vmatprep.mubr.bf16.mxu0 %v4588
      %5812 = vmatmul.mubr.bf16.gmra.mxu0 %v4587
      %v5813 = vpop.f32.mrf.mxu0
      %v5814 = vadd.f32 %v5653, %v5813
      %v5815 = vpop.f32.mrf.mxu0
      %v5816 = vpop.f32.mrf.mxu0
      %v5817 = vadd.f32 %v5656, %v5816
      %v5818 = vpop.f32.mrf.mxu0
      %5819 = vmatprep.mubr.bf16.mxu0 %v4597
      %5820 = vmatmul.mubr.bf16.gmra.mxu0 %v4596
      %v5821 = vpop.f32.mrf.mxu0
      %v5822 = vadd.f32 %v5661, %v5821
      %v5823 = vpop.f32.mrf.mxu0
      %v5824 = vpop.f32.mrf.mxu0
      %v5825 = vadd.f32 %v5664, %v5824
      %v5826 = vpop.f32.mrf.mxu0
      %5827 = vmatprep.mubr.bf16.mxu0 %v4606
      %5828 = vmatmul.mubr.bf16.gmra.mxu0 %v4605
      %v5829 = vpop.f32.mrf.mxu0
      %v5830 = vadd.f32 %v5669, %v5829
      %v5831 = vpop.f32.mrf.mxu0
      %v5832 = vpop.f32.mrf.mxu0
      %v5833 = vadd.f32 %v5672, %v5832
      %v5834 = vpop.f32.mrf.mxu0
      %5835 = vmatprep.mubr.bf16.mxu0 %v4615
      %5836 = vmatmul.mubr.bf16.gmra.mxu0 %v4614
      %v5837 = vpop.f32.mrf.mxu0
      %v5838 = vadd.f32 %v5677, %v5837
      %v5839 = vpop.f32.mrf.mxu0
      %v5840 = vpop.f32.mrf.mxu0
      %v5841 = vadd.f32 %v5680, %v5840
      %v5842 = vpop.f32.mrf.mxu0
      %5843 = vmatprep.mubr.bf16.mxu0 %v4624
      %5844 = vmatmul.mubr.bf16.gmra.mxu0 %v4623
      %v5845 = vpop.f32.mrf.mxu0
      %v5846 = vadd.f32 %v5685, %v5845
      %v5847 = vpop.f32.mrf.mxu0
      %v5848 = vpop.f32.mrf.mxu0
      %v5849 = vadd.f32 %v5688, %v5848
      %v5850 = vpop.f32.mrf.mxu0
      %5851 = vmatprep.mubr.bf16.mxu0 %v4633
      %5852 = vmatmul.mubr.bf16.gmra.mxu0 %v4632
      %v5853 = vpop.f32.mrf.mxu0
      %v5854 = vadd.f32 %v5693, %v5853
      %v5855 = vpop.f32.mrf.mxu0
      %v5856 = vpop.f32.mrf.mxu0
      %v5857 = vadd.f32 %v5696, %v5856
      %v5858 = vpop.f32.mrf.mxu0
      %5859 = vmatprep.mubr.bf16.mxu0 %v4642
      %5860 = vmatmul.mubr.bf16.gmra.mxu0 %v4641
      %v5861 = vpop.f32.mrf.mxu0
      %v5862 = vadd.f32 %v5701, %v5861
      %v5863 = vpop.f32.mrf.mxu0
      %v5864 = vpop.f32.mrf.mxu0
      %v5865 = vadd.f32 %v5704, %v5864
      %v5866 = vpop.f32.mrf.mxu0
      %5867 = vmatprep.mubr.bf16.mxu0 %v4651
      %5868 = vmatmul.mubr.bf16.gmra.mxu0 %v4650
      %v5869 = vpop.f32.mrf.mxu0
      %v5870 = vadd.f32 %v5709, %v5869
      %v5871 = vpop.f32.mrf.mxu0
      %v5872 = vpop.f32.mrf.mxu0
      %v5873 = vadd.f32 %v5712, %v5872
      %v5874 = vpop.f32.mrf.mxu0
      %5875 = vmatprep.mubr.bf16.mxu0 %v4660
      %5876 = vmatmul.mubr.bf16.gmra.mxu0 %v4659
      %v5877 = vpop.f32.mrf.mxu0
      %v5878 = vadd.f32 %v5717, %v5877
      %v5879 = vpop.f32.mrf.mxu0
      %v5880 = vpop.f32.mrf.mxu0
      %v5881 = vadd.f32 %v5720, %v5880
      %v5882 = vpop.f32.mrf.mxu0
      %5883 = vmatprep.mubr.bf16.mxu0 %v4669
      %5884 = vmatmul.mubr.bf16.gmra.mxu0 %v4668
      %v5885 = vpop.f32.mrf.mxu0
      %v5886 = vadd.f32 %v5725, %v5885
      %v5887 = vpop.f32.mrf.mxu0
      %v5888 = vpop.f32.mrf.mxu0
      %v5889 = vadd.f32 %v5728, %v5888
      %v5890 = vpop.f32.mrf.mxu0
      %5891 = vmatprep.mubr.bf16.mxu0 %v4678
      %5892 = vmatmul.mubr.bf16.gmra.mxu0 %v4677
      %v5893 = vpop.f32.mrf.mxu0
      %v5894 = vadd.f32 %v5733, %v5893
      %v5895 = vpop.f32.mrf.mxu0
      %v5896 = vpop.f32.mrf.mxu0
      %v5897 = vadd.f32 %v5736, %v5896
      %v5898 = vpop.f32.mrf.mxu0
      %5899 = vdwg.mxu0
      %5900 = vmatprep.subr.bf16.mxu0 0
      %5901 = vmatpush1.bf16.msra.mxu0 %v5183
      %5902 = vmatprep.subr.bf16.mxu0 0
      %5903 = vmatpush1.bf16.msra.mxu0 %v5182
      %5904 = vmatprep.subr.bf16.mxu0 0
      %5905 = vmatpush1.bf16.msra.mxu0 %v5181
      %5906 = vmatprep.subr.bf16.mxu0 0
      %5907 = vmatpush1.bf16.msra.mxu0 %v5180
      %5908 = vmatprep.subr.bf16.mxu0 0
      %5909 = vmatpush1.bf16.msra.mxu0 %v5179
      %5910 = vmatprep.subr.bf16.mxu0 0
      %5911 = vmatpush1.bf16.msra.mxu0 %v5178
      %5912 = vmatprep.subr.bf16.mxu0 0
      %5913 = vmatpush1.bf16.msra.mxu0 %v5177
      %5914 = vmatprep.subr.bf16.mxu0 0
      %5915 = vmatpush1.bf16.msra.mxu0 %v5176
      %5916 = vmatprep.subr.bf16.mxu0 0
      %5917 = vmatpush2.bf16.msra.mxu0 0
      %5918 = vmatprep.subr.bf16.mxu0 0
      %5919 = vmatpush2.bf16.msra.mxu0 0
      %5920 = vmatprep.subr.bf16.mxu0 0
      %5921 = vmatpush2.bf16.msra.mxu0 0
      %5922 = vmatprep.subr.bf16.mxu0 0
      %5923 = vmatpush2.bf16.msra.mxu0 0
      %5924 = vmatprep.subr.bf16.mxu0 0
      %5925 = vmatpush2.bf16.msra.mxu0 0
      %5926 = vmatprep.subr.bf16.mxu0 0
      %5927 = vmatpush2.bf16.msra.mxu0 0
      %5928 = vmatprep.subr.bf16.mxu0 0
      %5929 = vmatpush2.bf16.msra.mxu0 0
      %5930 = vmatprep.subr.bf16.mxu0 0
      %5931 = vmatpush2.bf16.msra.mxu0 0
      %5932 = vmatprep.mubr.bf16.mxu0 0
      %5933 = vmatmul.mubr.bf16.gmra.mxu0 %v4544
      %v5934 = vpop.f32.mrf.mxu0
      %v5935 = vadd.f32 %v5774, %v5934
      %v5936 = vpop.f32.mrf.mxu0
      %v5937 = vpop.f32.mrf.mxu0
      %v5938 = vadd.f32 %v5777, %v5937
      %v5939 = vpop.f32.mrf.mxu0
      %5940 = vmatprep.mubr.bf16.mxu0 0
      %5941 = vmatmul.mubr.bf16.gmra.mxu0 %v4553
      %v5942 = vpop.f32.mrf.mxu0
      %v5943 = vadd.f32 %v5782, %v5942
      %v5944 = vpop.f32.mrf.mxu0
      %v5945 = vpop.f32.mrf.mxu0
      %v5946 = vadd.f32 %v5785, %v5945
      %v5947 = vpop.f32.mrf.mxu0
      %5948 = vmatprep.mubr.bf16.mxu0 0
      %5949 = vmatmul.mubr.bf16.gmra.mxu0 %v4562
      %v5950 = vpop.f32.mrf.mxu0
      %v5951 = vadd.f32 %v5790, %v5950
      %v5952 = vpop.f32.mrf.mxu0
      %v5953 = vpop.f32.mrf.mxu0
      %v5954 = vadd.f32 %v5793, %v5953
      %v5955 = vpop.f32.mrf.mxu0
      %5956 = vmatprep.mubr.bf16.mxu0 0
      %5957 = vmatmul.mubr.bf16.gmra.mxu0 %v4571
      %v5958 = vpop.f32.mrf.mxu0
      %v5959 = vadd.f32 %v5798, %v5958
      %v5960 = vpop.f32.mrf.mxu0
      %v5961 = vpop.f32.mrf.mxu0
      %v5962 = vadd.f32 %v5801, %v5961
      %v5963 = vpop.f32.mrf.mxu0
      %5964 = vmatprep.mubr.bf16.mxu0 0
      %5965 = vmatmul.mubr.bf16.gmra.mxu0 %v4580
      %v5966 = vpop.f32.mrf.mxu0
      %v5967 = vadd.f32 %v5806, %v5966
      %v5968 = vpop.f32.mrf.mxu0
      %v5969 = vpop.f32.mrf.mxu0
      %v5970 = vadd.f32 %v5809, %v5969
      %v5971 = vpop.f32.mrf.mxu0
      %5972 = vmatprep.mubr.bf16.mxu0 0
      %5973 = vmatmul.mubr.bf16.gmra.mxu0 %v4589
      %v5974 = vpop.f32.mrf.mxu0
      %v5975 = vadd.f32 %v5814, %v5974
      %v5976 = vpop.f32.mrf.mxu0
      %v5977 = vpop.f32.mrf.mxu0
      %v5978 = vadd.f32 %v5817, %v5977
      %v5979 = vpop.f32.mrf.mxu0
      %5980 = vmatprep.mubr.bf16.mxu0 0
      %5981 = vmatmul.mubr.bf16.gmra.mxu0 %v4598
      %v5982 = vpop.f32.mrf.mxu0
      %v5983 = vadd.f32 %v5822, %v5982
      %v5984 = vpop.f32.mrf.mxu0
      %v5985 = vpop.f32.mrf.mxu0
      %v5986 = vadd.f32 %v5825, %v5985
      %v5987 = vpop.f32.mrf.mxu0
      %5988 = vmatprep.mubr.bf16.mxu0 0
      %5989 = vmatmul.mubr.bf16.gmra.mxu0 %v4607
      %v5990 = vpop.f32.mrf.mxu0
      %v5991 = vadd.f32 %v5830, %v5990
      %v5992 = vpop.f32.mrf.mxu0
      %v5993 = vpop.f32.mrf.mxu0
      %v5994 = vadd.f32 %v5833, %v5993
      %v5995 = vpop.f32.mrf.mxu0
      %5996 = vmatprep.mubr.bf16.mxu0 0
      %5997 = vmatmul.mubr.bf16.gmra.mxu0 %v4616
      %v5998 = vpop.f32.mrf.mxu0
      %v5999 = vadd.f32 %v5838, %v5998
      %v6000 = vpop.f32.mrf.mxu0
      %v6001 = vpop.f32.mrf.mxu0
      %v6002 = vadd.f32 %v5841, %v6001
      %v6003 = vpop.f32.mrf.mxu0
      %6004 = vmatprep.mubr.bf16.mxu0 0
      %6005 = vmatmul.mubr.bf16.gmra.mxu0 %v4625
      %v6006 = vpop.f32.mrf.mxu0
      %v6007 = vadd.f32 %v5846, %v6006
      %v6008 = vpop.f32.mrf.mxu0
      %v6009 = vpop.f32.mrf.mxu0
      %v6010 = vadd.f32 %v5849, %v6009
      %v6011 = vpop.f32.mrf.mxu0
      %6012 = vmatprep.mubr.bf16.mxu0 0
      %6013 = vmatmul.mubr.bf16.gmra.mxu0 %v4634
      %v6014 = vpop.f32.mrf.mxu0
      %v6015 = vadd.f32 %v5854, %v6014
      %v6016 = vpop.f32.mrf.mxu0
      %v6017 = vpop.f32.mrf.mxu0
      %v6018 = vadd.f32 %v5857, %v6017
      %v6019 = vpop.f32.mrf.mxu0
      %6020 = vmatprep.mubr.bf16.mxu0 0
      %6021 = vmatmul.mubr.bf16.gmra.mxu0 %v4643
      %v6022 = vpop.f32.mrf.mxu0
      %v6023 = vadd.f32 %v5862, %v6022
      %v6024 = vpop.f32.mrf.mxu0
      %v6025 = vpop.f32.mrf.mxu0
      %v6026 = vadd.f32 %v5865, %v6025
      %v6027 = vpop.f32.mrf.mxu0
      %6028 = vmatprep.mubr.bf16.mxu0 0
      %6029 = vmatmul.mubr.bf16.gmra.mxu0 %v4652
      %v6030 = vpop.f32.mrf.mxu0
      %v6031 = vadd.f32 %v5870, %v6030
      %v6032 = vpop.f32.mrf.mxu0
      %v6033 = vpop.f32.mrf.mxu0
      %v6034 = vadd.f32 %v5873, %v6033
      %v6035 = vpop.f32.mrf.mxu0
      %6036 = vmatprep.mubr.bf16.mxu0 0
      %6037 = vmatmul.mubr.bf16.gmra.mxu0 %v4661
      %v6038 = vpop.f32.mrf.mxu0
      %v6039 = vadd.f32 %v5878, %v6038
      %v6040 = vpop.f32.mrf.mxu0
      %v6041 = vpop.f32.mrf.mxu0
      %v6042 = vadd.f32 %v5881, %v6041
      %v6043 = vpop.f32.mrf.mxu0
      %6044 = vmatprep.mubr.bf16.mxu0 0
      %6045 = vmatmul.mubr.bf16.gmra.mxu0 %v4670
      %v6046 = vpop.f32.mrf.mxu0
      %v6047 = vadd.f32 %v5886, %v6046
      %v6048 = vpop.f32.mrf.mxu0
      %v6049 = vpop.f32.mrf.mxu0
      %v6050 = vadd.f32 %v5889, %v6049
      %v6051 = vpop.f32.mrf.mxu0
      %6052 = vmatprep.mubr.bf16.mxu0 0
      %6053 = vmatmul.mubr.bf16.gmra.mxu0 %v4679
      %v6054 = vpop.f32.mrf.mxu0
      %v6055 = vadd.f32 %v5894, %v6054
      %v6056 = vpop.f32.mrf.mxu0
      %v6057 = vpop.f32.mrf.mxu0
      %v6058 = vadd.f32 %v5897, %v6057
      %v6059 = vpop.f32.mrf.mxu0
      %6060 = vdwg.mxu0
      %vm6061 = vcmask 97280
      %6062 = vst.msk [vmem:[%s251] sm:$0xff] %vm6061, %v5935
      %6063 = vst.msk [vmem:[%s251 + $0x8] sm:$0xff] %vm6061, %v5938
      %6064 = vst.msk [vmem:[%s251 + $0x10] sm:$0xff] %vm6061, %v5943
      %6065 = vst.msk [vmem:[%s251 + $0x18] sm:$0xff] %vm6061, %v5946
      %6066 = vst.msk [vmem:[%s251 + $0x20] sm:$0xff] %vm6061, %v5951
      %6067 = vst.msk [vmem:[%s251 + $0x28] sm:$0xff] %vm6061, %v5954
      %6068 = vst.msk [vmem:[%s251 + $0x30] sm:$0xff] %vm6061, %v5959
      %6069 = vst.msk [vmem:[%s251 + $0x38] sm:$0xff] %vm6061, %v5962
      %6070 = vst.msk [vmem:[%s251 + $0x40] sm:$0xff] %vm6061, %v5967
      %6071 = vst.msk [vmem:[%s251 + $0x48] sm:$0xff] %vm6061, %v5970
      %6072 = vst.msk [vmem:[%s251 + $0x50] sm:$0xff] %vm6061, %v5975
      %6073 = vst.msk [vmem:[%s251 + $0x58] sm:$0xff] %vm6061, %v5978
      %6074 = vst.msk [vmem:[%s251 + $0x60] sm:$0xff] %vm6061, %v5983
      %6075 = vst.msk [vmem:[%s251 + $0x68] sm:$0xff] %vm6061, %v5986
      %6076 = vst.msk [vmem:[%s251 + $0x70] sm:$0xff] %vm6061, %v5991
      %6077 = vst.msk [vmem:[%s251 + $0x78] sm:$0xff] %vm6061, %v5994
      %6078 = vst.msk [vmem:[%s251 + $0x80] sm:$0xff] %vm6061, %v5999
      %6079 = vst.msk [vmem:[%s251 + $0x88] sm:$0xff] %vm6061, %v6002
      %6080 = vst.msk [vmem:[%s251 + $0x90] sm:$0xff] %vm6061, %v6007
      %6081 = vst.msk [vmem:[%s251 + $0x98] sm:$0xff] %vm6061, %v6010
      %6082 = vst.msk [vmem:[%s251 + $0xa0] sm:$0xff] %vm6061, %v6015
      %6083 = vst.msk [vmem:[%s251 + $0xa8] sm:$0xff] %vm6061, %v6018
      %6084 = vst.msk [vmem:[%s251 + $0xb0] sm:$0xff] %vm6061, %v6023
      %6085 = vst.msk [vmem:[%s251 + $0xb8] sm:$0xff] %vm6061, %v6026
      %6086 = vst.msk [vmem:[%s251 + $0xc0] sm:$0xff] %vm6061, %v6031
      %6087 = vst.msk [vmem:[%s251 + $0xc8] sm:$0xff] %vm6061, %v6034
      %6088 = vst.msk [vmem:[%s251 + $0xd0] sm:$0xff] %vm6061, %v6039
      %6089 = vst.msk [vmem:[%s251 + $0xd8] sm:$0xff] %vm6061, %v6042
      %6090 = vst.msk [vmem:[%s251 + $0xe0] sm:$0xff] %vm6061, %v6047
      %6091 = vst.msk [vmem:[%s251 + $0xe8] sm:$0xff] %vm6061, %v6050
      %6092 = vst.msk [vmem:[%s251 + $0xf0] sm:$0xff] %vm6061, %v6055
      %6093 = vst.msk [vmem:[%s251 + $0xf8] sm:$0xff] %vm6061, %v6058
      %p6094 = scmp.lt.s32.totalorder %s17, 1
      %s6095 = scalar_select %p6094, %s17, 1
      %s6096 = smul.addr %s6095, 32
      %s6097 = smul.addr %s6096, 8
      %s6098 = scalar_lea.vmem %s6, %s6097
      // Predicated region
      $region45: #{bottleneck_forward.1} parent=43 // pred_check
        %p6099 = pneg %p166
      $region46: #{bottleneck_forward.1} parent=43 // pred_check_branch
        %6101 = sbr.rel (%p6099) target = $region48
      $region47: #{bottleneck_forward.1} parent=43 // pred_region
        _
      $region48: #{bottleneck_forward.1} parent=43 // pred_fallthru
        _
    $region44: #{bottleneck_forward.1} parent=5 // pred_fallthru
      _
    %p6102 = scmp.le.s32.totalorder 2, %s12
    // Predicated region
    $region49: #{bottleneck_forward.1} parent=5 // pred_check
      %p6103 = pneg %p6102
    $region50: #{bottleneck_forward.1} parent=5 // pred_check_branch
      %6105 = sbr.rel (%p6103) target = $region52
    $region51: #{bottleneck_forward.1} parent=5 // pred_region
      %s6106 = ssub.s32 %s12, 2
      // Predicated region
      $region53: #{bottleneck_forward.1} parent=51 // pred_check
        %p6107 = pneg %p172
      $region54: #{bottleneck_forward.1} parent=51 // pred_check_branch
        %6109 = sbr.rel (%p6107) target = $region56
      $region55: #{bottleneck_forward.1} parent=51 // pred_region
        %p6110 = scmp.lt.s32.totalorder %s18, 1
        %s6111 = scalar_select %p6110, %s18, 1
        %s6112 = smul.addr %s6111, 32
        %s6113 = smul.addr %s6112, 8
        %s6114 = scalar_lea.vmem %s6, %s6113
      $region56: #{bottleneck_forward.1} parent=51 // pred_fallthru
        _
    $region52: #{bottleneck_forward.1} parent=5 // pred_fallthru
      _
  $region6: #{bottleneck_forward.1} parent=0 // loop_footer
    %s16 = sadd.s32 1, %s12
  $region7: #{bottleneck_forward.1} parent=0 // loop_footer_branch
    %11 = sbr.rel target = $region3
  $region8: #{bottleneck_forward.1} parent=0 // loop_exit
    _

</llo_original>
